<compile_context>
chip_gen: v5e
topology: v5e:2x2
jax: 0.10.0
libtpu: 0.0.40
codegen_flags: <defaults>
</compile_context>

<pallas_src>
import functools

import jax
import jax.numpy as jnp
import numpy as np
from jax.experimental import pallas as pl
from jax.experimental.pallas import tpu as pltpu


# ---------------------------------------------------------------------------
# In-kernel helpers
# ---------------------------------------------------------------------------
def _roll_rows(v, shift):
    """Roll rows (axis 0) of a 2-D value by a static amount (jnp.roll semantics).

    Uses the XLU rotate (pltpu.roll) when the value is (8,128)-aligned 32-bit data;
    falls back to jnp.roll (concat-of-slices) for any other shape/dtype.
    """
    rows = v.shape[0]
    shift = shift % rows
    if shift == 0:
        return v
    if rows % 8 == 0 and v.shape[1] % 128 == 0 and v.dtype == jnp.float32:
        return pltpu.roll(v, shift, axis=0)
    return jnp.roll(v, shift, axis=0)


def _resgroup_kernel(m_ref, x_ref, w1_ref, b1_ref, w2_ref, b2_ref, o_ref,
                     lcr_ref, *, H, W, res_scale, mxu_dtype):
    """Fused ResGroupBlock over one block of whole images.

    m_ref  : (R, 4) f32   {0,1} boundary masks per pixel row: [w>=1, w<=W-2, h>=1, h<=H-2]
    x_ref  : (R, N)       channels-last pixel rows (R = images_per_block * H * W)
    w*_ref : (3, 3N, N)   per-dh weight slabs, rows = [dw=-1 | dw=0 | dw=+1] block-diag
    b*_ref : (1, N) f32
    o_ref  : (R, N)
    lcr_ref: (R, 3N) f32  scratch holding the [left | center | right] column slab
    """
    N = x_ref.shape[1]
    x = x_ref[...].astype(jnp.float32)

    col_l = m_ref[:, 0:1]              # dw = -1 valid
    col_r = m_ref[:, 1:2]              # dw = +1 valid
    row_m = {-1: m_ref[:, 2:3],        # dh = -1 valid
             +1: m_ref[:, 3:4]}        # dh = +1 valid

    def conv3x3_relu(src, w_ref, b_ref):
        # Hoist the +-1-column shifts: built once, column masks folded in as {0,1} muls.
        left = _roll_rows(src, 1) * col_l          # x[.., w-1, :]
        right = _roll_rows(src, -1) * col_r        # x[.., w+1, :]
        lcr_ref[:, 0:N] = left
        lcr_ref[:, N:2 * N] = src
        lcr_ref[:, 2 * N:3 * N] = right
        lcr = lcr_ref[...]                          # (R, 3N) f32

        # dh = 0: no row shift, mask is all-true -> skip it entirely.
        acc = jnp.dot(lcr.astype(mxu_dtype), w_ref[1],
                      preferred_element_type=jnp.float32)
        # dh = -1 / +1: one roll by +-W of the whole slab, one {0,1} row-mask multiply,
        # one deep (K = 3N) matmul each.
        for a, dh in ((0, -1), (2, +1)):
            shifted = _roll_rows(lcr, -dh * W) * row_m[dh]
            acc = acc + jnp.dot(shifted.astype(mxu_dtype), w_ref[a],
                                preferred_element_type=jnp.float32)
        return jnp.maximum(acc + b_ref[...], 0.0)   # bias + ReLU in f32

    y1 = conv3x3_relu(x, w1_ref, b1_ref)
    y2 = conv3x3_relu(y1, w2_ref, b2_ref)
    # Matches the PyTorch forward: relu after BOTH convs, then *res_scale, then +x.
    o_ref[...] = (y2 * res_scale + x).astype(o_ref.dtype)


# ---------------------------------------------------------------------------
# Host-side helpers
# ---------------------------------------------------------------------------
def _dense_weight_slabs(w, G):
    """PyTorch grouped-conv weight (N, N//G, 3, 3) -> per-dh weight slabs (3, 3N, N).

    slab[kh] is the (3N, N) matrix for row offset dh = kh-1, with the three column
    taps (dw = -1, 0, +1) stacked along the contraction dim in [left|center|right]
    order; cross-group entries are zero (block-diagonal).
    """
    N = w.shape[0]
    Cg = N // G
    wg = w.reshape(G, Cg, Cg, 3, 3)                      # (g, out, in, kh, kw)
    blocks = jnp.transpose(wg, (3, 4, 0, 2, 1))          # (kh, kw, g, in, out)
    eye = jnp.eye(G, dtype=w.dtype)
    dense = jnp.einsum('abgio,gh->abgiho', blocks, eye)  # (kh, kw, g, in, h, out)
    dense = dense.reshape(3, 3, N, N)                    # (kh, kw, N_in, N_out)
    return dense.reshape(3, 3 * N, N)                    # kw-major rows: dw=-1 first


def _vmem_budget_bytes():
    """~3/4 of this chip's VMEM (v5e/v6e: 128 MiB -> 96 MiB, v7x: 64 MiB -> 48 MiB)."""
    try:
        cap = pltpu.get_tpu_info().vmem_capacity_bytes
        if cap:
            return int(cap) * 3 // 4
    except Exception:
        pass
    return 48 * 1024 * 1024   # conservative fallback (fits every generation)


def _pick_batch_block(B, P, N, weight_bytes, budget_bytes):
    """Images per grid step: as large as the VMEM budget allows while keeping enough
    grid steps for DMA/compute pipelining and megacore / dual-TC sharding."""
    lane_n = max(N, 128)                 # lane padding
    # Resident f32-equivalent bytes per pixel row: x (2 pipeline buffers) + out (2) +
    # lcr scratch (3N) + rolled/cast slab copies + left/right/acc/y1 temps + masks.
    per_row = 4 * lane_n * 18 + 512
    avail = max(int(budget_bytes) - int(weight_bytes), per_row * P)
    bb_mem = max(1, avail // (per_row * P))
    bb_steps = max(1, B // min(B, 4))    # aim for >= min(B, 4) grid steps
    bb = int(max(1, min(B, bb_mem, bb_steps)))
    while bb > 1 and B % bb != 0:        # uniform blocks only (no ragged edge)
        bb -= 1
    if bb < B and (bb * P) % 8 != 0:     # block rows must be sublane-divisible
        bb = B
    return bb


def _resident_spec():
    # Whole array placed in VMEM once (single buffer) -- no per-step re-DMA and no
    # pipeline double-buffering for grid-invariant operands.
    return pl.BlockSpec(memory_space=pltpu.MemorySpace.VMEM)


# ---------------------------------------------------------------------------
# Public entry points
# ---------------------------------------------------------------------------
def res_group_block_rows(x_rows, w1, b1, w2, b2, n_groups, H, W, res_scale=1.0,
                         mxu_dtype=jnp.bfloat16):
    """Channels-last entry point.  x_rows: (B*H*W, N) pixel rows; returns same shape."""
    BP, N = x_rows.shape
    P = H * W
    assert BP % P == 0 and N % n_groups == 0
    B = BP // P

    w1_s = _dense_weight_slabs(w1, n_groups).astype(mxu_dtype)   # (3, 3N, N)
    w2_s = _dense_weight_slabs(w2, n_groups).astype(mxu_dtype)
    b1_r = b1.reshape(1, N).astype(jnp.float32)
    b2_r = b2.reshape(1, N).astype(jnp.float32)

    budget = _vmem_budget_bytes()
    weight_bytes = ((w1_s.size + w2_s.size) * w1_s.dtype.itemsize
                    + (b1_r.size + b2_r.size) * 4)

    bb = _pick_batch_block(B, P, N, weight_bytes, budget)   # images per grid step
    R = bb * P                                              # pixel rows per grid step
    num_blocks = B // bb

    # Per-row {0,1} boundary masks; identical for every block since blocks start on
    # image boundaries.  Columns: [w>=1, w<=W-2, h>=1, h<=H-2].
    rows = np.arange(R)
    ww = rows % W
    hh = (rows // W) % H
    masks = jnp.asarray(
        np.stack([ww >= 1, ww <= W - 2, hh >= 1, hh <= H - 2], axis=1)
        .astype(np.float32))

    kernel = functools.partial(_resgroup_kernel, H=H, W=W,
                               res_scale=float(res_scale), mxu_dtype=mxu_dtype)

    out_rows = pl.pallas_call(
        kernel,
        out_shape=jax.ShapeDtypeStruct((BP, N), x_rows.dtype),
        grid_spec=pltpu.PrefetchScalarGridSpec(
            num_scalar_prefetch=0,
            grid=(num_blocks,),
            in_specs=[
                _resident_spec(),                        # boundary masks (R, 4)
                pl.BlockSpec((R, N), lambda i: (i, 0)),  # x pixel rows (pipelined)
                _resident_spec(),                        # conv1 weight slabs (3, 3N, N)
                _resident_spec(),                        # conv1 bias (1, N)
                _resident_spec(),                        # conv2 weight slabs
                _resident_spec(),                        # conv2 bias
            ],
            out_specs=pl.BlockSpec((R, N), lambda i: (i, 0)),
            scratch_shapes=[pltpu.VMEM((R, 3 * N), jnp.float32)],
        ),
        compiler_params=pltpu.CompilerParams(
            dimension_semantics=("parallel",),
            vmem_limit_bytes=int(budget)),
    )(masks, x_rows, w1_s, b1_r, w2_s, b2_r)
    return out_rows


def res_group_block(x_nchw, w1, b1, w2, b2, n_groups, res_scale=1.0,
                    mxu_dtype=jnp.bfloat16):
    """NCHW convenience wrapper matching the PyTorch module's layout.

    NOTE: in a full model keep activations channels-last between blocks and call
    res_group_block_rows directly -- the NCHW<->rows transposes here are an extra HBM
    round trip per block and exist only to match the PyTorch interface.
    """
    B, N, H, W = x_nchw.shape
    x_rows = jnp.transpose(x_nchw, (0, 2, 3, 1)).reshape(B * H * W, N)
    out_rows = res_group_block_rows(x_rows, w1, b1, w2, b2, n_groups, H, W,
                                    res_scale=res_scale, mxu_dtype=mxu_dtype)
    return jnp.transpose(out_rows.reshape(B, H, W, N), (0, 3, 1, 2))


# ---------------------------------------------------------------------------
# Pure-JAX reference (matches the PyTorch module)
# ---------------------------------------------------------------------------
def res_group_block_ref(x, w1, b1, w2, b2, G, res_scale):
    dn = jax.lax.conv_dimension_numbers(x.shape, w1.shape, ("NCHW", "OIHW", "NCHW"))
    y = jax.lax.conv_general_dilated(x, w1, (1, 1), ((1, 1), (1, 1)),
                                     dimension_numbers=dn, feature_group_count=G)
    y = jax.nn.relu(y + b1[None, :, None, None])
    y = jax.lax.conv_general_dilated(y, w2, (1, 1), ((1, 1), (1, 1)),
                                     dimension_numbers=dn, feature_group_count=G)
    y = jax.nn.relu(y + b2[None, :, None, None]) * res_scale
    return y + x


if __name__ == "__main__":
    # Small deterministic config: n_feats=8, n_groups=2, batch=2, 16x16 spatial.
    B, N, G, H, W = 2, 8, 2, 16, 16
    Cg = N // G
    res_scale = 0.5

    key = jax.random.PRNGKey(0)
    kx, k1, k2, k3, k4 = jax.random.split(key, 5)
    x = jax.random.normal(kx, (B, N, H, W), jnp.float32)
    w1 = jax.random.normal(k1, (N, Cg, 3, 3), jnp.float32) * 0.1
    b1 = jax.random.normal(k2, (N,), jnp.float32) * 0.1
    w2 = jax.random.normal(k3, (N, Cg, 3, 3), jnp.float32) * 0.1
    b2 = jax.random.normal(k4, (N,), jnp.float32) * 0.1

    ref = res_group_block_ref(x, w1, b1, w2, b2, G, res_scale)

    # f32 MXU validation path (tight tolerance).
    out_f32 = jax.block_until_ready(
        res_group_block(x, w1, b1, w2, b2, n_groups=G, res_scale=res_scale,
                        mxu_dtype=jnp.float32))
    np.testing.assert_allclose(np.asarray(out_f32), np.asarray(ref),
                               atol=1e-4, rtol=1e-4)

    # Default bf16-MXU path (production setting on v5e/v6e/v7x; looser tolerance).
    out_bf16 = jax.block_until_ready(
        res_group_block(x, w1, b1, w2, b2, n_groups=G, res_scale=res_scale))
    np.testing.assert_allclose(np.asarray(out_bf16), np.asarray(ref),
                               atol=5e-2, rtol=5e-2)

    print("KERNEL_OK")
</pallas_src>

<mosaic_0001>
module attributes {stable_mosaic.version = 11 : i64} {
  func.func @_resgroup_kernel(%arg0: i32, %arg1: memref<256x4xf32, #tpu.memory_space<vmem>>, %arg2: memref<256x8xf32, #tpu.memory_space<vmem>>, %arg3: memref<3x24x8xf32, #tpu.memory_space<vmem>>, %arg4: memref<1x8xf32, #tpu.memory_space<vmem>>, %arg5: memref<3x24x8xf32, #tpu.memory_space<vmem>>, %arg6: memref<1x8xf32, #tpu.memory_space<vmem>>, %arg7: memref<256x8xf32, #tpu.memory_space<vmem>>, %arg8: memref<256x24xf32, #tpu.memory_space<vmem>>) attributes {dimension_semantics = [#tpu.dimension_semantics<parallel>], iteration_bounds = array<i64: 2>, scalar_prefetch = 0 : i64, scratch_operands = 1 : i64, tpu.core_type = #tpu.core_type<tc>, window_params = [{pipeline_mode = #tpu.pipeline_mode<synchronous>, transform_indices = @transform_0, window_bounds = array<i64: 256, 4>}, {transform_indices = @transform_1, window_bounds = array<i64: 256, 8>}, {pipeline_mode = #tpu.pipeline_mode<synchronous>, transform_indices = @transform_2, window_bounds = array<i64: 3, 24, 8>}, {pipeline_mode = #tpu.pipeline_mode<synchronous>, transform_indices = @transform_3, window_bounds = array<i64: 1, 8>}, {pipeline_mode = #tpu.pipeline_mode<synchronous>, transform_indices = @transform_4, window_bounds = array<i64: 3, 24, 8>}, {pipeline_mode = #tpu.pipeline_mode<synchronous>, transform_indices = @transform_5, window_bounds = array<i64: 1, 8>}, {transform_indices = @transform_6, window_bounds = array<i64: 256, 8>}]} {
    %c0 = arith.constant 0 : index
    %c0_0 = arith.constant 0 : index
    %0 = vector.load %arg2[%c0, %c0_0] : memref<256x8xf32, #tpu.memory_space<vmem>>, vector<256x8xf32>
    %c0_1 = arith.constant 0 : index
    %c0_2 = arith.constant 0 : index
    %1 = vector.load %arg1[%c0_1, %c0_2] : memref<256x4xf32, #tpu.memory_space<vmem>>, vector<256x1xf32>
    %c0_3 = arith.constant 0 : index
    %c1 = arith.constant 1 : index
    %2 = vector.load %arg1[%c0_3, %c1] : memref<256x4xf32, #tpu.memory_space<vmem>>, vector<256x1xf32>
    %c0_4 = arith.constant 0 : index
    %c2 = arith.constant 2 : index
    %3 = vector.load %arg1[%c0_4, %c2] : memref<256x4xf32, #tpu.memory_space<vmem>>, vector<256x1xf32>
    %c0_5 = arith.constant 0 : index
    %c3 = arith.constant 3 : index
    %4 = vector.load %arg1[%c0_5, %c3] : memref<256x4xf32, #tpu.memory_space<vmem>>, vector<256x1xf32>
    %5 = vector.extract_strided_slice %0 {offsets = [255, 0], sizes = [1, 8], strides = [1, 1]} : vector<256x8xf32> to vector<1x8xf32>
    %6 = vector.extract_strided_slice %0 {offsets = [0, 0], sizes = [255, 8], strides = [1, 1]} : vector<256x8xf32> to vector<255x8xf32>
    %7 = tpu.concatenate %5, %6 in 0 : vector<1x8xf32>, vector<255x8xf32> -> vector<256x8xf32>
    %8 = vector.broadcast %1 : vector<256x1xf32> to vector<256x8xf32>
    %9 = arith.mulf %7, %8 : vector<256x8xf32>
    %10 = vector.extract_strided_slice %0 {offsets = [1, 0], sizes = [255, 8], strides = [1, 1]} : vector<256x8xf32> to vector<255x8xf32>
    %11 = vector.extract_strided_slice %0 {offsets = [0, 0], sizes = [1, 8], strides = [1, 1]} : vector<256x8xf32> to vector<1x8xf32>
    %12 = tpu.concatenate %10, %11 in 0 : vector<255x8xf32>, vector<1x8xf32> -> vector<256x8xf32>
    %13 = vector.broadcast %2 : vector<256x1xf32> to vector<256x8xf32>
    %14 = arith.mulf %12, %13 : vector<256x8xf32>
    %c0_6 = arith.constant 0 : index
    %c0_7 = arith.constant 0 : index
    %15 = vector.load %arg8[%c0_6, %c0_7] : memref<256x24xf32, #tpu.memory_space<vmem>>, vector<256x8xf32>
    tpu.vector_store %arg8[%c0_6, %c0_7], %9 {strides = array<i32>} : memref<256x24xf32, #tpu.memory_space<vmem>>, vector<256x8xf32>,
    %c0_8 = arith.constant 0 : index
    %c8 = arith.constant 8 : index
    %16 = vector.load %arg8[%c0_8, %c8] : memref<256x24xf32, #tpu.memory_space<vmem>>, vector<256x8xf32>
    tpu.vector_store %arg8[%c0_8, %c8], %0 {strides = array<i32>} : memref<256x24xf32, #tpu.memory_space<vmem>>, vector<256x8xf32>,
    %c0_9 = arith.constant 0 : index
    %c16 = arith.constant 16 : index
    %17 = vector.load %arg8[%c0_9, %c16] : memref<256x24xf32, #tpu.memory_space<vmem>>, vector<256x8xf32>
    tpu.vector_store %arg8[%c0_9, %c16], %14 {strides = array<i32>} : memref<256x24xf32, #tpu.memory_space<vmem>>, vector<256x8xf32>,
    %c0_10 = arith.constant 0 : index
    %c0_11 = arith.constant 0 : index
    %18 = vector.load %arg8[%c0_10, %c0_11] : memref<256x24xf32, #tpu.memory_space<vmem>>, vector<256x24xf32>
    %c1_12 = arith.constant 1 : index
    %c0_13 = arith.constant 0 : index
    %c0_14 = arith.constant 0 : index
    %19 = vector.load %arg3[%c1_12, %c0_13, %c0_14] : memref<3x24x8xf32, #tpu.memory_space<vmem>>, vector<1x24x8xf32>
    %20 = vector.shape_cast %19 : vector<1x24x8xf32> to vector<24x8xf32>
    %cst = arith.constant dense<0.000000e+00> : vector<256x8xf32>
    %21 = tpu.matmul %18, %20, %cst {dimension_numbers = #tpu.dot_dimension_numbers<[1], [0], [0], [1], [0, 0, 1, 1], [], []>} : vector<256x24xf32>, vector<24x8xf32>, vector<256x8xf32> -> vector<256x8xf32>
    %22 = vector.extract_strided_slice %18 {offsets = [240, 0], sizes = [16, 24], strides = [1, 1]} : vector<256x24xf32> to vector<16x24xf32>
    %23 = vector.extract_strided_slice %18 {offsets = [0, 0], sizes = [240, 24], strides = [1, 1]} : vector<256x24xf32> to vector<240x24xf32>
    %24 = tpu.concatenate %22, %23 in 0 : vector<16x24xf32>, vector<240x24xf32> -> vector<256x24xf32>
    %25 = vector.broadcast %3 : vector<256x1xf32> to vector<256x24xf32>
    %26 = arith.mulf %24, %25 : vector<256x24xf32>
    %c0_15 = arith.constant 0 : index
    %c0_16 = arith.constant 0 : index
    %c0_17 = arith.constant 0 : index
    %27 = vector.load %arg3[%c0_15, %c0_16, %c0_17] : memref<3x24x8xf32, #tpu.memory_space<vmem>>, vector<1x24x8xf32>
    %28 = vector.shape_cast %27 : vector<1x24x8xf32> to vector<24x8xf32>
    %cst_18 = arith.constant dense<0.000000e+00> : vector<256x8xf32>
    %29 = tpu.matmul %26, %28, %cst_18 {dimension_numbers = #tpu.dot_dimension_numbers<[1], [0], [0], [1], [0, 0, 1, 1], [], []>} : vector<256x24xf32>, vector<24x8xf32>, vector<256x8xf32> -> vector<256x8xf32>
    %30 = arith.addf %21, %29 : vector<256x8xf32>
    %31 = vector.extract_strided_slice %18 {offsets = [16, 0], sizes = [240, 24], strides = [1, 1]} : vector<256x24xf32> to vector<240x24xf32>
    %32 = vector.extract_strided_slice %18 {offsets = [0, 0], sizes = [16, 24], strides = [1, 1]} : vector<256x24xf32> to vector<16x24xf32>
    %33 = tpu.concatenate %31, %32 in 0 : vector<240x24xf32>, vector<16x24xf32> -> vector<256x24xf32>
    %34 = vector.broadcast %4 : vector<256x1xf32> to vector<256x24xf32>
    %35 = arith.mulf %33, %34 : vector<256x24xf32>
    %c2_19 = arith.constant 2 : index
    %c0_20 = arith.constant 0 : index
    %c0_21 = arith.constant 0 : index
    %36 = vector.load %arg3[%c2_19, %c0_20, %c0_21] : memref<3x24x8xf32, #tpu.memory_space<vmem>>, vector<1x24x8xf32>
    %37 = vector.shape_cast %36 : vector<1x24x8xf32> to vector<24x8xf32>
    %cst_22 = arith.constant dense<0.000000e+00> : vector<256x8xf32>
    %38 = tpu.matmul %35, %37, %cst_22 {dimension_numbers = #tpu.dot_dimension_numbers<[1], [0], [0], [1], [0, 0, 1, 1], [], []>} : vector<256x24xf32>, vector<24x8xf32>, vector<256x8xf32> -> vector<256x8xf32>
    %39 = arith.addf %30, %38 : vector<256x8xf32>
    %c0_23 = arith.constant 0 : index
    %c0_24 = arith.constant 0 : index
    %40 = vector.load %arg4[%c0_23, %c0_24] : memref<1x8xf32, #tpu.memory_space<vmem>>, vector<1x8xf32>
    %41 = vector.broadcast %40 : vector<1x8xf32> to vector<256x8xf32>
    %42 = arith.addf %39, %41 : vector<256x8xf32>
    %cst_25 = arith.constant 0.000000e+00 : f32
    %43 = vector.broadcast %cst_25 : f32 to vector<256x8xf32>
    %44 = arith.maximumf %42, %43 : vector<256x8xf32>
    %45 = vector.extract_strided_slice %44 {offsets = [255, 0], sizes = [1, 8], strides = [1, 1]} : vector<256x8xf32> to vector<1x8xf32>
    %46 = vector.extract_strided_slice %44 {offsets = [0, 0], sizes = [255, 8], strides = [1, 1]} : vector<256x8xf32> to vector<255x8xf32>
    %47 = tpu.concatenate %45, %46 in 0 : vector<1x8xf32>, vector<255x8xf32> -> vector<256x8xf32>
    %48 = vector.broadcast %1 : vector<256x1xf32> to vector<256x8xf32>
    %49 = arith.mulf %47, %48 : vector<256x8xf32>
    %50 = vector.extract_strided_slice %44 {offsets = [1, 0], sizes = [255, 8], strides = [1, 1]} : vector<256x8xf32> to vector<255x8xf32>
    %51 = vector.extract_strided_slice %44 {offsets = [0, 0], sizes = [1, 8], strides = [1, 1]} : vector<256x8xf32> to vector<1x8xf32>
    %52 = tpu.concatenate %50, %51 in 0 : vector<255x8xf32>, vector<1x8xf32> -> vector<256x8xf32>
    %53 = vector.broadcast %2 : vector<256x1xf32> to vector<256x8xf32>
    %54 = arith.mulf %52, %53 : vector<256x8xf32>
    %c0_26 = arith.constant 0 : index
    %c0_27 = arith.constant 0 : index
    %55 = vector.load %arg8[%c0_26, %c0_27] : memref<256x24xf32, #tpu.memory_space<vmem>>, vector<256x8xf32>
    tpu.vector_store %arg8[%c0_26, %c0_27], %49 {strides = array<i32>} : memref<256x24xf32, #tpu.memory_space<vmem>>, vector<256x8xf32>,
    %c0_28 = arith.constant 0 : index
    %c8_29 = arith.constant 8 : index
    %56 = vector.load %arg8[%c0_28, %c8_29] : memref<256x24xf32, #tpu.memory_space<vmem>>, vector<256x8xf32>
    tpu.vector_store %arg8[%c0_28, %c8_29], %44 {strides = array<i32>} : memref<256x24xf32, #tpu.memory_space<vmem>>, vector<256x8xf32>,
    %c0_30 = arith.constant 0 : index
    %c16_31 = arith.constant 16 : index
    %57 = vector.load %arg8[%c0_30, %c16_31] : memref<256x24xf32, #tpu.memory_space<vmem>>, vector<256x8xf32>
    tpu.vector_store %arg8[%c0_30, %c16_31], %54 {strides = array<i32>} : memref<256x24xf32, #tpu.memory_space<vmem>>, vector<256x8xf32>,
    %c0_32 = arith.constant 0 : index
    %c0_33 = arith.constant 0 : index
    %58 = vector.load %arg8[%c0_32, %c0_33] : memref<256x24xf32, #tpu.memory_space<vmem>>, vector<256x24xf32>
    %c1_34 = arith.constant 1 : index
    %c0_35 = arith.constant 0 : index
    %c0_36 = arith.constant 0 : index
    %59 = vector.load %arg5[%c1_34, %c0_35, %c0_36] : memref<3x24x8xf32, #tpu.memory_space<vmem>>, vector<1x24x8xf32>
    %60 = vector.shape_cast %59 : vector<1x24x8xf32> to vector<24x8xf32>
    %cst_37 = arith.constant dense<0.000000e+00> : vector<256x8xf32>
    %61 = tpu.matmul %58, %60, %cst_37 {dimension_numbers = #tpu.dot_dimension_numbers<[1], [0], [0], [1], [0, 0, 1, 1], [], []>} : vector<256x24xf32>, vector<24x8xf32>, vector<256x8xf32> -> vector<256x8xf32>
    %62 = vector.extract_strided_slice %58 {offsets = [240, 0], sizes = [16, 24], strides = [1, 1]} : vector<256x24xf32> to vector<16x24xf32>
    %63 = vector.extract_strided_slice %58 {offsets = [0, 0], sizes = [240, 24], strides = [1, 1]} : vector<256x24xf32> to vector<240x24xf32>
    %64 = tpu.concatenate %62, %63 in 0 : vector<16x24xf32>, vector<240x24xf32> -> vector<256x24xf32>
    %65 = vector.broadcast %3 : vector<256x1xf32> to vector<256x24xf32>
    %66 = arith.mulf %64, %65 : vector<256x24xf32>
    %c0_38 = arith.constant 0 : index
    %c0_39 = arith.constant 0 : index
    %c0_40 = arith.constant 0 : index
    %67 = vector.load %arg5[%c0_38, %c0_39, %c0_40] : memref<3x24x8xf32, #tpu.memory_space<vmem>>, vector<1x24x8xf32>
    %68 = vector.shape_cast %67 : vector<1x24x8xf32> to vector<24x8xf32>
    %cst_41 = arith.constant dense<0.000000e+00> : vector<256x8xf32>
    %69 = tpu.matmul %66, %68, %cst_41 {dimension_numbers = #tpu.dot_dimension_numbers<[1], [0], [0], [1], [0, 0, 1, 1], [], []>} : vector<256x24xf32>, vector<24x8xf32>, vector<256x8xf32> -> vector<256x8xf32>
    %70 = arith.addf %61, %69 : vector<256x8xf32>
    %71 = vector.extract_strided_slice %58 {offsets = [16, 0], sizes = [240, 24], strides = [1, 1]} : vector<256x24xf32> to vector<240x24xf32>
    %72 = vector.extract_strided_slice %58 {offsets = [0, 0], sizes = [16, 24], strides = [1, 1]} : vector<256x24xf32> to vector<16x24xf32>
    %73 = tpu.concatenate %71, %72 in 0 : vector<240x24xf32>, vector<16x24xf32> -> vector<256x24xf32>
    %74 = vector.broadcast %4 : vector<256x1xf32> to vector<256x24xf32>
    %75 = arith.mulf %73, %74 : vector<256x24xf32>
    %c2_42 = arith.constant 2 : index
    %c0_43 = arith.constant 0 : index
    %c0_44 = arith.constant 0 : index
    %76 = vector.load %arg5[%c2_42, %c0_43, %c0_44] : memref<3x24x8xf32, #tpu.memory_space<vmem>>, vector<1x24x8xf32>
    %77 = vector.shape_cast %76 : vector<1x24x8xf32> to vector<24x8xf32>
    %cst_45 = arith.constant dense<0.000000e+00> : vector<256x8xf32>
    %78 = tpu.matmul %75, %77, %cst_45 {dimension_numbers = #tpu.dot_dimension_numbers<[1], [0], [0], [1], [0, 0, 1, 1], [], []>} : vector<256x24xf32>, vector<24x8xf32>, vector<256x8xf32> -> vector<256x8xf32>
    %79 = arith.addf %70, %78 : vector<256x8xf32>
    %c0_46 = arith.constant 0 : index
    %c0_47 = arith.constant 0 : index
    %80 = vector.load %arg6[%c0_46, %c0_47] : memref<1x8xf32, #tpu.memory_space<vmem>>, vector<1x8xf32>
    %81 = vector.broadcast %80 : vector<1x8xf32> to vector<256x8xf32>
    %82 = arith.addf %79, %81 : vector<256x8xf32>
    %cst_48 = arith.constant 0.000000e+00 : f32
    %83 = vector.broadcast %cst_48 : f32 to vector<256x8xf32>
    %84 = arith.maximumf %82, %83 : vector<256x8xf32>
    %cst_49 = arith.constant 5.000000e-01 : f32
    %85 = vector.broadcast %cst_49 : f32 to vector<256x8xf32>
    %86 = arith.mulf %84, %85 : vector<256x8xf32>
    %87 = arith.addf %86, %0 : vector<256x8xf32>
    %c0_50 = arith.constant 0 : index
    %c0_51 = arith.constant 0 : index
    %88 = vector.load %arg7[%c0_50, %c0_51] : memref<256x8xf32, #tpu.memory_space<vmem>>, vector<256x8xf32>
    tpu.vector_store %arg7[%c0_50, %c0_51], %87 {strides = array<i32>} : memref<256x8xf32, #tpu.memory_space<vmem>>, vector<256x8xf32>,
    return
  }
  func.func @transform_0(%arg0: i32) -> (i32, i32) {
    %c0_i32 = arith.constant 0 : i32
    %c0_i32_0 = arith.constant 0 : i32
    %c0_i32_1 = arith.constant 0 : i32
    return %c0_i32, %c0_i32_0 : i32, i32
  }
  func.func @transform_1(%arg0: i32) -> (i32, i32) {
    %c0_i32 = arith.constant 0 : i32
    %c0_i32_0 = arith.constant 0 : i32
    return %arg0, %c0_i32 : i32, i32
  }
  func.func @transform_2(%arg0: i32) -> (i32, i32, i32) {
    %c0_i32 = arith.constant 0 : i32
    %c0_i32_0 = arith.constant 0 : i32
    %c0_i32_1 = arith.constant 0 : i32
    %c0_i32_2 = arith.constant 0 : i32
    return %c0_i32, %c0_i32_0, %c0_i32_1 : i32, i32, i32
  }
  func.func @transform_3(%arg0: i32) -> (i32, i32) {
    %c0_i32 = arith.constant 0 : i32
    %c0_i32_0 = arith.constant 0 : i32
    %c0_i32_1 = arith.constant 0 : i32
    return %c0_i32, %c0_i32_0 : i32, i32
  }
  func.func @transform_4(%arg0: i32) -> (i32, i32, i32) {
    %c0_i32 = arith.constant 0 : i32
    %c0_i32_0 = arith.constant 0 : i32
    %c0_i32_1 = arith.constant 0 : i32
    %c0_i32_2 = arith.constant 0 : i32
    return %c0_i32, %c0_i32_0, %c0_i32_1 : i32, i32, i32
  }
  func.func @transform_5(%arg0: i32) -> (i32, i32) {
    %c0_i32 = arith.constant 0 : i32
    %c0_i32_0 = arith.constant 0 : i32
    %c0_i32_1 = arith.constant 0 : i32
    return %c0_i32, %c0_i32_0 : i32, i32
  }
  func.func @transform_6(%arg0: i32) -> (i32, i32) {
    %c0_i32 = arith.constant 0 : i32
    %c0_i32_0 = arith.constant 0 : i32
    return %arg0, %c0_i32 : i32, i32
  }
}

</mosaic_0001>

<llo_original>
// kernel: tpu_custom_call.1
$region0: #{tpu_custom_call.1}
  #allocation0 [shape = 'u32[]', space=smem, size = 0x4, offset = 0x4, fixed_abs, tag = 'smem constant byte address 0x4 - core index']
  #allocation1 [shape = 'u32[72,128]{1,0:T(1,128)}', space=vmem, size = 0x9000, scoped, tag = 'internal scratch']
  #allocation2 [shape = 'f32[256,24]{1,0:T(8,128)}', space=vmem, size = 0x20000, scoped, tag = 'scratch operand']
  %s0 = inlined_call_operand.vmem [shape: f32[256,4], index: 0, kind: input, shape index: {}]
  %s1 = inlined_call_operand.vmem [shape: f32[512,8], index: 1, kind: input, shape index: {}]
  %s2 = inlined_call_operand.vmem [shape: f32[3,24,8], index: 2, kind: input, shape index: {}]
  %s3 = inlined_call_operand.vmem [shape: f32[1,8], index: 3, kind: input, shape index: {}]
  %s4 = inlined_call_operand.vmem [shape: f32[3,24,8], index: 4, kind: input, shape index: {}]
  %s5 = inlined_call_operand.vmem [shape: f32[1,8], index: 5, kind: input, shape index: {}]
  %s6 = inlined_call_operand.vmem [shape: f32[512,8], index: 6, kind: output, shape index: {}]
  %s7 = sld [smem:[#allocation0]]
  $region57: #{tpu_custom_call.1} parent=0
    _
  %s9 = ssub.s32 1, %s7
  %s10 = scalar_select 0, %s9, %s7
  loop: start=0, step=1, limit=4
  $region2: #{tpu_custom_call.1} parent=0 // loop_pre_header
    _
  $region3: #{tpu_custom_call.1} parent=0 // loop_header
    %s12 = sphi 0, %s16
    %p13 = scmp.ge.s32.totalorder %s12, 4
    %s20 = sphi 0, %s20
    %s22 = sphi 0, %s20
    %s23 = sphi 0, %s22
    %s37 = sphi 0, %s23
    %s43 = sphi 0, %s45
    %s46 = sphi 0, %s43
    %s47 = sphi 0, %s46
    %s63 = sphi 0, %s47
    %s67 = sphi 0, %s67
    %s69 = sphi 0, %s67
    %s70 = sphi 0, %s69
    %s84 = sphi 0, %s70
    %s88 = sphi 0, %s88
    %s90 = sphi 0, %s88
    %s91 = sphi 0, %s90
    %s105 = sphi 0, %s91
    %s109 = sphi 0, %s109
    %s111 = sphi 0, %s109
    %s112 = sphi 0, %s111
    %s126 = sphi 0, %s112
    %s130 = sphi 0, %s130
    %s132 = sphi 0, %s130
    %s133 = sphi 0, %s132
    %s147 = sphi 0, %s133
    %s153 = sphi 0, %s155
    %s156 = sphi 0, %s153
    %s157 = sphi 0, %s156
    %s173 = sphi 0, %s157
  $region4: #{tpu_custom_call.1} parent=0 // loop_header_branch
    %15 = sbr.rel (%p13) target = $region8
  $region5: #{tpu_custom_call.1} parent=0 // loop_body
    %s17 = ssub.s32 %s12, 1
    %s18 = ssub.s32 %s12, 2
    %s19 = sadd.s32 %s12, 1
    %s21 = sadd.s32 %s20, 1
    %p24 = scmp.eq.s32.totalorder %s12, 1
    %p25 = scmp.ne.s32.totalorder %s20, %s22
    %p26 = scmp.eq.s32.totalorder %s12, 0
    %p27 = por %p25, %p26
    %p28 = scmp.ne.s32.totalorder %s20, %s22
    %p29 = scmp.eq.s32.totalorder %s17, 1
    %p30 = por %p28, %p29
    %p31 = scmp.ne.s32.totalorder %s22, %s23
    %p32 = scmp.eq.s32.totalorder %s17, 0
    %p33 = por %p31, %p32
    %p34 = scmp.ne.s32.totalorder %s22, %s23
    %p35 = scmp.eq.s32.totalorder %s18, 1
    %p36 = por %p34, %p35
    %p38 = scmp.ne.s32.totalorder %s23, %s37
    %p39 = scmp.eq.s32.totalorder %s18, 0
    %p40 = por %p38, %p39
    %s41 = ssub.s32 %s12, %s19
    %p42 = scmp.eq.s32.totalorder %s41, 0
    %s44 = sadd.s32 %s43, 1
    %s45 = scalar_select %p42, %s43, %s44
    %p48 = pneg %p42
    %p49 = scmp.eq.s32.totalorder %s12, 1
    %p50 = por %p48, %p49
    %p51 = scmp.ne.s32.totalorder %s43, %s46
    %p52 = scmp.eq.s32.totalorder %s12, 0
    %p53 = por %p51, %p52
    %p54 = scmp.ne.s32.totalorder %s43, %s46
    %p55 = scmp.eq.s32.totalorder %s17, 1
    %p56 = por %p54, %p55
    %p57 = scmp.ne.s32.totalorder %s46, %s47
    %p58 = scmp.eq.s32.totalorder %s17, 0
    %p59 = por %p57, %p58
    %p60 = scmp.ne.s32.totalorder %s46, %s47
    %p61 = scmp.eq.s32.totalorder %s18, 1
    %p62 = por %p60, %p61
    %p64 = scmp.ne.s32.totalorder %s47, %s63
    %p65 = scmp.eq.s32.totalorder %s18, 0
    %p66 = por %p64, %p65
    %s68 = sadd.s32 %s67, 1
    %p71 = scmp.eq.s32.totalorder %s12, 1
    %p72 = scmp.ne.s32.totalorder %s67, %s69
    %p73 = scmp.eq.s32.totalorder %s12, 0
    %p74 = por %p72, %p73
    %p75 = scmp.ne.s32.totalorder %s67, %s69
    %p76 = scmp.eq.s32.totalorder %s17, 1
    %p77 = por %p75, %p76
    %p78 = scmp.ne.s32.totalorder %s69, %s70
    %p79 = scmp.eq.s32.totalorder %s17, 0
    %p80 = por %p78, %p79
    %p81 = scmp.ne.s32.totalorder %s69, %s70
    %p82 = scmp.eq.s32.totalorder %s18, 1
    %p83 = por %p81, %p82
    %p85 = scmp.ne.s32.totalorder %s70, %s84
    %p86 = scmp.eq.s32.totalorder %s18, 0
    %p87 = por %p85, %p86
    %s89 = sadd.s32 %s88, 1
    %p92 = scmp.eq.s32.totalorder %s12, 1
    %p93 = scmp.ne.s32.totalorder %s88, %s90
    %p94 = scmp.eq.s32.totalorder %s12, 0
    %p95 = por %p93, %p94
    %p96 = scmp.ne.s32.totalorder %s88, %s90
    %p97 = scmp.eq.s32.totalorder %s17, 1
    %p98 = por %p96, %p97
    %p99 = scmp.ne.s32.totalorder %s90, %s91
    %p100 = scmp.eq.s32.totalorder %s17, 0
    %p101 = por %p99, %p100
    %p102 = scmp.ne.s32.totalorder %s90, %s91
    %p103 = scmp.eq.s32.totalorder %s18, 1
    %p104 = por %p102, %p103
    %p106 = scmp.ne.s32.totalorder %s91, %s105
    %p107 = scmp.eq.s32.totalorder %s18, 0
    %p108 = por %p106, %p107
    %s110 = sadd.s32 %s109, 1
    %p113 = scmp.eq.s32.totalorder %s12, 1
    %p114 = scmp.ne.s32.totalorder %s109, %s111
    %p115 = scmp.eq.s32.totalorder %s12, 0
    %p116 = por %p114, %p115
    %p117 = scmp.ne.s32.totalorder %s109, %s111
    %p118 = scmp.eq.s32.totalorder %s17, 1
    %p119 = por %p117, %p118
    %p120 = scmp.ne.s32.totalorder %s111, %s112
    %p121 = scmp.eq.s32.totalorder %s17, 0
    %p122 = por %p120, %p121
    %p123 = scmp.ne.s32.totalorder %s111, %s112
    %p124 = scmp.eq.s32.totalorder %s18, 1
    %p125 = por %p123, %p124
    %p127 = scmp.ne.s32.totalorder %s112, %s126
    %p128 = scmp.eq.s32.totalorder %s18, 0
    %p129 = por %p127, %p128
    %s131 = sadd.s32 %s130, 1
    %p134 = scmp.eq.s32.totalorder %s12, 1
    %p135 = scmp.ne.s32.totalorder %s130, %s132
    %p136 = scmp.eq.s32.totalorder %s12, 0
    %p137 = por %p135, %p136
    %p138 = scmp.ne.s32.totalorder %s130, %s132
    %p139 = scmp.eq.s32.totalorder %s17, 1
    %p140 = por %p138, %p139
    %p141 = scmp.ne.s32.totalorder %s132, %s133
    %p142 = scmp.eq.s32.totalorder %s17, 0
    %p143 = por %p141, %p142
    %p144 = scmp.ne.s32.totalorder %s132, %s133
    %p145 = scmp.eq.s32.totalorder %s18, 1
    %p146 = por %p144, %p145
    %p148 = scmp.ne.s32.totalorder %s133, %s147
    %p149 = scmp.eq.s32.totalorder %s18, 0
    %p150 = por %p148, %p149
    %s151 = ssub.s32 %s12, %s19
    %p152 = scmp.eq.s32.totalorder %s151, 0
    %s154 = sadd.s32 %s153, 1
    %s155 = scalar_select %p152, %s153, %s154
    %p158 = pneg %p152
    %p159 = scmp.eq.s32.totalorder %s12, 1
    %p160 = por %p158, %p159
    %p161 = scmp.ne.s32.totalorder %s153, %s156
    %p162 = scmp.eq.s32.totalorder %s12, 0
    %p163 = por %p161, %p162
    %p164 = scmp.ne.s32.totalorder %s153, %s156
    %p165 = scmp.eq.s32.totalorder %s17, 1
    %p166 = por %p164, %p165
    %p167 = scmp.ne.s32.totalorder %s156, %s157
    %p168 = scmp.eq.s32.totalorder %s17, 0
    %p169 = por %p167, %p168
    %p170 = scmp.ne.s32.totalorder %s156, %s157
    %p171 = scmp.eq.s32.totalorder %s18, 1
    %p172 = por %p170, %p171
    %p174 = scmp.ne.s32.totalorder %s157, %s173
    %p175 = scmp.eq.s32.totalorder %s18, 0
    %p176 = por %p174, %p175
    %p177 = scmp.le.s32.totalorder 1, %s12
    %p178 = scmp.lt.s32.totalorder %s12, 3
    %p179 = pnand %p177, %p178
    %p180 = pneg %p179
    // Predicated region
    $region9: #{tpu_custom_call.1} parent=5 // pred_check
      _
    $region10: #{tpu_custom_call.1} parent=5 // pred_check_branch
      %182 = sbr.rel (%p179) target = $region12
    $region11: #{tpu_custom_call.1} parent=5 // pred_region
      %s183 = ssub.s32 %s12, 1
      // Predicated region
      $region13: #{tpu_custom_call.1} parent=11 // pred_check
        %p184 = pneg %p33
      $region14: #{tpu_custom_call.1} parent=11 // pred_check_branch
        %186 = sbr.rel (%p184) target = $region16
      $region15: #{tpu_custom_call.1} parent=11 // pred_region
        _
      $region16: #{tpu_custom_call.1} parent=11 // pred_fallthru
        _
      // Predicated region
      $region17: #{tpu_custom_call.1} parent=11 // pred_check
        %p187 = pneg %p80
      $region18: #{tpu_custom_call.1} parent=11 // pred_check_branch
        %189 = sbr.rel (%p187) target = $region20
      $region19: #{tpu_custom_call.1} parent=11 // pred_region
        _
      $region20: #{tpu_custom_call.1} parent=11 // pred_fallthru
        _
      // Predicated region
      $region21: #{tpu_custom_call.1} parent=11 // pred_check
        %p190 = pneg %p101
      $region22: #{tpu_custom_call.1} parent=11 // pred_check_branch
        %192 = sbr.rel (%p190) target = $region24
      $region23: #{tpu_custom_call.1} parent=11 // pred_region
        _
      $region24: #{tpu_custom_call.1} parent=11 // pred_fallthru
        _
      // Predicated region
      $region25: #{tpu_custom_call.1} parent=11 // pred_check
        %p193 = pneg %p122
      $region26: #{tpu_custom_call.1} parent=11 // pred_check_branch
        %195 = sbr.rel (%p193) target = $region28
      $region27: #{tpu_custom_call.1} parent=11 // pred_region
        _
      $region28: #{tpu_custom_call.1} parent=11 // pred_fallthru
        _
      // Predicated region
      $region29: #{tpu_custom_call.1} parent=11 // pred_check
        %p196 = pneg %p143
      $region30: #{tpu_custom_call.1} parent=11 // pred_check_branch
        %198 = sbr.rel (%p196) target = $region32
      $region31: #{tpu_custom_call.1} parent=11 // pred_region
        _
      $region32: #{tpu_custom_call.1} parent=11 // pred_fallthru
        _
    $region12: #{tpu_custom_call.1} parent=5 // pred_fallthru
      _
    %p199 = scmp.lt.s32.totalorder %s12, 2
    // Predicated region
    $region33: #{tpu_custom_call.1} parent=5 // pred_check
      %p200 = pneg %p199
    $region34: #{tpu_custom_call.1} parent=5 // pred_check_branch
      %202 = sbr.rel (%p200) target = $region36
    $region35: #{tpu_custom_call.1} parent=5 // pred_region
      // Predicated region
      $region37: #{tpu_custom_call.1} parent=35 // pred_check
        %p203 = pneg %p53
      $region38: #{tpu_custom_call.1} parent=35 // pred_check_branch
        %205 = sbr.rel (%p203) target = $region40
      $region39: #{tpu_custom_call.1} parent=35 // pred_region
        %s206 = smul.u32 32, %s12
        %p207 = scmp.lt.s32.totalorder %s206, 63
        %s208 = scalar_select %p207, %s206, 63
        %s209 = smul.addr %s208, 8
        %s210 = scalar_lea.vmem %s1, %s209
        %s211 = smul.u32 32, %s12
      $region40: #{tpu_custom_call.1} parent=35 // pred_fallthru
        _
    $region36: #{tpu_custom_call.1} parent=5 // pred_fallthru
      _
    %p212 = scmp.le.s32.totalorder 1, %s12
    %p213 = scmp.lt.s32.totalorder %s12, 3
    %p214 = pnand %p212, %p213
    %p215 = pneg %p214
    // Predicated region
    $region41: #{tpu_custom_call.1} parent=5 // pred_check
      _
    $region42: #{tpu_custom_call.1} parent=5 // pred_check_branch
      %217 = sbr.rel (%p214) target = $region44
    $region43: #{tpu_custom_call.1} parent=5 // pred_region
      %s218 = ssub.s32 %s12, 1
      %p219 = pneg %p33
      %p220 = pneg %p30
      %s221 = smul.u32 32, %s17
      %p222 = scmp.lt.s32.totalorder %s221, 63
      %s223 = scalar_select %p222, %s221, 63
      %s224 = smul.addr %s223, 8
      %s225 = scalar_lea.vmem %s1, %s224
      %p226 = pneg %p59
      %p227 = pneg %p56
      %p228 = pneg %p80
      %p229 = pneg %p77
      %p230 = pneg %p101
      %p231 = pneg %p98
      %p232 = pneg %p122
      %p233 = pneg %p119
      %p234 = pneg %p143
      %p235 = pneg %p140
      %p236 = pneg %p169
      %p237 = pneg %p166
      %s238 = smul.u32 32, %s17
      %p239 = scmp.lt.s32.totalorder %s238, 63
      %s240 = scalar_select %p239, %s238, 63
      %s241 = smul.addr %s240, 8
      %s242 = scalar_lea.vmem %s6, %s241
      %s243 = smul.u32 32, %s17
      %p244 = scmp.lt.s32.totalorder %s243, 63
      %s245 = scalar_select %p244, %s243, 63
      %s246 = smul.addr %s245, 8
      %s247 = scalar_lea.vmem %s1, %s246
      %s248 = smul.u32 32, %s17
      %s249 = smul.u32 32, %s17
      %p250 = scmp.lt.s32.totalorder %s249, 63
      %s251 = scalar_select %p250, %s249, 63
      %s252 = smul.addr %s251, 8
      %s253 = scalar_lea.vmem %s6, %s252
      %s254 = smul.u32 32, %s17
      %v255 = vld [vmem:[%s247] sm:$0xff]
      %v256 = vld [vmem:[%s247 + $0x8] sm:$0xff]
      %v257 = vld [vmem:[%s247 + $0x10] sm:$0xff]
      %v258 = vld [vmem:[%s247 + $0x18] sm:$0xff]
      %v259 = vld [vmem:[%s247 + $0x20] sm:$0xff]
      %v260 = vld [vmem:[%s247 + $0x28] sm:$0xff]
      %v261 = vld [vmem:[%s247 + $0x30] sm:$0xff]
      %v262 = vld [vmem:[%s247 + $0x38] sm:$0xff]
      %v263 = vld [vmem:[%s247 + $0x40] sm:$0xff]
      %v264 = vld [vmem:[%s247 + $0x48] sm:$0xff]
      %v265 = vld [vmem:[%s247 + $0x50] sm:$0xff]
      %v266 = vld [vmem:[%s247 + $0x58] sm:$0xff]
      %v267 = vld [vmem:[%s247 + $0x60] sm:$0xff]
      %v268 = vld [vmem:[%s247 + $0x68] sm:$0xff]
      %v269 = vld [vmem:[%s247 + $0x70] sm:$0xff]
      %v270 = vld [vmem:[%s247 + $0x78] sm:$0xff]
      %v271 = vld [vmem:[%s247 + $0x80] sm:$0xff]
      %v272 = vld [vmem:[%s247 + $0x88] sm:$0xff]
      %v273 = vld [vmem:[%s247 + $0x90] sm:$0xff]
      %v274 = vld [vmem:[%s247 + $0x98] sm:$0xff]
      %v275 = vld [vmem:[%s247 + $0xa0] sm:$0xff]
      %v276 = vld [vmem:[%s247 + $0xa8] sm:$0xff]
      %v277 = vld [vmem:[%s247 + $0xb0] sm:$0xff]
      %v278 = vld [vmem:[%s247 + $0xb8] sm:$0xff]
      %v279 = vld [vmem:[%s247 + $0xc0] sm:$0xff]
      %v280 = vld [vmem:[%s247 + $0xc8] sm:$0xff]
      %v281 = vld [vmem:[%s247 + $0xd0] sm:$0xff]
      %v282 = vld [vmem:[%s247 + $0xd8] sm:$0xff]
      %v283 = vld [vmem:[%s247 + $0xe0] sm:$0xff]
      %v284 = vld [vmem:[%s247 + $0xe8] sm:$0xff]
      %v285 = vld [vmem:[%s247 + $0xf0] sm:$0xff]
      %v286 = vld [vmem:[%s247 + $0xf8] sm:$0xff]
      %v287 = vld [vmem:[%s0] sm:$0xff]
      %v288 = vld [vmem:[%s0 + $0x8] sm:$0xff]
      %v289 = vld [vmem:[%s0 + $0x10] sm:$0xff]
      %v290 = vld [vmem:[%s0 + $0x18] sm:$0xff]
      %v291 = vld [vmem:[%s0 + $0x20] sm:$0xff]
      %v292 = vld [vmem:[%s0 + $0x28] sm:$0xff]
      %v293 = vld [vmem:[%s0 + $0x30] sm:$0xff]
      %v294 = vld [vmem:[%s0 + $0x38] sm:$0xff]
      %v295 = vld [vmem:[%s0 + $0x40] sm:$0xff]
      %v296 = vld [vmem:[%s0 + $0x48] sm:$0xff]
      %v297 = vld [vmem:[%s0 + $0x50] sm:$0xff]
      %v298 = vld [vmem:[%s0 + $0x58] sm:$0xff]
      %v299 = vld [vmem:[%s0 + $0x60] sm:$0xff]
      %v300 = vld [vmem:[%s0 + $0x68] sm:$0xff]
      %v301 = vld [vmem:[%s0 + $0x70] sm:$0xff]
      %v302 = vld [vmem:[%s0 + $0x78] sm:$0xff]
      %v303 = vld [vmem:[%s0 + $0x80] sm:$0xff]
      %v304 = vld [vmem:[%s0 + $0x88] sm:$0xff]
      %v305 = vld [vmem:[%s0 + $0x90] sm:$0xff]
      %v306 = vld [vmem:[%s0 + $0x98] sm:$0xff]
      %v307 = vld [vmem:[%s0 + $0xa0] sm:$0xff]
      %v308 = vld [vmem:[%s0 + $0xa8] sm:$0xff]
      %v309 = vld [vmem:[%s0 + $0xb0] sm:$0xff]
      %v310 = vld [vmem:[%s0 + $0xb8] sm:$0xff]
      %v311 = vld [vmem:[%s0 + $0xc0] sm:$0xff]
      %v312 = vld [vmem:[%s0 + $0xc8] sm:$0xff]
      %v313 = vld [vmem:[%s0 + $0xd0] sm:$0xff]
      %v314 = vld [vmem:[%s0 + $0xd8] sm:$0xff]
      %v315 = vld [vmem:[%s0 + $0xe0] sm:$0xff]
      %v316 = vld [vmem:[%s0 + $0xe8] sm:$0xff]
      %v317 = vld [vmem:[%s0 + $0xf0] sm:$0xff]
      %v318 = vld [vmem:[%s0 + $0xf8] sm:$0xff]
      %v320 = vrot.slane %v286, 7
      %vm353 = vcmask 1040384
      %v354 = vrot.slane %v255, 7
      %v355 = vrot.slane %v256, 7
      %v356 = vsel %vm353, %v354, %v355
      %v357 = vrot.slane %v257, 7
      %v358 = vsel %vm353, %v355, %v357
      %v359 = vrot.slane %v258, 7
      %v360 = vsel %vm353, %v357, %v359
      %v361 = vrot.slane %v259, 7
      %v362 = vsel %vm353, %v359, %v361
      %v363 = vrot.slane %v260, 7
      %v364 = vsel %vm353, %v361, %v363
      %v365 = vrot.slane %v261, 7
      %v366 = vsel %vm353, %v363, %v365
      %v367 = vrot.slane %v262, 7
      %v368 = vsel %vm353, %v365, %v367
      %v369 = vrot.slane %v263, 7
      %v370 = vsel %vm353, %v367, %v369
      %v371 = vrot.slane %v264, 7
      %v372 = vsel %vm353, %v369, %v371
      %v373 = vrot.slane %v265, 7
      %v374 = vsel %vm353, %v371, %v373
      %v375 = vrot.slane %v266, 7
      %v376 = vsel %vm353, %v373, %v375
      %v377 = vrot.slane %v267, 7
      %v378 = vsel %vm353, %v375, %v377
      %v379 = vrot.slane %v268, 7
      %v380 = vsel %vm353, %v377, %v379
      %v381 = vrot.slane %v269, 7
      %v382 = vsel %vm353, %v379, %v381
      %v383 = vrot.slane %v270, 7
      %v384 = vsel %vm353, %v381, %v383
      %v385 = vrot.slane %v271, 7
      %v386 = vsel %vm353, %v383, %v385
      %v387 = vrot.slane %v272, 7
      %v388 = vsel %vm353, %v385, %v387
      %v389 = vrot.slane %v273, 7
      %v390 = vsel %vm353, %v387, %v389
      %v391 = vrot.slane %v274, 7
      %v392 = vsel %vm353, %v389, %v391
      %v393 = vrot.slane %v275, 7
      %v394 = vsel %vm353, %v391, %v393
      %v395 = vrot.slane %v276, 7
      %v396 = vsel %vm353, %v393, %v395
      %v397 = vrot.slane %v277, 7
      %v398 = vsel %vm353, %v395, %v397
      %v399 = vrot.slane %v278, 7
      %v400 = vsel %vm353, %v397, %v399
      %v401 = vrot.slane %v279, 7
      %v402 = vsel %vm353, %v399, %v401
      %v403 = vrot.slane %v280, 7
      %v404 = vsel %vm353, %v401, %v403
      %v405 = vrot.slane %v281, 7
      %v406 = vsel %vm353, %v403, %v405
      %v407 = vrot.slane %v282, 7
      %v408 = vsel %vm353, %v405, %v407
      %v409 = vrot.slane %v283, 7
      %v410 = vsel %vm353, %v407, %v409
      %v411 = vrot.slane %v284, 7
      %v412 = vsel %vm353, %v409, %v411
      %v413 = vrot.slane %v285, 7
      %v414 = vsel %vm353, %v411, %v413
      %v415 = vsel %vm353, %v413, %v320
      %v448 = vsel %vm353, %v320, %v354
      %450 = vset.pattern.permute.xlu0 0
      %451 = vperm.xlu0 %450, %v287
      %v452 = vpop.permute.xlu0 %451
      %455 = vset.pattern.permute.xlu0 0
      %456 = vperm.xlu0 %455, %v288
      %v457 = vpop.permute.xlu0 %456
      %460 = vset.pattern.permute.xlu0 0
      %461 = vperm.xlu0 %460, %v289
      %v462 = vpop.permute.xlu0 %461
      %465 = vset.pattern.permute.xlu0 0
      %466 = vperm.xlu0 %465, %v290
      %v467 = vpop.permute.xlu0 %466
      %470 = vset.pattern.permute.xlu0 0
      %471 = vperm.xlu0 %470, %v291
      %v472 = vpop.permute.xlu0 %471
      %475 = vset.pattern.permute.xlu0 0
      %476 = vperm.xlu0 %475, %v292
      %v477 = vpop.permute.xlu0 %476
      %480 = vset.pattern.permute.xlu0 0
      %481 = vperm.xlu0 %480, %v293
      %v482 = vpop.permute.xlu0 %481
      %485 = vset.pattern.permute.xlu0 0
      %486 = vperm.xlu0 %485, %v294
      %v487 = vpop.permute.xlu0 %486
      %490 = vset.pattern.permute.xlu0 0
      %491 = vperm.xlu0 %490, %v295
      %v492 = vpop.permute.xlu0 %491
      %495 = vset.pattern.permute.xlu0 0
      %496 = vperm.xlu0 %495, %v296
      %v497 = vpop.permute.xlu0 %496
      %500 = vset.pattern.permute.xlu0 0
      %501 = vperm.xlu0 %500, %v297
      %v502 = vpop.permute.xlu0 %501
      %505 = vset.pattern.permute.xlu0 0
      %506 = vperm.xlu0 %505, %v298
      %v507 = vpop.permute.xlu0 %506
      %510 = vset.pattern.permute.xlu0 0
      %511 = vperm.xlu0 %510, %v299
      %v512 = vpop.permute.xlu0 %511
      %515 = vset.pattern.permute.xlu0 0
      %516 = vperm.xlu0 %515, %v300
      %v517 = vpop.permute.xlu0 %516
      %520 = vset.pattern.permute.xlu0 0
      %521 = vperm.xlu0 %520, %v301
      %v522 = vpop.permute.xlu0 %521
      %525 = vset.pattern.permute.xlu0 0
      %526 = vperm.xlu0 %525, %v302
      %v527 = vpop.permute.xlu0 %526
      %530 = vset.pattern.permute.xlu0 0
      %531 = vperm.xlu0 %530, %v303
      %v532 = vpop.permute.xlu0 %531
      %535 = vset.pattern.permute.xlu0 0
      %536 = vperm.xlu0 %535, %v304
      %v537 = vpop.permute.xlu0 %536
      %540 = vset.pattern.permute.xlu0 0
      %541 = vperm.xlu0 %540, %v305
      %v542 = vpop.permute.xlu0 %541
      %545 = vset.pattern.permute.xlu0 0
      %546 = vperm.xlu0 %545, %v306
      %v547 = vpop.permute.xlu0 %546
      %550 = vset.pattern.permute.xlu0 0
      %551 = vperm.xlu0 %550, %v307
      %v552 = vpop.permute.xlu0 %551
      %555 = vset.pattern.permute.xlu0 0
      %556 = vperm.xlu0 %555, %v308
      %v557 = vpop.permute.xlu0 %556
      %560 = vset.pattern.permute.xlu0 0
      %561 = vperm.xlu0 %560, %v309
      %v562 = vpop.permute.xlu0 %561
      %565 = vset.pattern.permute.xlu0 0
      %566 = vperm.xlu0 %565, %v310
      %v567 = vpop.permute.xlu0 %566
      %570 = vset.pattern.permute.xlu0 0
      %571 = vperm.xlu0 %570, %v311
      %v572 = vpop.permute.xlu0 %571
      %575 = vset.pattern.permute.xlu0 0
      %576 = vperm.xlu0 %575, %v312
      %v577 = vpop.permute.xlu0 %576
      %580 = vset.pattern.permute.xlu0 0
      %581 = vperm.xlu0 %580, %v313
      %v582 = vpop.permute.xlu0 %581
      %585 = vset.pattern.permute.xlu0 0
      %586 = vperm.xlu0 %585, %v314
      %v587 = vpop.permute.xlu0 %586
      %590 = vset.pattern.permute.xlu0 0
      %591 = vperm.xlu0 %590, %v315
      %v592 = vpop.permute.xlu0 %591
      %595 = vset.pattern.permute.xlu0 0
      %596 = vperm.xlu0 %595, %v316
      %v597 = vpop.permute.xlu0 %596
      %600 = vset.pattern.permute.xlu0 0
      %601 = vperm.xlu0 %600, %v317
      %v602 = vpop.permute.xlu0 %601
      %605 = vset.pattern.permute.xlu0 0
      %606 = vperm.xlu0 %605, %v318
      %v607 = vpop.permute.xlu0 %606
      %v609 = vmul.f32 %v448, %v452
      %v610 = vmul.f32 %v356, %v457
      %v611 = vmul.f32 %v358, %v462
      %v612 = vmul.f32 %v360, %v467
      %v613 = vmul.f32 %v362, %v472
      %v614 = vmul.f32 %v364, %v477
      %v615 = vmul.f32 %v366, %v482
      %v616 = vmul.f32 %v368, %v487
      %v617 = vmul.f32 %v370, %v492
      %v618 = vmul.f32 %v372, %v497
      %v619 = vmul.f32 %v374, %v502
      %v620 = vmul.f32 %v376, %v507
      %v621 = vmul.f32 %v378, %v512
      %v622 = vmul.f32 %v380, %v517
      %v623 = vmul.f32 %v382, %v522
      %v624 = vmul.f32 %v384, %v527
      %v625 = vmul.f32 %v386, %v532
      %v626 = vmul.f32 %v388, %v537
      %v627 = vmul.f32 %v390, %v542
      %v628 = vmul.f32 %v392, %v547
      %v629 = vmul.f32 %v394, %v552
      %v630 = vmul.f32 %v396, %v557
      %v631 = vmul.f32 %v398, %v562
      %v632 = vmul.f32 %v400, %v567
      %v633 = vmul.f32 %v402, %v572
      %v634 = vmul.f32 %v404, %v577
      %v635 = vmul.f32 %v406, %v582
      %v636 = vmul.f32 %v408, %v587
      %v637 = vmul.f32 %v410, %v592
      %v638 = vmul.f32 %v412, %v597
      %v639 = vmul.f32 %v414, %v602
      %v640 = vmul.f32 %v415, %v607
      %vm641 = vcmask 1046528
      %v642 = vrot.slane %v255, 1
      %v643 = vrot.slane %v256, 1
      %v644 = vsel %vm641, %v642, %v643
      %v645 = vrot.slane %v257, 1
      %v646 = vsel %vm641, %v643, %v645
      %v647 = vrot.slane %v258, 1
      %v648 = vsel %vm641, %v645, %v647
      %v649 = vrot.slane %v259, 1
      %v650 = vsel %vm641, %v647, %v649
      %v651 = vrot.slane %v260, 1
      %v652 = vsel %vm641, %v649, %v651
      %v653 = vrot.slane %v261, 1
      %v654 = vsel %vm641, %v651, %v653
      %v655 = vrot.slane %v262, 1
      %v656 = vsel %vm641, %v653, %v655
      %v657 = vrot.slane %v263, 1
      %v658 = vsel %vm641, %v655, %v657
      %v659 = vrot.slane %v264, 1
      %v660 = vsel %vm641, %v657, %v659
      %v661 = vrot.slane %v265, 1
      %v662 = vsel %vm641, %v659, %v661
      %v663 = vrot.slane %v266, 1
      %v664 = vsel %vm641, %v661, %v663
      %v665 = vrot.slane %v267, 1
      %v666 = vsel %vm641, %v663, %v665
      %v667 = vrot.slane %v268, 1
      %v668 = vsel %vm641, %v665, %v667
      %v669 = vrot.slane %v269, 1
      %v670 = vsel %vm641, %v667, %v669
      %v671 = vrot.slane %v270, 1
      %v672 = vsel %vm641, %v669, %v671
      %v673 = vrot.slane %v271, 1
      %v674 = vsel %vm641, %v671, %v673
      %v675 = vrot.slane %v272, 1
      %v676 = vsel %vm641, %v673, %v675
      %v677 = vrot.slane %v273, 1
      %v678 = vsel %vm641, %v675, %v677
      %v679 = vrot.slane %v274, 1
      %v680 = vsel %vm641, %v677, %v679
      %v681 = vrot.slane %v275, 1
      %v682 = vsel %vm641, %v679, %v681
      %v683 = vrot.slane %v276, 1
      %v684 = vsel %vm641, %v681, %v683
      %v685 = vrot.slane %v277, 1
      %v686 = vsel %vm641, %v683, %v685
      %v687 = vrot.slane %v278, 1
      %v688 = vsel %vm641, %v685, %v687
      %v689 = vrot.slane %v279, 1
      %v690 = vsel %vm641, %v687, %v689
      %v691 = vrot.slane %v280, 1
      %v692 = vsel %vm641, %v689, %v691
      %v693 = vrot.slane %v281, 1
      %v694 = vsel %vm641, %v691, %v693
      %v695 = vrot.slane %v282, 1
      %v696 = vsel %vm641, %v693, %v695
      %v697 = vrot.slane %v283, 1
      %v698 = vsel %vm641, %v695, %v697
      %v699 = vrot.slane %v284, 1
      %v700 = vsel %vm641, %v697, %v699
      %v701 = vrot.slane %v285, 1
      %v702 = vsel %vm641, %v699, %v701
      %v703 = vrot.slane %v286, 1
      %v704 = vsel %vm641, %v701, %v703
      %v738 = vsel %vm641, %v703, %v642
      %739 = vset.pattern.permute.xlu0 1
      %740 = vperm.xlu0 %739, %v287
      %v741 = vpop.permute.xlu0 %740
      %743 = vset.pattern.permute.xlu0 1
      %744 = vperm.xlu0 %743, %v288
      %v745 = vpop.permute.xlu0 %744
      %747 = vset.pattern.permute.xlu0 1
      %748 = vperm.xlu0 %747, %v289
      %v749 = vpop.permute.xlu0 %748
      %751 = vset.pattern.permute.xlu0 1
      %752 = vperm.xlu0 %751, %v290
      %v753 = vpop.permute.xlu0 %752
      %755 = vset.pattern.permute.xlu0 1
      %756 = vperm.xlu0 %755, %v291
      %v757 = vpop.permute.xlu0 %756
      %759 = vset.pattern.permute.xlu0 1
      %760 = vperm.xlu0 %759, %v292
      %v761 = vpop.permute.xlu0 %760
      %763 = vset.pattern.permute.xlu0 1
      %764 = vperm.xlu0 %763, %v293
      %v765 = vpop.permute.xlu0 %764
      %767 = vset.pattern.permute.xlu0 1
      %768 = vperm.xlu0 %767, %v294
      %v769 = vpop.permute.xlu0 %768
      %771 = vset.pattern.permute.xlu0 1
      %772 = vperm.xlu0 %771, %v295
      %v773 = vpop.permute.xlu0 %772
      %775 = vset.pattern.permute.xlu0 1
      %776 = vperm.xlu0 %775, %v296
      %v777 = vpop.permute.xlu0 %776
      %779 = vset.pattern.permute.xlu0 1
      %780 = vperm.xlu0 %779, %v297
      %v781 = vpop.permute.xlu0 %780
      %783 = vset.pattern.permute.xlu0 1
      %784 = vperm.xlu0 %783, %v298
      %v785 = vpop.permute.xlu0 %784
      %787 = vset.pattern.permute.xlu0 1
      %788 = vperm.xlu0 %787, %v299
      %v789 = vpop.permute.xlu0 %788
      %791 = vset.pattern.permute.xlu0 1
      %792 = vperm.xlu0 %791, %v300
      %v793 = vpop.permute.xlu0 %792
      %795 = vset.pattern.permute.xlu0 1
      %796 = vperm.xlu0 %795, %v301
      %v797 = vpop.permute.xlu0 %796
      %799 = vset.pattern.permute.xlu0 1
      %800 = vperm.xlu0 %799, %v302
      %v801 = vpop.permute.xlu0 %800
      %803 = vset.pattern.permute.xlu0 1
      %804 = vperm.xlu0 %803, %v303
      %v805 = vpop.permute.xlu0 %804
      %807 = vset.pattern.permute.xlu0 1
      %808 = vperm.xlu0 %807, %v304
      %v809 = vpop.permute.xlu0 %808
      %811 = vset.pattern.permute.xlu0 1
      %812 = vperm.xlu0 %811, %v305
      %v813 = vpop.permute.xlu0 %812
      %815 = vset.pattern.permute.xlu0 1
      %816 = vperm.xlu0 %815, %v306
      %v817 = vpop.permute.xlu0 %816
      %819 = vset.pattern.permute.xlu0 1
      %820 = vperm.xlu0 %819, %v307
      %v821 = vpop.permute.xlu0 %820
      %823 = vset.pattern.permute.xlu0 1
      %824 = vperm.xlu0 %823, %v308
      %v825 = vpop.permute.xlu0 %824
      %827 = vset.pattern.permute.xlu0 1
      %828 = vperm.xlu0 %827, %v309
      %v829 = vpop.permute.xlu0 %828
      %831 = vset.pattern.permute.xlu0 1
      %832 = vperm.xlu0 %831, %v310
      %v833 = vpop.permute.xlu0 %832
      %835 = vset.pattern.permute.xlu0 1
      %836 = vperm.xlu0 %835, %v311
      %v837 = vpop.permute.xlu0 %836
      %839 = vset.pattern.permute.xlu0 1
      %840 = vperm.xlu0 %839, %v312
      %v841 = vpop.permute.xlu0 %840
      %843 = vset.pattern.permute.xlu0 1
      %844 = vperm.xlu0 %843, %v313
      %v845 = vpop.permute.xlu0 %844
      %847 = vset.pattern.permute.xlu0 1
      %848 = vperm.xlu0 %847, %v314
      %v849 = vpop.permute.xlu0 %848
      %851 = vset.pattern.permute.xlu0 1
      %852 = vperm.xlu0 %851, %v315
      %v853 = vpop.permute.xlu0 %852
      %855 = vset.pattern.permute.xlu0 1
      %856 = vperm.xlu0 %855, %v316
      %v857 = vpop.permute.xlu0 %856
      %859 = vset.pattern.permute.xlu0 1
      %860 = vperm.xlu0 %859, %v317
      %v861 = vpop.permute.xlu0 %860
      %863 = vset.pattern.permute.xlu0 1
      %864 = vperm.xlu0 %863, %v318
      %v865 = vpop.permute.xlu0 %864
      %v867 = vmul.f32 %v644, %v741
      %v868 = vmul.f32 %v646, %v745
      %v869 = vmul.f32 %v648, %v749
      %v870 = vmul.f32 %v650, %v753
      %v871 = vmul.f32 %v652, %v757
      %v872 = vmul.f32 %v654, %v761
      %v873 = vmul.f32 %v656, %v765
      %v874 = vmul.f32 %v658, %v769
      %v875 = vmul.f32 %v660, %v773
      %v876 = vmul.f32 %v662, %v777
      %v877 = vmul.f32 %v664, %v781
      %v878 = vmul.f32 %v666, %v785
      %v879 = vmul.f32 %v668, %v789
      %v880 = vmul.f32 %v670, %v793
      %v881 = vmul.f32 %v672, %v797
      %v882 = vmul.f32 %v674, %v801
      %v883 = vmul.f32 %v676, %v805
      %v884 = vmul.f32 %v678, %v809
      %v885 = vmul.f32 %v680, %v813
      %v886 = vmul.f32 %v682, %v817
      %v887 = vmul.f32 %v684, %v821
      %v888 = vmul.f32 %v686, %v825
      %v889 = vmul.f32 %v688, %v829
      %v890 = vmul.f32 %v690, %v833
      %v891 = vmul.f32 %v692, %v837
      %v892 = vmul.f32 %v694, %v841
      %v893 = vmul.f32 %v696, %v845
      %v894 = vmul.f32 %v698, %v849
      %v895 = vmul.f32 %v700, %v853
      %v896 = vmul.f32 %v702, %v857
      %v897 = vmul.f32 %v704, %v861
      %v898 = vmul.f32 %v738, %v865
      %vm899 = vcmask 64512
      %900 = vst.msk [vmem:[#allocation2] sm:$0xff] %vm899, %v609
      %901 = vst.msk [vmem:[#allocation2 + $0x8] sm:$0xff] %vm899, %v610
      %902 = vst.msk [vmem:[#allocation2 + $0x10] sm:$0xff] %vm899, %v611
      %903 = vst.msk [vmem:[#allocation2 + $0x18] sm:$0xff] %vm899, %v612
      %904 = vst.msk [vmem:[#allocation2 + $0x20] sm:$0xff] %vm899, %v613
      %905 = vst.msk [vmem:[#allocation2 + $0x28] sm:$0xff] %vm899, %v614
      %906 = vst.msk [vmem:[#allocation2 + $0x30] sm:$0xff] %vm899, %v615
      %907 = vst.msk [vmem:[#allocation2 + $0x38] sm:$0xff] %vm899, %v616
      %908 = vst.msk [vmem:[#allocation2 + $0x40] sm:$0xff] %vm899, %v617
      %909 = vst.msk [vmem:[#allocation2 + $0x48] sm:$0xff] %vm899, %v618
      %910 = vst.msk [vmem:[#allocation2 + $0x50] sm:$0xff] %vm899, %v619
      %911 = vst.msk [vmem:[#allocation2 + $0x58] sm:$0xff] %vm899, %v620
      %912 = vst.msk [vmem:[#allocation2 + $0x60] sm:$0xff] %vm899, %v621
      %913 = vst.msk [vmem:[#allocation2 + $0x68] sm:$0xff] %vm899, %v622
      %914 = vst.msk [vmem:[#allocation2 + $0x70] sm:$0xff] %vm899, %v623
      %915 = vst.msk [vmem:[#allocation2 + $0x78] sm:$0xff] %vm899, %v624
      %916 = vst.msk [vmem:[#allocation2 + $0x80] sm:$0xff] %vm899, %v625
      %917 = vst.msk [vmem:[#allocation2 + $0x88] sm:$0xff] %vm899, %v626
      %918 = vst.msk [vmem:[#allocation2 + $0x90] sm:$0xff] %vm899, %v627
      %919 = vst.msk [vmem:[#allocation2 + $0x98] sm:$0xff] %vm899, %v628
      %920 = vst.msk [vmem:[#allocation2 + $0xa0] sm:$0xff] %vm899, %v629
      %921 = vst.msk [vmem:[#allocation2 + $0xa8] sm:$0xff] %vm899, %v630
      %922 = vst.msk [vmem:[#allocation2 + $0xb0] sm:$0xff] %vm899, %v631
      %923 = vst.msk [vmem:[#allocation2 + $0xb8] sm:$0xff] %vm899, %v632
      %924 = vst.msk [vmem:[#allocation2 + $0xc0] sm:$0xff] %vm899, %v633
      %925 = vst.msk [vmem:[#allocation2 + $0xc8] sm:$0xff] %vm899, %v634
      %926 = vst.msk [vmem:[#allocation2 + $0xd0] sm:$0xff] %vm899, %v635
      %927 = vst.msk [vmem:[#allocation2 + $0xd8] sm:$0xff] %vm899, %v636
      %928 = vst.msk [vmem:[#allocation2 + $0xe0] sm:$0xff] %vm899, %v637
      %929 = vst.msk [vmem:[#allocation2 + $0xe8] sm:$0xff] %vm899, %v638
      %930 = vst.msk [vmem:[#allocation2 + $0xf0] sm:$0xff] %vm899, %v639
      %931 = vst.msk [vmem:[#allocation2 + $0xf8] sm:$0xff] %vm899, %v640
      %932 = vrot.lane.b32.xlu0 %v255, 8
      %v933 = vpop.permute.xlu0 %932
      %934 = vrot.lane.b32.xlu0 %v256, 8
      %v935 = vpop.permute.xlu0 %934
      %936 = vrot.lane.b32.xlu0 %v257, 8
      %v937 = vpop.permute.xlu0 %936
      %938 = vrot.lane.b32.xlu0 %v258, 8
      %v939 = vpop.permute.xlu0 %938
      %940 = vrot.lane.b32.xlu0 %v259, 8
      %v941 = vpop.permute.xlu0 %940
      %942 = vrot.lane.b32.xlu0 %v260, 8
      %v943 = vpop.permute.xlu0 %942
      %944 = vrot.lane.b32.xlu0 %v261, 8
      %v945 = vpop.permute.xlu0 %944
      %946 = vrot.lane.b32.xlu0 %v262, 8
      %v947 = vpop.permute.xlu0 %946
      %948 = vrot.lane.b32.xlu0 %v263, 8
      %v949 = vpop.permute.xlu0 %948
      %950 = vrot.lane.b32.xlu0 %v264, 8
      %v951 = vpop.permute.xlu0 %950
      %952 = vrot.lane.b32.xlu0 %v265, 8
      %v953 = vpop.permute.xlu0 %952
      %954 = vrot.lane.b32.xlu0 %v266, 8
      %v955 = vpop.permute.xlu0 %954
      %956 = vrot.lane.b32.xlu0 %v267, 8
      %v957 = vpop.permute.xlu0 %956
      %958 = vrot.lane.b32.xlu0 %v268, 8
      %v959 = vpop.permute.xlu0 %958
      %960 = vrot.lane.b32.xlu0 %v269, 8
      %v961 = vpop.permute.xlu0 %960
      %962 = vrot.lane.b32.xlu0 %v270, 8
      %v963 = vpop.permute.xlu0 %962
      %964 = vrot.lane.b32.xlu0 %v271, 8
      %v965 = vpop.permute.xlu0 %964
      %966 = vrot.lane.b32.xlu0 %v272, 8
      %v967 = vpop.permute.xlu0 %966
      %968 = vrot.lane.b32.xlu0 %v273, 8
      %v969 = vpop.permute.xlu0 %968
      %970 = vrot.lane.b32.xlu0 %v274, 8
      %v971 = vpop.permute.xlu0 %970
      %972 = vrot.lane.b32.xlu0 %v275, 8
      %v973 = vpop.permute.xlu0 %972
      %974 = vrot.lane.b32.xlu0 %v276, 8
      %v975 = vpop.permute.xlu0 %974
      %976 = vrot.lane.b32.xlu0 %v277, 8
      %v977 = vpop.permute.xlu0 %976
      %978 = vrot.lane.b32.xlu0 %v278, 8
      %v979 = vpop.permute.xlu0 %978
      %980 = vrot.lane.b32.xlu0 %v279, 8
      %v981 = vpop.permute.xlu0 %980
      %982 = vrot.lane.b32.xlu0 %v280, 8
      %v983 = vpop.permute.xlu0 %982
      %984 = vrot.lane.b32.xlu0 %v281, 8
      %v985 = vpop.permute.xlu0 %984
      %986 = vrot.lane.b32.xlu0 %v282, 8
      %v987 = vpop.permute.xlu0 %986
      %988 = vrot.lane.b32.xlu0 %v283, 8
      %v989 = vpop.permute.xlu0 %988
      %990 = vrot.lane.b32.xlu0 %v284, 8
      %v991 = vpop.permute.xlu0 %990
      %992 = vrot.lane.b32.xlu0 %v285, 8
      %v993 = vpop.permute.xlu0 %992
      %994 = vrot.lane.b32.xlu0 %v286, 8
      %v995 = vpop.permute.xlu0 %994
      %vm1028 = vcmask 130112
      %1029 = vst.msk [vmem:[#allocation2] sm:$0xff] %vm1028, %v933
      %1030 = vst.msk [vmem:[#allocation2 + $0x8] sm:$0xff] %vm1028, %v935
      %1031 = vst.msk [vmem:[#allocation2 + $0x10] sm:$0xff] %vm1028, %v937
      %1032 = vst.msk [vmem:[#allocation2 + $0x18] sm:$0xff] %vm1028, %v939
      %1033 = vst.msk [vmem:[#allocation2 + $0x20] sm:$0xff] %vm1028, %v941
      %1034 = vst.msk [vmem:[#allocation2 + $0x28] sm:$0xff] %vm1028, %v943
      %1035 = vst.msk [vmem:[#allocation2 + $0x30] sm:$0xff] %vm1028, %v945
      %1036 = vst.msk [vmem:[#allocation2 + $0x38] sm:$0xff] %vm1028, %v947
      %1037 = vst.msk [vmem:[#allocation2 + $0x40] sm:$0xff] %vm1028, %v949
      %1038 = vst.msk [vmem:[#allocation2 + $0x48] sm:$0xff] %vm1028, %v951
      %1039 = vst.msk [vmem:[#allocation2 + $0x50] sm:$0xff] %vm1028, %v953
      %1040 = vst.msk [vmem:[#allocation2 + $0x58] sm:$0xff] %vm1028, %v955
      %1041 = vst.msk [vmem:[#allocation2 + $0x60] sm:$0xff] %vm1028, %v957
      %1042 = vst.msk [vmem:[#allocation2 + $0x68] sm:$0xff] %vm1028, %v959
      %1043 = vst.msk [vmem:[#allocation2 + $0x70] sm:$0xff] %vm1028, %v961
      %1044 = vst.msk [vmem:[#allocation2 + $0x78] sm:$0xff] %vm1028, %v963
      %1045 = vst.msk [vmem:[#allocation2 + $0x80] sm:$0xff] %vm1028, %v965
      %1046 = vst.msk [vmem:[#allocation2 + $0x88] sm:$0xff] %vm1028, %v967
      %1047 = vst.msk [vmem:[#allocation2 + $0x90] sm:$0xff] %vm1028, %v969
      %1048 = vst.msk [vmem:[#allocation2 + $0x98] sm:$0xff] %vm1028, %v971
      %1049 = vst.msk [vmem:[#allocation2 + $0xa0] sm:$0xff] %vm1028, %v973
      %1050 = vst.msk [vmem:[#allocation2 + $0xa8] sm:$0xff] %vm1028, %v975
      %1051 = vst.msk [vmem:[#allocation2 + $0xb0] sm:$0xff] %vm1028, %v977
      %1052 = vst.msk [vmem:[#allocation2 + $0xb8] sm:$0xff] %vm1028, %v979
      %1053 = vst.msk [vmem:[#allocation2 + $0xc0] sm:$0xff] %vm1028, %v981
      %1054 = vst.msk [vmem:[#allocation2 + $0xc8] sm:$0xff] %vm1028, %v983
      %1055 = vst.msk [vmem:[#allocation2 + $0xd0] sm:$0xff] %vm1028, %v985
      %1056 = vst.msk [vmem:[#allocation2 + $0xd8] sm:$0xff] %vm1028, %v987
      %1057 = vst.msk [vmem:[#allocation2 + $0xe0] sm:$0xff] %vm1028, %v989
      %1058 = vst.msk [vmem:[#allocation2 + $0xe8] sm:$0xff] %vm1028, %v991
      %1059 = vst.msk [vmem:[#allocation2 + $0xf0] sm:$0xff] %vm1028, %v993
      %1060 = vst.msk [vmem:[#allocation2 + $0xf8] sm:$0xff] %vm1028, %v995
      %1093 = vrot.lane.b32.xlu0 %v867, 16
      %v1094 = vpop.permute.xlu0 %1093
      %1095 = vrot.lane.b32.xlu0 %v868, 16
      %v1096 = vpop.permute.xlu0 %1095
      %1097 = vrot.lane.b32.xlu0 %v869, 16
      %v1098 = vpop.permute.xlu0 %1097
      %1099 = vrot.lane.b32.xlu0 %v870, 16
      %v1100 = vpop.permute.xlu0 %1099
      %1101 = vrot.lane.b32.xlu0 %v871, 16
      %v1102 = vpop.permute.xlu0 %1101
      %1103 = vrot.lane.b32.xlu0 %v872, 16
      %v1104 = vpop.permute.xlu0 %1103
      %1105 = vrot.lane.b32.xlu0 %v873, 16
      %v1106 = vpop.permute.xlu0 %1105
      %1107 = vrot.lane.b32.xlu0 %v874, 16
      %v1108 = vpop.permute.xlu0 %1107
      %1109 = vrot.lane.b32.xlu0 %v875, 16
      %v1110 = vpop.permute.xlu0 %1109
      %1111 = vrot.lane.b32.xlu0 %v876, 16
      %v1112 = vpop.permute.xlu0 %1111
      %1113 = vrot.lane.b32.xlu0 %v877, 16
      %v1114 = vpop.permute.xlu0 %1113
      %1115 = vrot.lane.b32.xlu0 %v878, 16
      %v1116 = vpop.permute.xlu0 %1115
      %1117 = vrot.lane.b32.xlu0 %v879, 16
      %v1118 = vpop.permute.xlu0 %1117
      %1119 = vrot.lane.b32.xlu0 %v880, 16
      %v1120 = vpop.permute.xlu0 %1119
      %1121 = vrot.lane.b32.xlu0 %v881, 16
      %v1122 = vpop.permute.xlu0 %1121
      %1123 = vrot.lane.b32.xlu0 %v882, 16
      %v1124 = vpop.permute.xlu0 %1123
      %1125 = vrot.lane.b32.xlu0 %v883, 16
      %v1126 = vpop.permute.xlu0 %1125
      %1127 = vrot.lane.b32.xlu0 %v884, 16
      %v1128 = vpop.permute.xlu0 %1127
      %1129 = vrot.lane.b32.xlu0 %v885, 16
      %v1130 = vpop.permute.xlu0 %1129
      %1131 = vrot.lane.b32.xlu0 %v886, 16
      %v1132 = vpop.permute.xlu0 %1131
      %1133 = vrot.lane.b32.xlu0 %v887, 16
      %v1134 = vpop.permute.xlu0 %1133
      %1135 = vrot.lane.b32.xlu0 %v888, 16
      %v1136 = vpop.permute.xlu0 %1135
      %1137 = vrot.lane.b32.xlu0 %v889, 16
      %v1138 = vpop.permute.xlu0 %1137
      %1139 = vrot.lane.b32.xlu0 %v890, 16
      %v1140 = vpop.permute.xlu0 %1139
      %1141 = vrot.lane.b32.xlu0 %v891, 16
      %v1142 = vpop.permute.xlu0 %1141
      %1143 = vrot.lane.b32.xlu0 %v892, 16
      %v1144 = vpop.permute.xlu0 %1143
      %1145 = vrot.lane.b32.xlu0 %v893, 16
      %v1146 = vpop.permute.xlu0 %1145
      %1147 = vrot.lane.b32.xlu0 %v894, 16
      %v1148 = vpop.permute.xlu0 %1147
      %1149 = vrot.lane.b32.xlu0 %v895, 16
      %v1150 = vpop.permute.xlu0 %1149
      %1151 = vrot.lane.b32.xlu0 %v896, 16
      %v1152 = vpop.permute.xlu0 %1151
      %1153 = vrot.lane.b32.xlu0 %v897, 16
      %v1154 = vpop.permute.xlu0 %1153
      %1155 = vrot.lane.b32.xlu0 %v898, 16
      %v1156 = vpop.permute.xlu0 %1155
      %vm1189 = vcmask 195712
      %1190 = vst.msk [vmem:[#allocation2] sm:$0xff] %vm1189, %v1094
      %1191 = vst.msk [vmem:[#allocation2 + $0x8] sm:$0xff] %vm1189, %v1096
      %1192 = vst.msk [vmem:[#allocation2 + $0x10] sm:$0xff] %vm1189, %v1098
      %1193 = vst.msk [vmem:[#allocation2 + $0x18] sm:$0xff] %vm1189, %v1100
      %1194 = vst.msk [vmem:[#allocation2 + $0x20] sm:$0xff] %vm1189, %v1102
      %1195 = vst.msk [vmem:[#allocation2 + $0x28] sm:$0xff] %vm1189, %v1104
      %1196 = vst.msk [vmem:[#allocation2 + $0x30] sm:$0xff] %vm1189, %v1106
      %1197 = vst.msk [vmem:[#allocation2 + $0x38] sm:$0xff] %vm1189, %v1108
      %1198 = vst.msk [vmem:[#allocation2 + $0x40] sm:$0xff] %vm1189, %v1110
      %1199 = vst.msk [vmem:[#allocation2 + $0x48] sm:$0xff] %vm1189, %v1112
      %1200 = vst.msk [vmem:[#allocation2 + $0x50] sm:$0xff] %vm1189, %v1114
      %1201 = vst.msk [vmem:[#allocation2 + $0x58] sm:$0xff] %vm1189, %v1116
      %1202 = vst.msk [vmem:[#allocation2 + $0x60] sm:$0xff] %vm1189, %v1118
      %1203 = vst.msk [vmem:[#allocation2 + $0x68] sm:$0xff] %vm1189, %v1120
      %1204 = vst.msk [vmem:[#allocation2 + $0x70] sm:$0xff] %vm1189, %v1122
      %1205 = vst.msk [vmem:[#allocation2 + $0x78] sm:$0xff] %vm1189, %v1124
      %1206 = vst.msk [vmem:[#allocation2 + $0x80] sm:$0xff] %vm1189, %v1126
      %1207 = vst.msk [vmem:[#allocation2 + $0x88] sm:$0xff] %vm1189, %v1128
      %1208 = vst.msk [vmem:[#allocation2 + $0x90] sm:$0xff] %vm1189, %v1130
      %1209 = vst.msk [vmem:[#allocation2 + $0x98] sm:$0xff] %vm1189, %v1132
      %1210 = vst.msk [vmem:[#allocation2 + $0xa0] sm:$0xff] %vm1189, %v1134
      %1211 = vst.msk [vmem:[#allocation2 + $0xa8] sm:$0xff] %vm1189, %v1136
      %1212 = vst.msk [vmem:[#allocation2 + $0xb0] sm:$0xff] %vm1189, %v1138
      %1213 = vst.msk [vmem:[#allocation2 + $0xb8] sm:$0xff] %vm1189, %v1140
      %1214 = vst.msk [vmem:[#allocation2 + $0xc0] sm:$0xff] %vm1189, %v1142
      %1215 = vst.msk [vmem:[#allocation2 + $0xc8] sm:$0xff] %vm1189, %v1144
      %1216 = vst.msk [vmem:[#allocation2 + $0xd0] sm:$0xff] %vm1189, %v1146
      %1217 = vst.msk [vmem:[#allocation2 + $0xd8] sm:$0xff] %vm1189, %v1148
      %1218 = vst.msk [vmem:[#allocation2 + $0xe0] sm:$0xff] %vm1189, %v1150
      %1219 = vst.msk [vmem:[#allocation2 + $0xe8] sm:$0xff] %vm1189, %v1152
      %1220 = vst.msk [vmem:[#allocation2 + $0xf0] sm:$0xff] %vm1189, %v1154
      %1221 = vst.msk [vmem:[#allocation2 + $0xf8] sm:$0xff] %vm1189, %v1156
      %v1222 = vld [vmem:[#allocation2] sm:$0xff]
      %v1223 = vld [vmem:[#allocation2 + $0x8] sm:$0xff]
      %v1224 = vld [vmem:[#allocation2 + $0x10] sm:$0xff]
      %v1225 = vld [vmem:[#allocation2 + $0x18] sm:$0xff]
      %v1226 = vld [vmem:[#allocation2 + $0x20] sm:$0xff]
      %v1227 = vld [vmem:[#allocation2 + $0x28] sm:$0xff]
      %v1228 = vld [vmem:[#allocation2 + $0x30] sm:$0xff]
      %v1229 = vld [vmem:[#allocation2 + $0x38] sm:$0xff]
      %v1230 = vld [vmem:[#allocation2 + $0x40] sm:$0xff]
      %v1231 = vld [vmem:[#allocation2 + $0x48] sm:$0xff]
      %v1232 = vld [vmem:[#allocation2 + $0x50] sm:$0xff]
      %v1233 = vld [vmem:[#allocation2 + $0x58] sm:$0xff]
      %v1234 = vld [vmem:[#allocation2 + $0x60] sm:$0xff]
      %v1235 = vld [vmem:[#allocation2 + $0x68] sm:$0xff]
      %v1236 = vld [vmem:[#allocation2 + $0x70] sm:$0xff]
      %v1237 = vld [vmem:[#allocation2 + $0x78] sm:$0xff]
      %v1238 = vld [vmem:[#allocation2 + $0x80] sm:$0xff]
      %v1239 = vld [vmem:[#allocation2 + $0x88] sm:$0xff]
      %v1240 = vld [vmem:[#allocation2 + $0x90] sm:$0xff]
      %v1241 = vld [vmem:[#allocation2 + $0x98] sm:$0xff]
      %v1242 = vld [vmem:[#allocation2 + $0xa0] sm:$0xff]
      %v1243 = vld [vmem:[#allocation2 + $0xa8] sm:$0xff]
      %v1244 = vld [vmem:[#allocation2 + $0xb0] sm:$0xff]
      %v1245 = vld [vmem:[#allocation2 + $0xb8] sm:$0xff]
      %v1246 = vld [vmem:[#allocation2 + $0xc0] sm:$0xff]
      %v1247 = vld [vmem:[#allocation2 + $0xc8] sm:$0xff]
      %v1248 = vld [vmem:[#allocation2 + $0xd0] sm:$0xff]
      %v1249 = vld [vmem:[#allocation2 + $0xd8] sm:$0xff]
      %v1250 = vld [vmem:[#allocation2 + $0xe0] sm:$0xff]
      %v1251 = vld [vmem:[#allocation2 + $0xe8] sm:$0xff]
      %v1252 = vld [vmem:[#allocation2 + $0xf0] sm:$0xff]
      %v1253 = vld [vmem:[#allocation2 + $0xf8] sm:$0xff]
      %s1254 = scalar_lea.vmem %s2, 24
      %v1255 = vld [vmem:[%s1254] sm:$0xff]
      %v1256 = vld [vmem:[%s1254 + $0x8] sm:$0xff]
      %v1257 = vld [vmem:[%s1254 + $0x10] sm:$0xff]
      %1258 = vset.pattern.permute.xlu0 2
      %1259 = vperm.xlu0 %1258, %v287
      %v1260 = vpop.permute.xlu0 %1259
      %1262 = vset.pattern.permute.xlu0 2
      %1263 = vperm.xlu0 %1262, %v288
      %v1264 = vpop.permute.xlu0 %1263
      %1266 = vset.pattern.permute.xlu0 2
      %1267 = vperm.xlu0 %1266, %v289
      %v1268 = vpop.permute.xlu0 %1267
      %1270 = vset.pattern.permute.xlu0 2
      %1271 = vperm.xlu0 %1270, %v290
      %v1272 = vpop.permute.xlu0 %1271
      %1274 = vset.pattern.permute.xlu0 2
      %1275 = vperm.xlu0 %1274, %v291
      %v1276 = vpop.permute.xlu0 %1275
      %1278 = vset.pattern.permute.xlu0 2
      %1279 = vperm.xlu0 %1278, %v292
      %v1280 = vpop.permute.xlu0 %1279
      %1282 = vset.pattern.permute.xlu0 2
      %1283 = vperm.xlu0 %1282, %v293
      %v1284 = vpop.permute.xlu0 %1283
      %1286 = vset.pattern.permute.xlu0 2
      %1287 = vperm.xlu0 %1286, %v294
      %v1288 = vpop.permute.xlu0 %1287
      %1290 = vset.pattern.permute.xlu0 2
      %1291 = vperm.xlu0 %1290, %v295
      %v1292 = vpop.permute.xlu0 %1291
      %1294 = vset.pattern.permute.xlu0 2
      %1295 = vperm.xlu0 %1294, %v296
      %v1296 = vpop.permute.xlu0 %1295
      %1298 = vset.pattern.permute.xlu0 2
      %1299 = vperm.xlu0 %1298, %v297
      %v1300 = vpop.permute.xlu0 %1299
      %1302 = vset.pattern.permute.xlu0 2
      %1303 = vperm.xlu0 %1302, %v298
      %v1304 = vpop.permute.xlu0 %1303
      %1306 = vset.pattern.permute.xlu0 2
      %1307 = vperm.xlu0 %1306, %v299
      %v1308 = vpop.permute.xlu0 %1307
      %1310 = vset.pattern.permute.xlu0 2
      %1311 = vperm.xlu0 %1310, %v300
      %v1312 = vpop.permute.xlu0 %1311
      %1314 = vset.pattern.permute.xlu0 2
      %1315 = vperm.xlu0 %1314, %v301
      %v1316 = vpop.permute.xlu0 %1315
      %1318 = vset.pattern.permute.xlu0 2
      %1319 = vperm.xlu0 %1318, %v302
      %v1320 = vpop.permute.xlu0 %1319
      %1322 = vset.pattern.permute.xlu0 2
      %1323 = vperm.xlu0 %1322, %v303
      %v1324 = vpop.permute.xlu0 %1323
      %1326 = vset.pattern.permute.xlu0 2
      %1327 = vperm.xlu0 %1326, %v304
      %v1328 = vpop.permute.xlu0 %1327
      %1330 = vset.pattern.permute.xlu0 2
      %1331 = vperm.xlu0 %1330, %v305
      %v1332 = vpop.permute.xlu0 %1331
      %1334 = vset.pattern.permute.xlu0 2
      %1335 = vperm.xlu0 %1334, %v306
      %v1336 = vpop.permute.xlu0 %1335
      %1338 = vset.pattern.permute.xlu0 2
      %1339 = vperm.xlu0 %1338, %v307
      %v1340 = vpop.permute.xlu0 %1339
      %1342 = vset.pattern.permute.xlu0 2
      %1343 = vperm.xlu0 %1342, %v308
      %v1344 = vpop.permute.xlu0 %1343
      %1346 = vset.pattern.permute.xlu0 2
      %1347 = vperm.xlu0 %1346, %v309
      %v1348 = vpop.permute.xlu0 %1347
      %1350 = vset.pattern.permute.xlu0 2
      %1351 = vperm.xlu0 %1350, %v310
      %v1352 = vpop.permute.xlu0 %1351
      %1354 = vset.pattern.permute.xlu0 2
      %1355 = vperm.xlu0 %1354, %v311
      %v1356 = vpop.permute.xlu0 %1355
      %1358 = vset.pattern.permute.xlu0 2
      %1359 = vperm.xlu0 %1358, %v312
      %v1360 = vpop.permute.xlu0 %1359
      %1362 = vset.pattern.permute.xlu0 2
      %1363 = vperm.xlu0 %1362, %v313
      %v1364 = vpop.permute.xlu0 %1363
      %1366 = vset.pattern.permute.xlu0 2
      %1367 = vperm.xlu0 %1366, %v314
      %v1368 = vpop.permute.xlu0 %1367
      %1370 = vset.pattern.permute.xlu0 2
      %1371 = vperm.xlu0 %1370, %v315
      %v1372 = vpop.permute.xlu0 %1371
      %1374 = vset.pattern.permute.xlu0 2
      %1375 = vperm.xlu0 %1374, %v316
      %v1376 = vpop.permute.xlu0 %1375
      %1378 = vset.pattern.permute.xlu0 2
      %1379 = vperm.xlu0 %1378, %v317
      %v1380 = vpop.permute.xlu0 %1379
      %1382 = vset.pattern.permute.xlu0 2
      %1383 = vperm.xlu0 %1382, %v318
      %v1384 = vpop.permute.xlu0 %1383
      %v1386 = vmul.f32 %v1252, %v1260
      %v1387 = vmul.f32 %v1253, %v1264
      %v1388 = vmul.f32 %v1222, %v1268
      %v1389 = vmul.f32 %v1223, %v1272
      %v1390 = vmul.f32 %v1224, %v1276
      %v1391 = vmul.f32 %v1225, %v1280
      %v1392 = vmul.f32 %v1226, %v1284
      %v1393 = vmul.f32 %v1227, %v1288
      %v1394 = vmul.f32 %v1228, %v1292
      %v1395 = vmul.f32 %v1229, %v1296
      %v1396 = vmul.f32 %v1230, %v1300
      %v1397 = vmul.f32 %v1231, %v1304
      %v1398 = vmul.f32 %v1232, %v1308
      %v1399 = vmul.f32 %v1233, %v1312
      %v1400 = vmul.f32 %v1234, %v1316
      %v1401 = vmul.f32 %v1235, %v1320
      %v1402 = vmul.f32 %v1236, %v1324
      %v1403 = vmul.f32 %v1237, %v1328
      %v1404 = vmul.f32 %v1238, %v1332
      %v1405 = vmul.f32 %v1239, %v1336
      %v1406 = vmul.f32 %v1240, %v1340
      %v1407 = vmul.f32 %v1241, %v1344
      %v1408 = vmul.f32 %v1242, %v1348
      %v1409 = vmul.f32 %v1243, %v1352
      %v1410 = vmul.f32 %v1244, %v1356
      %v1411 = vmul.f32 %v1245, %v1360
      %v1412 = vmul.f32 %v1246, %v1364
      %v1413 = vmul.f32 %v1247, %v1368
      %v1414 = vmul.f32 %v1248, %v1372
      %v1415 = vmul.f32 %v1249, %v1376
      %v1416 = vmul.f32 %v1250, %v1380
      %v1417 = vmul.f32 %v1251, %v1384
      %v1418 = vld [vmem:[%s2] sm:$0xff]
      %v1419 = vld [vmem:[%s2 + $0x8] sm:$0xff]
      %v1420 = vld [vmem:[%s2 + $0x10] sm:$0xff]
      %vm1421 = vcmask 195584
      %v1423 = vsel %vm1421, %v1386, 0
      %v1426 = vsel %vm1421, %v1387, 0
      %v1429 = vsel %vm1421, %v1388, 0
      %v1432 = vsel %vm1421, %v1389, 0
      %v1435 = vsel %vm1421, %v1390, 0
      %v1438 = vsel %vm1421, %v1391, 0
      %v1441 = vsel %vm1421, %v1392, 0
      %v1444 = vsel %vm1421, %v1393, 0
      %v1447 = vsel %vm1421, %v1394, 0
      %v1450 = vsel %vm1421, %v1395, 0
      %v1453 = vsel %vm1421, %v1396, 0
      %v1456 = vsel %vm1421, %v1397, 0
      %v1459 = vsel %vm1421, %v1398, 0
      %v1462 = vsel %vm1421, %v1399, 0
      %v1465 = vsel %vm1421, %v1400, 0
      %v1468 = vsel %vm1421, %v1401, 0
      %v1471 = vsel %vm1421, %v1402, 0
      %v1474 = vsel %vm1421, %v1403, 0
      %v1477 = vsel %vm1421, %v1404, 0
      %v1480 = vsel %vm1421, %v1405, 0
      %v1483 = vsel %vm1421, %v1406, 0
      %v1486 = vsel %vm1421, %v1407, 0
      %v1489 = vsel %vm1421, %v1408, 0
      %v1492 = vsel %vm1421, %v1409, 0
      %v1495 = vsel %vm1421, %v1410, 0
      %v1498 = vsel %vm1421, %v1411, 0
      %v1501 = vsel %vm1421, %v1412, 0
      %v1504 = vsel %vm1421, %v1413, 0
      %v1507 = vsel %vm1421, %v1414, 0
      %v1510 = vsel %vm1421, %v1415, 0
      %v1513 = vsel %vm1421, %v1416, 0
      %v1516 = vsel %vm1421, %v1417, 0
      %1518 = vmatpush.msra.mxu0 0.0
      %1519 = vmatpush.msra.mxu0 0.0
      %1520 = vmatpush.msra.mxu0 0.0
      %1521 = vmatpush.msra.mxu0 0.0
      %1522 = vmatpush.msra.mxu0 0.0
      %1523 = vmatpush.msra.mxu0 0.0
      %1524 = vmatpush.msra.mxu0 0.0
      %1525 = vmatpush.msra.mxu0 0.0
      %1526 = vmatpush.msra.mxu0 0.0
      %1527 = vmatpush.msra.mxu0 0.0
      %1528 = vmatpush.msra.mxu0 0.0
      %1529 = vmatpush.msra.mxu0 0.0
      %1530 = vmatpush.msra.mxu0 0.0
      %1531 = vmatpush.msra.mxu0 %v1420
      %1532 = vmatpush.msra.mxu0 %v1419
      %1533 = vmatpush.msra.mxu0 %v1418
      %1534 = vmatmul.f32.gmra.mxu0 %v1423
      %v1535 = vpop.f32.mrf.mxu0
      %v1536 = vadd.f32 0.0, %v1535
      %1537 = vmatmul.f32.gmra.mxu0 %v1426
      %v1538 = vpop.f32.mrf.mxu0
      %v1539 = vadd.f32 0.0, %v1538
      %1540 = vmatmul.f32.gmra.mxu0 %v1429
      %v1541 = vpop.f32.mrf.mxu0
      %v1542 = vadd.f32 0.0, %v1541
      %1543 = vmatmul.f32.gmra.mxu0 %v1432
      %v1544 = vpop.f32.mrf.mxu0
      %v1545 = vadd.f32 0.0, %v1544
      %1546 = vmatmul.f32.gmra.mxu0 %v1435
      %v1547 = vpop.f32.mrf.mxu0
      %v1548 = vadd.f32 0.0, %v1547
      %1549 = vmatmul.f32.gmra.mxu0 %v1438
      %v1550 = vpop.f32.mrf.mxu0
      %v1551 = vadd.f32 0.0, %v1550
      %1552 = vmatmul.f32.gmra.mxu0 %v1441
      %v1553 = vpop.f32.mrf.mxu0
      %v1554 = vadd.f32 0.0, %v1553
      %1555 = vmatmul.f32.gmra.mxu0 %v1444
      %v1556 = vpop.f32.mrf.mxu0
      %v1557 = vadd.f32 0.0, %v1556
      %1558 = vmatmul.f32.gmra.mxu0 %v1447
      %v1559 = vpop.f32.mrf.mxu0
      %v1560 = vadd.f32 0.0, %v1559
      %1561 = vmatmul.f32.gmra.mxu0 %v1450
      %v1562 = vpop.f32.mrf.mxu0
      %v1563 = vadd.f32 0.0, %v1562
      %1564 = vmatmul.f32.gmra.mxu0 %v1453
      %v1565 = vpop.f32.mrf.mxu0
      %v1566 = vadd.f32 0.0, %v1565
      %1567 = vmatmul.f32.gmra.mxu0 %v1456
      %v1568 = vpop.f32.mrf.mxu0
      %v1569 = vadd.f32 0.0, %v1568
      %1570 = vmatmul.f32.gmra.mxu0 %v1459
      %v1571 = vpop.f32.mrf.mxu0
      %v1572 = vadd.f32 0.0, %v1571
      %1573 = vmatmul.f32.gmra.mxu0 %v1462
      %v1574 = vpop.f32.mrf.mxu0
      %v1575 = vadd.f32 0.0, %v1574
      %1576 = vmatmul.f32.gmra.mxu0 %v1465
      %v1577 = vpop.f32.mrf.mxu0
      %v1578 = vadd.f32 0.0, %v1577
      %1579 = vmatmul.f32.gmra.mxu0 %v1468
      %v1580 = vpop.f32.mrf.mxu0
      %v1581 = vadd.f32 0.0, %v1580
      %1582 = vmatmul.f32.gmra.mxu0 %v1471
      %v1583 = vpop.f32.mrf.mxu0
      %v1584 = vadd.f32 0.0, %v1583
      %1585 = vmatmul.f32.gmra.mxu0 %v1474
      %v1586 = vpop.f32.mrf.mxu0
      %v1587 = vadd.f32 0.0, %v1586
      %1588 = vmatmul.f32.gmra.mxu0 %v1477
      %v1589 = vpop.f32.mrf.mxu0
      %v1590 = vadd.f32 0.0, %v1589
      %1591 = vmatmul.f32.gmra.mxu0 %v1480
      %v1592 = vpop.f32.mrf.mxu0
      %v1593 = vadd.f32 0.0, %v1592
      %1594 = vmatmul.f32.gmra.mxu0 %v1483
      %v1595 = vpop.f32.mrf.mxu0
      %v1596 = vadd.f32 0.0, %v1595
      %1597 = vmatmul.f32.gmra.mxu0 %v1486
      %v1598 = vpop.f32.mrf.mxu0
      %v1599 = vadd.f32 0.0, %v1598
      %1600 = vmatmul.f32.gmra.mxu0 %v1489
      %v1601 = vpop.f32.mrf.mxu0
      %v1602 = vadd.f32 0.0, %v1601
      %1603 = vmatmul.f32.gmra.mxu0 %v1492
      %v1604 = vpop.f32.mrf.mxu0
      %v1605 = vadd.f32 0.0, %v1604
      %1606 = vmatmul.f32.gmra.mxu0 %v1495
      %v1607 = vpop.f32.mrf.mxu0
      %v1608 = vadd.f32 0.0, %v1607
      %1609 = vmatmul.f32.gmra.mxu0 %v1498
      %v1610 = vpop.f32.mrf.mxu0
      %v1611 = vadd.f32 0.0, %v1610
      %1612 = vmatmul.f32.gmra.mxu0 %v1501
      %v1613 = vpop.f32.mrf.mxu0
      %v1614 = vadd.f32 0.0, %v1613
      %1615 = vmatmul.f32.gmra.mxu0 %v1504
      %v1616 = vpop.f32.mrf.mxu0
      %v1617 = vadd.f32 0.0, %v1616
      %1618 = vmatmul.f32.gmra.mxu0 %v1507
      %v1619 = vpop.f32.mrf.mxu0
      %v1620 = vadd.f32 0.0, %v1619
      %1621 = vmatmul.f32.gmra.mxu0 %v1510
      %v1622 = vpop.f32.mrf.mxu0
      %v1623 = vadd.f32 0.0, %v1622
      %1624 = vmatmul.f32.gmra.mxu0 %v1513
      %v1625 = vpop.f32.mrf.mxu0
      %v1626 = vadd.f32 0.0, %v1625
      %1627 = vmatmul.f32.gmra.mxu0 %v1516
      %v1628 = vpop.f32.mrf.mxu0
      %v1629 = vadd.f32 0.0, %v1628
      %1630 = vdwg.mxu0
      %v1632 = vsel %vm1421, %v1222, 0
      %v1635 = vsel %vm1421, %v1223, 0
      %v1638 = vsel %vm1421, %v1224, 0
      %v1641 = vsel %vm1421, %v1225, 0
      %v1644 = vsel %vm1421, %v1226, 0
      %v1647 = vsel %vm1421, %v1227, 0
      %v1650 = vsel %vm1421, %v1228, 0
      %v1653 = vsel %vm1421, %v1229, 0
      %v1656 = vsel %vm1421, %v1230, 0
      %v1659 = vsel %vm1421, %v1231, 0
      %v1662 = vsel %vm1421, %v1232, 0
      %v1665 = vsel %vm1421, %v1233, 0
      %v1668 = vsel %vm1421, %v1234, 0
      %v1671 = vsel %vm1421, %v1235, 0
      %v1674 = vsel %vm1421, %v1236, 0
      %v1677 = vsel %vm1421, %v1237, 0
      %v1680 = vsel %vm1421, %v1238, 0
      %v1683 = vsel %vm1421, %v1239, 0
      %v1686 = vsel %vm1421, %v1240, 0
      %v1689 = vsel %vm1421, %v1241, 0
      %v1692 = vsel %vm1421, %v1242, 0
      %v1695 = vsel %vm1421, %v1243, 0
      %v1698 = vsel %vm1421, %v1244, 0
      %v1701 = vsel %vm1421, %v1245, 0
      %v1704 = vsel %vm1421, %v1246, 0
      %v1707 = vsel %vm1421, %v1247, 0
      %v1710 = vsel %vm1421, %v1248, 0
      %v1713 = vsel %vm1421, %v1249, 0
      %v1716 = vsel %vm1421, %v1250, 0
      %v1719 = vsel %vm1421, %v1251, 0
      %v1722 = vsel %vm1421, %v1252, 0
      %v1725 = vsel %vm1421, %v1253, 0
      %1727 = vmatpush.msra.mxu0 0.0
      %1728 = vmatpush.msra.mxu0 0.0
      %1729 = vmatpush.msra.mxu0 0.0
      %1730 = vmatpush.msra.mxu0 0.0
      %1731 = vmatpush.msra.mxu0 0.0
      %1732 = vmatpush.msra.mxu0 0.0
      %1733 = vmatpush.msra.mxu0 0.0
      %1734 = vmatpush.msra.mxu0 0.0
      %1735 = vmatpush.msra.mxu0 0.0
      %1736 = vmatpush.msra.mxu0 0.0
      %1737 = vmatpush.msra.mxu0 0.0
      %1738 = vmatpush.msra.mxu0 0.0
      %1739 = vmatpush.msra.mxu0 0.0
      %1740 = vmatpush.msra.mxu0 %v1257
      %1741 = vmatpush.msra.mxu0 %v1256
      %1742 = vmatpush.msra.mxu0 %v1255
      %1743 = vmatmul.f32.gmra.mxu0 %v1632
      %v1744 = vpop.f32.mrf.mxu0
      %v1745 = vadd.f32 %v1536, %v1744
      %1746 = vmatmul.f32.gmra.mxu0 %v1635
      %v1747 = vpop.f32.mrf.mxu0
      %v1748 = vadd.f32 %v1539, %v1747
      %1749 = vmatmul.f32.gmra.mxu0 %v1638
      %v1750 = vpop.f32.mrf.mxu0
      %v1751 = vadd.f32 %v1542, %v1750
      %1752 = vmatmul.f32.gmra.mxu0 %v1641
      %v1753 = vpop.f32.mrf.mxu0
      %v1754 = vadd.f32 %v1545, %v1753
      %1755 = vmatmul.f32.gmra.mxu0 %v1644
      %v1756 = vpop.f32.mrf.mxu0
      %v1757 = vadd.f32 %v1548, %v1756
      %1758 = vmatmul.f32.gmra.mxu0 %v1647
      %v1759 = vpop.f32.mrf.mxu0
      %v1760 = vadd.f32 %v1551, %v1759
      %1761 = vmatmul.f32.gmra.mxu0 %v1650
      %v1762 = vpop.f32.mrf.mxu0
      %v1763 = vadd.f32 %v1554, %v1762
      %1764 = vmatmul.f32.gmra.mxu0 %v1653
      %v1765 = vpop.f32.mrf.mxu0
      %v1766 = vadd.f32 %v1557, %v1765
      %1767 = vmatmul.f32.gmra.mxu0 %v1656
      %v1768 = vpop.f32.mrf.mxu0
      %v1769 = vadd.f32 %v1560, %v1768
      %1770 = vmatmul.f32.gmra.mxu0 %v1659
      %v1771 = vpop.f32.mrf.mxu0
      %v1772 = vadd.f32 %v1563, %v1771
      %1773 = vmatmul.f32.gmra.mxu0 %v1662
      %v1774 = vpop.f32.mrf.mxu0
      %v1775 = vadd.f32 %v1566, %v1774
      %1776 = vmatmul.f32.gmra.mxu0 %v1665
      %v1777 = vpop.f32.mrf.mxu0
      %v1778 = vadd.f32 %v1569, %v1777
      %1779 = vmatmul.f32.gmra.mxu0 %v1668
      %v1780 = vpop.f32.mrf.mxu0
      %v1781 = vadd.f32 %v1572, %v1780
      %1782 = vmatmul.f32.gmra.mxu0 %v1671
      %v1783 = vpop.f32.mrf.mxu0
      %v1784 = vadd.f32 %v1575, %v1783
      %1785 = vmatmul.f32.gmra.mxu0 %v1674
      %v1786 = vpop.f32.mrf.mxu0
      %v1787 = vadd.f32 %v1578, %v1786
      %1788 = vmatmul.f32.gmra.mxu0 %v1677
      %v1789 = vpop.f32.mrf.mxu0
      %v1790 = vadd.f32 %v1581, %v1789
      %1791 = vmatmul.f32.gmra.mxu0 %v1680
      %v1792 = vpop.f32.mrf.mxu0
      %v1793 = vadd.f32 %v1584, %v1792
      %1794 = vmatmul.f32.gmra.mxu0 %v1683
      %v1795 = vpop.f32.mrf.mxu0
      %v1796 = vadd.f32 %v1587, %v1795
      %1797 = vmatmul.f32.gmra.mxu0 %v1686
      %v1798 = vpop.f32.mrf.mxu0
      %v1799 = vadd.f32 %v1590, %v1798
      %1800 = vmatmul.f32.gmra.mxu0 %v1689
      %v1801 = vpop.f32.mrf.mxu0
      %v1802 = vadd.f32 %v1593, %v1801
      %1803 = vmatmul.f32.gmra.mxu0 %v1692
      %v1804 = vpop.f32.mrf.mxu0
      %v1805 = vadd.f32 %v1596, %v1804
      %1806 = vmatmul.f32.gmra.mxu0 %v1695
      %v1807 = vpop.f32.mrf.mxu0
      %v1808 = vadd.f32 %v1599, %v1807
      %1809 = vmatmul.f32.gmra.mxu0 %v1698
      %v1810 = vpop.f32.mrf.mxu0
      %v1811 = vadd.f32 %v1602, %v1810
      %1812 = vmatmul.f32.gmra.mxu0 %v1701
      %v1813 = vpop.f32.mrf.mxu0
      %v1814 = vadd.f32 %v1605, %v1813
      %1815 = vmatmul.f32.gmra.mxu0 %v1704
      %v1816 = vpop.f32.mrf.mxu0
      %v1817 = vadd.f32 %v1608, %v1816
      %1818 = vmatmul.f32.gmra.mxu0 %v1707
      %v1819 = vpop.f32.mrf.mxu0
      %v1820 = vadd.f32 %v1611, %v1819
      %1821 = vmatmul.f32.gmra.mxu0 %v1710
      %v1822 = vpop.f32.mrf.mxu0
      %v1823 = vadd.f32 %v1614, %v1822
      %1824 = vmatmul.f32.gmra.mxu0 %v1713
      %v1825 = vpop.f32.mrf.mxu0
      %v1826 = vadd.f32 %v1617, %v1825
      %1827 = vmatmul.f32.gmra.mxu0 %v1716
      %v1828 = vpop.f32.mrf.mxu0
      %v1829 = vadd.f32 %v1620, %v1828
      %1830 = vmatmul.f32.gmra.mxu0 %v1719
      %v1831 = vpop.f32.mrf.mxu0
      %v1832 = vadd.f32 %v1623, %v1831
      %1833 = vmatmul.f32.gmra.mxu0 %v1722
      %v1834 = vpop.f32.mrf.mxu0
      %v1835 = vadd.f32 %v1626, %v1834
      %1836 = vmatmul.f32.gmra.mxu0 %v1725
      %v1837 = vpop.f32.mrf.mxu0
      %v1838 = vadd.f32 %v1629, %v1837
      %1839 = vdwg.mxu0
      %1840 = vset.pattern.permute.xlu0 3
      %1841 = vperm.xlu0 %1840, %v287
      %v1842 = vpop.permute.xlu0 %1841
      %1844 = vset.pattern.permute.xlu0 3
      %1845 = vperm.xlu0 %1844, %v288
      %v1846 = vpop.permute.xlu0 %1845
      %1848 = vset.pattern.permute.xlu0 3
      %1849 = vperm.xlu0 %1848, %v289
      %v1850 = vpop.permute.xlu0 %1849
      %1852 = vset.pattern.permute.xlu0 3
      %1853 = vperm.xlu0 %1852, %v290
      %v1854 = vpop.permute.xlu0 %1853
      %1856 = vset.pattern.permute.xlu0 3
      %1857 = vperm.xlu0 %1856, %v291
      %v1858 = vpop.permute.xlu0 %1857
      %1860 = vset.pattern.permute.xlu0 3
      %1861 = vperm.xlu0 %1860, %v292
      %v1862 = vpop.permute.xlu0 %1861
      %1864 = vset.pattern.permute.xlu0 3
      %1865 = vperm.xlu0 %1864, %v293
      %v1866 = vpop.permute.xlu0 %1865
      %1868 = vset.pattern.permute.xlu0 3
      %1869 = vperm.xlu0 %1868, %v294
      %v1870 = vpop.permute.xlu0 %1869
      %1872 = vset.pattern.permute.xlu0 3
      %1873 = vperm.xlu0 %1872, %v295
      %v1874 = vpop.permute.xlu0 %1873
      %1876 = vset.pattern.permute.xlu0 3
      %1877 = vperm.xlu0 %1876, %v296
      %v1878 = vpop.permute.xlu0 %1877
      %1880 = vset.pattern.permute.xlu0 3
      %1881 = vperm.xlu0 %1880, %v297
      %v1882 = vpop.permute.xlu0 %1881
      %1884 = vset.pattern.permute.xlu0 3
      %1885 = vperm.xlu0 %1884, %v298
      %v1886 = vpop.permute.xlu0 %1885
      %1888 = vset.pattern.permute.xlu0 3
      %1889 = vperm.xlu0 %1888, %v299
      %v1890 = vpop.permute.xlu0 %1889
      %1892 = vset.pattern.permute.xlu0 3
      %1893 = vperm.xlu0 %1892, %v300
      %v1894 = vpop.permute.xlu0 %1893
      %1896 = vset.pattern.permute.xlu0 3
      %1897 = vperm.xlu0 %1896, %v301
      %v1898 = vpop.permute.xlu0 %1897
      %1900 = vset.pattern.permute.xlu0 3
      %1901 = vperm.xlu0 %1900, %v302
      %v1902 = vpop.permute.xlu0 %1901
      %1904 = vset.pattern.permute.xlu0 3
      %1905 = vperm.xlu0 %1904, %v303
      %v1906 = vpop.permute.xlu0 %1905
      %1908 = vset.pattern.permute.xlu0 3
      %1909 = vperm.xlu0 %1908, %v304
      %v1910 = vpop.permute.xlu0 %1909
      %1912 = vset.pattern.permute.xlu0 3
      %1913 = vperm.xlu0 %1912, %v305
      %v1914 = vpop.permute.xlu0 %1913
      %1916 = vset.pattern.permute.xlu0 3
      %1917 = vperm.xlu0 %1916, %v306
      %v1918 = vpop.permute.xlu0 %1917
      %1920 = vset.pattern.permute.xlu0 3
      %1921 = vperm.xlu0 %1920, %v307
      %v1922 = vpop.permute.xlu0 %1921
      %1924 = vset.pattern.permute.xlu0 3
      %1925 = vperm.xlu0 %1924, %v308
      %v1926 = vpop.permute.xlu0 %1925
      %1928 = vset.pattern.permute.xlu0 3
      %1929 = vperm.xlu0 %1928, %v309
      %v1930 = vpop.permute.xlu0 %1929
      %1932 = vset.pattern.permute.xlu0 3
      %1933 = vperm.xlu0 %1932, %v310
      %v1934 = vpop.permute.xlu0 %1933
      %1936 = vset.pattern.permute.xlu0 3
      %1937 = vperm.xlu0 %1936, %v311
      %v1938 = vpop.permute.xlu0 %1937
      %1940 = vset.pattern.permute.xlu0 3
      %1941 = vperm.xlu0 %1940, %v312
      %v1942 = vpop.permute.xlu0 %1941
      %1944 = vset.pattern.permute.xlu0 3
      %1945 = vperm.xlu0 %1944, %v313
      %v1946 = vpop.permute.xlu0 %1945
      %1948 = vset.pattern.permute.xlu0 3
      %1949 = vperm.xlu0 %1948, %v314
      %v1950 = vpop.permute.xlu0 %1949
      %1952 = vset.pattern.permute.xlu0 3
      %1953 = vperm.xlu0 %1952, %v315
      %v1954 = vpop.permute.xlu0 %1953
      %1956 = vset.pattern.permute.xlu0 3
      %1957 = vperm.xlu0 %1956, %v316
      %v1958 = vpop.permute.xlu0 %1957
      %1960 = vset.pattern.permute.xlu0 3
      %1961 = vperm.xlu0 %1960, %v317
      %v1962 = vpop.permute.xlu0 %1961
      %1964 = vset.pattern.permute.xlu0 3
      %1965 = vperm.xlu0 %1964, %v318
      %v1966 = vpop.permute.xlu0 %1965
      %v1968 = vmul.f32 %v1224, %v1842
      %v1969 = vmul.f32 %v1225, %v1846
      %v1970 = vmul.f32 %v1226, %v1850
      %v1971 = vmul.f32 %v1227, %v1854
      %v1972 = vmul.f32 %v1228, %v1858
      %v1973 = vmul.f32 %v1229, %v1862
      %v1974 = vmul.f32 %v1230, %v1866
      %v1975 = vmul.f32 %v1231, %v1870
      %v1976 = vmul.f32 %v1232, %v1874
      %v1977 = vmul.f32 %v1233, %v1878
      %v1978 = vmul.f32 %v1234, %v1882
      %v1979 = vmul.f32 %v1235, %v1886
      %v1980 = vmul.f32 %v1236, %v1890
      %v1981 = vmul.f32 %v1237, %v1894
      %v1982 = vmul.f32 %v1238, %v1898
      %v1983 = vmul.f32 %v1239, %v1902
      %v1984 = vmul.f32 %v1240, %v1906
      %v1985 = vmul.f32 %v1241, %v1910
      %v1986 = vmul.f32 %v1242, %v1914
      %v1987 = vmul.f32 %v1243, %v1918
      %v1988 = vmul.f32 %v1244, %v1922
      %v1989 = vmul.f32 %v1245, %v1926
      %v1990 = vmul.f32 %v1246, %v1930
      %v1991 = vmul.f32 %v1247, %v1934
      %v1992 = vmul.f32 %v1248, %v1938
      %v1993 = vmul.f32 %v1249, %v1942
      %v1994 = vmul.f32 %v1250, %v1946
      %v1995 = vmul.f32 %v1251, %v1950
      %v1996 = vmul.f32 %v1252, %v1954
      %v1997 = vmul.f32 %v1253, %v1958
      %v1998 = vmul.f32 %v1222, %v1962
      %v1999 = vmul.f32 %v1223, %v1966
      %s2000 = scalar_lea.vmem %s2, 48
      %v2001 = vld [vmem:[%s2000] sm:$0xff]
      %v2002 = vld [vmem:[%s2000 + $0x8] sm:$0xff]
      %v2003 = vld [vmem:[%s2000 + $0x10] sm:$0xff]
      %v2005 = vsel %vm1421, %v1968, 0
      %v2008 = vsel %vm1421, %v1969, 0
      %v2011 = vsel %vm1421, %v1970, 0
      %v2014 = vsel %vm1421, %v1971, 0
      %v2017 = vsel %vm1421, %v1972, 0
      %v2020 = vsel %vm1421, %v1973, 0
      %v2023 = vsel %vm1421, %v1974, 0
      %v2026 = vsel %vm1421, %v1975, 0
      %v2029 = vsel %vm1421, %v1976, 0
      %v2032 = vsel %vm1421, %v1977, 0
      %v2035 = vsel %vm1421, %v1978, 0
      %v2038 = vsel %vm1421, %v1979, 0
      %v2041 = vsel %vm1421, %v1980, 0
      %v2044 = vsel %vm1421, %v1981, 0
      %v2047 = vsel %vm1421, %v1982, 0
      %v2050 = vsel %vm1421, %v1983, 0
      %v2053 = vsel %vm1421, %v1984, 0
      %v2056 = vsel %vm1421, %v1985, 0
      %v2059 = vsel %vm1421, %v1986, 0
      %v2062 = vsel %vm1421, %v1987, 0
      %v2065 = vsel %vm1421, %v1988, 0
      %v2068 = vsel %vm1421, %v1989, 0
      %v2071 = vsel %vm1421, %v1990, 0
      %v2074 = vsel %vm1421, %v1991, 0
      %v2077 = vsel %vm1421, %v1992, 0
      %v2080 = vsel %vm1421, %v1993, 0
      %v2083 = vsel %vm1421, %v1994, 0
      %v2086 = vsel %vm1421, %v1995, 0
      %v2089 = vsel %vm1421, %v1996, 0
      %v2092 = vsel %vm1421, %v1997, 0
      %v2095 = vsel %vm1421, %v1998, 0
      %v2098 = vsel %vm1421, %v1999, 0
      %2100 = vmatpush.msra.mxu0 0.0
      %2101 = vmatpush.msra.mxu0 0.0
      %2102 = vmatpush.msra.mxu0 0.0
      %2103 = vmatpush.msra.mxu0 0.0
      %2104 = vmatpush.msra.mxu0 0.0
      %2105 = vmatpush.msra.mxu0 0.0
      %2106 = vmatpush.msra.mxu0 0.0
      %2107 = vmatpush.msra.mxu0 0.0
      %2108 = vmatpush.msra.mxu0 0.0
      %2109 = vmatpush.msra.mxu0 0.0
      %2110 = vmatpush.msra.mxu0 0.0
      %2111 = vmatpush.msra.mxu0 0.0
      %2112 = vmatpush.msra.mxu0 0.0
      %2113 = vmatpush.msra.mxu0 %v2003
      %2114 = vmatpush.msra.mxu0 %v2002
      %2115 = vmatpush.msra.mxu0 %v2001
      %2116 = vmatmul.f32.gmra.mxu0 %v2005
      %v2117 = vpop.f32.mrf.mxu0
      %v2118 = vadd.f32 0.0, %v2117
      %2119 = vmatmul.f32.gmra.mxu0 %v2008
      %v2120 = vpop.f32.mrf.mxu0
      %v2121 = vadd.f32 0.0, %v2120
      %2122 = vmatmul.f32.gmra.mxu0 %v2011
      %v2123 = vpop.f32.mrf.mxu0
      %v2124 = vadd.f32 0.0, %v2123
      %2125 = vmatmul.f32.gmra.mxu0 %v2014
      %v2126 = vpop.f32.mrf.mxu0
      %v2127 = vadd.f32 0.0, %v2126
      %2128 = vmatmul.f32.gmra.mxu0 %v2017
      %v2129 = vpop.f32.mrf.mxu0
      %v2130 = vadd.f32 0.0, %v2129
      %2131 = vmatmul.f32.gmra.mxu0 %v2020
      %v2132 = vpop.f32.mrf.mxu0
      %v2133 = vadd.f32 0.0, %v2132
      %2134 = vmatmul.f32.gmra.mxu0 %v2023
      %v2135 = vpop.f32.mrf.mxu0
      %v2136 = vadd.f32 0.0, %v2135
      %2137 = vmatmul.f32.gmra.mxu0 %v2026
      %v2138 = vpop.f32.mrf.mxu0
      %v2139 = vadd.f32 0.0, %v2138
      %2140 = vmatmul.f32.gmra.mxu0 %v2029
      %v2141 = vpop.f32.mrf.mxu0
      %v2142 = vadd.f32 0.0, %v2141
      %2143 = vmatmul.f32.gmra.mxu0 %v2032
      %v2144 = vpop.f32.mrf.mxu0
      %v2145 = vadd.f32 0.0, %v2144
      %2146 = vmatmul.f32.gmra.mxu0 %v2035
      %v2147 = vpop.f32.mrf.mxu0
      %v2148 = vadd.f32 0.0, %v2147
      %2149 = vmatmul.f32.gmra.mxu0 %v2038
      %v2150 = vpop.f32.mrf.mxu0
      %v2151 = vadd.f32 0.0, %v2150
      %2152 = vmatmul.f32.gmra.mxu0 %v2041
      %v2153 = vpop.f32.mrf.mxu0
      %v2154 = vadd.f32 0.0, %v2153
      %2155 = vmatmul.f32.gmra.mxu0 %v2044
      %v2156 = vpop.f32.mrf.mxu0
      %v2157 = vadd.f32 0.0, %v2156
      %2158 = vmatmul.f32.gmra.mxu0 %v2047
      %v2159 = vpop.f32.mrf.mxu0
      %v2160 = vadd.f32 0.0, %v2159
      %2161 = vmatmul.f32.gmra.mxu0 %v2050
      %v2162 = vpop.f32.mrf.mxu0
      %v2163 = vadd.f32 0.0, %v2162
      %2164 = vmatmul.f32.gmra.mxu0 %v2053
      %v2165 = vpop.f32.mrf.mxu0
      %v2166 = vadd.f32 0.0, %v2165
      %2167 = vmatmul.f32.gmra.mxu0 %v2056
      %v2168 = vpop.f32.mrf.mxu0
      %v2169 = vadd.f32 0.0, %v2168
      %2170 = vmatmul.f32.gmra.mxu0 %v2059
      %v2171 = vpop.f32.mrf.mxu0
      %v2172 = vadd.f32 0.0, %v2171
      %2173 = vmatmul.f32.gmra.mxu0 %v2062
      %v2174 = vpop.f32.mrf.mxu0
      %v2175 = vadd.f32 0.0, %v2174
      %2176 = vmatmul.f32.gmra.mxu0 %v2065
      %v2177 = vpop.f32.mrf.mxu0
      %v2178 = vadd.f32 0.0, %v2177
      %2179 = vmatmul.f32.gmra.mxu0 %v2068
      %v2180 = vpop.f32.mrf.mxu0
      %v2181 = vadd.f32 0.0, %v2180
      %2182 = vmatmul.f32.gmra.mxu0 %v2071
      %v2183 = vpop.f32.mrf.mxu0
      %v2184 = vadd.f32 0.0, %v2183
      %2185 = vmatmul.f32.gmra.mxu0 %v2074
      %v2186 = vpop.f32.mrf.mxu0
      %v2187 = vadd.f32 0.0, %v2186
      %2188 = vmatmul.f32.gmra.mxu0 %v2077
      %v2189 = vpop.f32.mrf.mxu0
      %v2190 = vadd.f32 0.0, %v2189
      %2191 = vmatmul.f32.gmra.mxu0 %v2080
      %v2192 = vpop.f32.mrf.mxu0
      %v2193 = vadd.f32 0.0, %v2192
      %2194 = vmatmul.f32.gmra.mxu0 %v2083
      %v2195 = vpop.f32.mrf.mxu0
      %v2196 = vadd.f32 0.0, %v2195
      %2197 = vmatmul.f32.gmra.mxu0 %v2086
      %v2198 = vpop.f32.mrf.mxu0
      %v2199 = vadd.f32 0.0, %v2198
      %2200 = vmatmul.f32.gmra.mxu0 %v2089
      %v2201 = vpop.f32.mrf.mxu0
      %v2202 = vadd.f32 0.0, %v2201
      %2203 = vmatmul.f32.gmra.mxu0 %v2092
      %v2204 = vpop.f32.mrf.mxu0
      %v2205 = vadd.f32 0.0, %v2204
      %2206 = vmatmul.f32.gmra.mxu0 %v2095
      %v2207 = vpop.f32.mrf.mxu0
      %v2208 = vadd.f32 0.0, %v2207
      %2209 = vmatmul.f32.gmra.mxu0 %v2098
      %v2210 = vpop.f32.mrf.mxu0
      %v2211 = vadd.f32 0.0, %v2210
      %2212 = vdwg.mxu0
      %v2213 = vadd.f32 %v1745, %v2118
      %v2214 = vadd.f32 %v1748, %v2121
      %v2215 = vadd.f32 %v1751, %v2124
      %v2216 = vadd.f32 %v1754, %v2127
      %v2217 = vadd.f32 %v1757, %v2130
      %v2218 = vadd.f32 %v1760, %v2133
      %v2219 = vadd.f32 %v1763, %v2136
      %v2220 = vadd.f32 %v1766, %v2139
      %v2221 = vadd.f32 %v1769, %v2142
      %v2222 = vadd.f32 %v1772, %v2145
      %v2223 = vadd.f32 %v1775, %v2148
      %v2224 = vadd.f32 %v1778, %v2151
      %v2225 = vadd.f32 %v1781, %v2154
      %v2226 = vadd.f32 %v1784, %v2157
      %v2227 = vadd.f32 %v1787, %v2160
      %v2228 = vadd.f32 %v1790, %v2163
      %v2229 = vadd.f32 %v1793, %v2166
      %v2230 = vadd.f32 %v1796, %v2169
      %v2231 = vadd.f32 %v1799, %v2172
      %v2232 = vadd.f32 %v1802, %v2175
      %v2233 = vadd.f32 %v1805, %v2178
      %v2234 = vadd.f32 %v1808, %v2181
      %v2235 = vadd.f32 %v1811, %v2184
      %v2236 = vadd.f32 %v1814, %v2187
      %v2237 = vadd.f32 %v1817, %v2190
      %v2238 = vadd.f32 %v1820, %v2193
      %v2239 = vadd.f32 %v1823, %v2196
      %v2240 = vadd.f32 %v1826, %v2199
      %v2241 = vadd.f32 %v1829, %v2202
      %v2242 = vadd.f32 %v1832, %v2205
      %v2243 = vadd.f32 %v1835, %v2208
      %v2244 = vadd.f32 %v1838, %v2211
      %v2245 = vld [vmem:[%s3] sm:$0x1]
      %v2247 = vperm.slane %v2245, 0
      %v2249 = vadd.f32 %v2213, %v2247
      %v2250 = vadd.f32 %v2214, %v2247
      %v2251 = vadd.f32 %v2215, %v2247
      %v2252 = vadd.f32 %v2216, %v2247
      %v2253 = vadd.f32 %v2217, %v2247
      %v2254 = vadd.f32 %v2218, %v2247
      %v2255 = vadd.f32 %v2219, %v2247
      %v2256 = vadd.f32 %v2220, %v2247
      %v2257 = vadd.f32 %v2221, %v2247
      %v2258 = vadd.f32 %v2222, %v2247
      %v2259 = vadd.f32 %v2223, %v2247
      %v2260 = vadd.f32 %v2224, %v2247
      %v2261 = vadd.f32 %v2225, %v2247
      %v2262 = vadd.f32 %v2226, %v2247
      %v2263 = vadd.f32 %v2227, %v2247
      %v2264 = vadd.f32 %v2228, %v2247
      %v2265 = vadd.f32 %v2229, %v2247
      %v2266 = vadd.f32 %v2230, %v2247
      %v2267 = vadd.f32 %v2231, %v2247
      %v2268 = vadd.f32 %v2232, %v2247
      %v2269 = vadd.f32 %v2233, %v2247
      %v2270 = vadd.f32 %v2234, %v2247
      %v2271 = vadd.f32 %v2235, %v2247
      %v2272 = vadd.f32 %v2236, %v2247
      %v2273 = vadd.f32 %v2237, %v2247
      %v2274 = vadd.f32 %v2238, %v2247
      %v2275 = vadd.f32 %v2239, %v2247
      %v2276 = vadd.f32 %v2240, %v2247
      %v2277 = vadd.f32 %v2241, %v2247
      %v2278 = vadd.f32 %v2242, %v2247
      %v2279 = vadd.f32 %v2243, %v2247
      %v2280 = vadd.f32 %v2244, %v2247
      %v2281 = vmax.f32 %v2249, 0.0
      %v2282 = vmax.f32 %v2250, 0.0
      %v2283 = vmax.f32 %v2251, 0.0
      %v2284 = vmax.f32 %v2252, 0.0
      %v2285 = vmax.f32 %v2253, 0.0
      %v2286 = vmax.f32 %v2254, 0.0
      %v2287 = vmax.f32 %v2255, 0.0
      %v2288 = vmax.f32 %v2256, 0.0
      %v2289 = vmax.f32 %v2257, 0.0
      %v2290 = vmax.f32 %v2258, 0.0
      %v2291 = vmax.f32 %v2259, 0.0
      %v2292 = vmax.f32 %v2260, 0.0
      %v2293 = vmax.f32 %v2261, 0.0
      %v2294 = vmax.f32 %v2262, 0.0
      %v2295 = vmax.f32 %v2263, 0.0
      %v2296 = vmax.f32 %v2264, 0.0
      %v2297 = vmax.f32 %v2265, 0.0
      %v2298 = vmax.f32 %v2266, 0.0
      %v2299 = vmax.f32 %v2267, 0.0
      %v2300 = vmax.f32 %v2268, 0.0
      %v2301 = vmax.f32 %v2269, 0.0
      %v2302 = vmax.f32 %v2270, 0.0
      %v2303 = vmax.f32 %v2271, 0.0
      %v2304 = vmax.f32 %v2272, 0.0
      %v2305 = vmax.f32 %v2273, 0.0
      %v2306 = vmax.f32 %v2274, 0.0
      %v2307 = vmax.f32 %v2275, 0.0
      %v2308 = vmax.f32 %v2276, 0.0
      %v2309 = vmax.f32 %v2277, 0.0
      %v2310 = vmax.f32 %v2278, 0.0
      %v2311 = vmax.f32 %v2279, 0.0
      %v2312 = vmax.f32 %v2280, 0.0
      %v2314 = vrot.slane %v2312, 7
      %v2347 = vrot.slane %v2281, 7
      %v2348 = vrot.slane %v2282, 7
      %v2349 = vsel %vm353, %v2347, %v2348
      %v2350 = vrot.slane %v2283, 7
      %v2351 = vsel %vm353, %v2348, %v2350
      %v2352 = vrot.slane %v2284, 7
      %v2353 = vsel %vm353, %v2350, %v2352
      %v2354 = vrot.slane %v2285, 7
      %v2355 = vsel %vm353, %v2352, %v2354
      %v2356 = vrot.slane %v2286, 7
      %v2357 = vsel %vm353, %v2354, %v2356
      %v2358 = vrot.slane %v2287, 7
      %v2359 = vsel %vm353, %v2356, %v2358
      %v2360 = vrot.slane %v2288, 7
      %v2361 = vsel %vm353, %v2358, %v2360
      %v2362 = vrot.slane %v2289, 7
      %v2363 = vsel %vm353, %v2360, %v2362
      %v2364 = vrot.slane %v2290, 7
      %v2365 = vsel %vm353, %v2362, %v2364
      %v2366 = vrot.slane %v2291, 7
      %v2367 = vsel %vm353, %v2364, %v2366
      %v2368 = vrot.slane %v2292, 7
      %v2369 = vsel %vm353, %v2366, %v2368
      %v2370 = vrot.slane %v2293, 7
      %v2371 = vsel %vm353, %v2368, %v2370
      %v2372 = vrot.slane %v2294, 7
      %v2373 = vsel %vm353, %v2370, %v2372
      %v2374 = vrot.slane %v2295, 7
      %v2375 = vsel %vm353, %v2372, %v2374
      %v2376 = vrot.slane %v2296, 7
      %v2377 = vsel %vm353, %v2374, %v2376
      %v2378 = vrot.slane %v2297, 7
      %v2379 = vsel %vm353, %v2376, %v2378
      %v2380 = vrot.slane %v2298, 7
      %v2381 = vsel %vm353, %v2378, %v2380
      %v2382 = vrot.slane %v2299, 7
      %v2383 = vsel %vm353, %v2380, %v2382
      %v2384 = vrot.slane %v2300, 7
      %v2385 = vsel %vm353, %v2382, %v2384
      %v2386 = vrot.slane %v2301, 7
      %v2387 = vsel %vm353, %v2384, %v2386
      %v2388 = vrot.slane %v2302, 7
      %v2389 = vsel %vm353, %v2386, %v2388
      %v2390 = vrot.slane %v2303, 7
      %v2391 = vsel %vm353, %v2388, %v2390
      %v2392 = vrot.slane %v2304, 7
      %v2393 = vsel %vm353, %v2390, %v2392
      %v2394 = vrot.slane %v2305, 7
      %v2395 = vsel %vm353, %v2392, %v2394
      %v2396 = vrot.slane %v2306, 7
      %v2397 = vsel %vm353, %v2394, %v2396
      %v2398 = vrot.slane %v2307, 7
      %v2399 = vsel %vm353, %v2396, %v2398
      %v2400 = vrot.slane %v2308, 7
      %v2401 = vsel %vm353, %v2398, %v2400
      %v2402 = vrot.slane %v2309, 7
      %v2403 = vsel %vm353, %v2400, %v2402
      %v2404 = vrot.slane %v2310, 7
      %v2405 = vsel %vm353, %v2402, %v2404
      %v2406 = vrot.slane %v2311, 7
      %v2407 = vsel %vm353, %v2404, %v2406
      %v2408 = vsel %vm353, %v2406, %v2314
      %v2441 = vsel %vm353, %v2314, %v2347
      %v2442 = vmul.f32 %v2441, %v452
      %v2443 = vmul.f32 %v2349, %v457
      %v2444 = vmul.f32 %v2351, %v462
      %v2445 = vmul.f32 %v2353, %v467
      %v2446 = vmul.f32 %v2355, %v472
      %v2447 = vmul.f32 %v2357, %v477
      %v2448 = vmul.f32 %v2359, %v482
      %v2449 = vmul.f32 %v2361, %v487
      %v2450 = vmul.f32 %v2363, %v492
      %v2451 = vmul.f32 %v2365, %v497
      %v2452 = vmul.f32 %v2367, %v502
      %v2453 = vmul.f32 %v2369, %v507
      %v2454 = vmul.f32 %v2371, %v512
      %v2455 = vmul.f32 %v2373, %v517
      %v2456 = vmul.f32 %v2375, %v522
      %v2457 = vmul.f32 %v2377, %v527
      %v2458 = vmul.f32 %v2379, %v532
      %v2459 = vmul.f32 %v2381, %v537
      %v2460 = vmul.f32 %v2383, %v542
      %v2461 = vmul.f32 %v2385, %v547
      %v2462 = vmul.f32 %v2387, %v552
      %v2463 = vmul.f32 %v2389, %v557
      %v2464 = vmul.f32 %v2391, %v562
      %v2465 = vmul.f32 %v2393, %v567
      %v2466 = vmul.f32 %v2395, %v572
      %v2467 = vmul.f32 %v2397, %v577
      %v2468 = vmul.f32 %v2399, %v582
      %v2469 = vmul.f32 %v2401, %v587
      %v2470 = vmul.f32 %v2403, %v592
      %v2471 = vmul.f32 %v2405, %v597
      %v2472 = vmul.f32 %v2407, %v602
      %v2473 = vmul.f32 %v2408, %v607
      %v2474 = vrot.slane %v2281, 1
      %v2475 = vrot.slane %v2282, 1
      %v2476 = vsel %vm641, %v2474, %v2475
      %v2477 = vrot.slane %v2283, 1
      %v2478 = vsel %vm641, %v2475, %v2477
      %v2479 = vrot.slane %v2284, 1
      %v2480 = vsel %vm641, %v2477, %v2479
      %v2481 = vrot.slane %v2285, 1
      %v2482 = vsel %vm641, %v2479, %v2481
      %v2483 = vrot.slane %v2286, 1
      %v2484 = vsel %vm641, %v2481, %v2483
      %v2485 = vrot.slane %v2287, 1
      %v2486 = vsel %vm641, %v2483, %v2485
      %v2487 = vrot.slane %v2288, 1
      %v2488 = vsel %vm641, %v2485, %v2487
      %v2489 = vrot.slane %v2289, 1
      %v2490 = vsel %vm641, %v2487, %v2489
      %v2491 = vrot.slane %v2290, 1
      %v2492 = vsel %vm641, %v2489, %v2491
      %v2493 = vrot.slane %v2291, 1
      %v2494 = vsel %vm641, %v2491, %v2493
      %v2495 = vrot.slane %v2292, 1
      %v2496 = vsel %vm641, %v2493, %v2495
      %v2497 = vrot.slane %v2293, 1
      %v2498 = vsel %vm641, %v2495, %v2497
      %v2499 = vrot.slane %v2294, 1
      %v2500 = vsel %vm641, %v2497, %v2499
      %v2501 = vrot.slane %v2295, 1
      %v2502 = vsel %vm641, %v2499, %v2501
      %v2503 = vrot.slane %v2296, 1
      %v2504 = vsel %vm641, %v2501, %v2503
      %v2505 = vrot.slane %v2297, 1
      %v2506 = vsel %vm641, %v2503, %v2505
      %v2507 = vrot.slane %v2298, 1
      %v2508 = vsel %vm641, %v2505, %v2507
      %v2509 = vrot.slane %v2299, 1
      %v2510 = vsel %vm641, %v2507, %v2509
      %v2511 = vrot.slane %v2300, 1
      %v2512 = vsel %vm641, %v2509, %v2511
      %v2513 = vrot.slane %v2301, 1
      %v2514 = vsel %vm641, %v2511, %v2513
      %v2515 = vrot.slane %v2302, 1
      %v2516 = vsel %vm641, %v2513, %v2515
      %v2517 = vrot.slane %v2303, 1
      %v2518 = vsel %vm641, %v2515, %v2517
      %v2519 = vrot.slane %v2304, 1
      %v2520 = vsel %vm641, %v2517, %v2519
      %v2521 = vrot.slane %v2305, 1
      %v2522 = vsel %vm641, %v2519, %v2521
      %v2523 = vrot.slane %v2306, 1
      %v2524 = vsel %vm641, %v2521, %v2523
      %v2525 = vrot.slane %v2307, 1
      %v2526 = vsel %vm641, %v2523, %v2525
      %v2527 = vrot.slane %v2308, 1
      %v2528 = vsel %vm641, %v2525, %v2527
      %v2529 = vrot.slane %v2309, 1
      %v2530 = vsel %vm641, %v2527, %v2529
      %v2531 = vrot.slane %v2310, 1
      %v2532 = vsel %vm641, %v2529, %v2531
      %v2533 = vrot.slane %v2311, 1
      %v2534 = vsel %vm641, %v2531, %v2533
      %v2535 = vrot.slane %v2312, 1
      %v2536 = vsel %vm641, %v2533, %v2535
      %v2570 = vsel %vm641, %v2535, %v2474
      %v2571 = vmul.f32 %v2476, %v741
      %v2572 = vmul.f32 %v2478, %v745
      %v2573 = vmul.f32 %v2480, %v749
      %v2574 = vmul.f32 %v2482, %v753
      %v2575 = vmul.f32 %v2484, %v757
      %v2576 = vmul.f32 %v2486, %v761
      %v2577 = vmul.f32 %v2488, %v765
      %v2578 = vmul.f32 %v2490, %v769
      %v2579 = vmul.f32 %v2492, %v773
      %v2580 = vmul.f32 %v2494, %v777
      %v2581 = vmul.f32 %v2496, %v781
      %v2582 = vmul.f32 %v2498, %v785
      %v2583 = vmul.f32 %v2500, %v789
      %v2584 = vmul.f32 %v2502, %v793
      %v2585 = vmul.f32 %v2504, %v797
      %v2586 = vmul.f32 %v2506, %v801
      %v2587 = vmul.f32 %v2508, %v805
      %v2588 = vmul.f32 %v2510, %v809
      %v2589 = vmul.f32 %v2512, %v813
      %v2590 = vmul.f32 %v2514, %v817
      %v2591 = vmul.f32 %v2516, %v821
      %v2592 = vmul.f32 %v2518, %v825
      %v2593 = vmul.f32 %v2520, %v829
      %v2594 = vmul.f32 %v2522, %v833
      %v2595 = vmul.f32 %v2524, %v837
      %v2596 = vmul.f32 %v2526, %v841
      %v2597 = vmul.f32 %v2528, %v845
      %v2598 = vmul.f32 %v2530, %v849
      %v2599 = vmul.f32 %v2532, %v853
      %v2600 = vmul.f32 %v2534, %v857
      %v2601 = vmul.f32 %v2536, %v861
      %v2602 = vmul.f32 %v2570, %v865
      %2603 = vst.msk [vmem:[#allocation2] sm:$0xff] %vm899, %v2442
      %2604 = vst.msk [vmem:[#allocation2 + $0x8] sm:$0xff] %vm899, %v2443
      %2605 = vst.msk [vmem:[#allocation2 + $0x10] sm:$0xff] %vm899, %v2444
      %2606 = vst.msk [vmem:[#allocation2 + $0x18] sm:$0xff] %vm899, %v2445
      %2607 = vst.msk [vmem:[#allocation2 + $0x20] sm:$0xff] %vm899, %v2446
      %2608 = vst.msk [vmem:[#allocation2 + $0x28] sm:$0xff] %vm899, %v2447
      %2609 = vst.msk [vmem:[#allocation2 + $0x30] sm:$0xff] %vm899, %v2448
      %2610 = vst.msk [vmem:[#allocation2 + $0x38] sm:$0xff] %vm899, %v2449
      %2611 = vst.msk [vmem:[#allocation2 + $0x40] sm:$0xff] %vm899, %v2450
      %2612 = vst.msk [vmem:[#allocation2 + $0x48] sm:$0xff] %vm899, %v2451
      %2613 = vst.msk [vmem:[#allocation2 + $0x50] sm:$0xff] %vm899, %v2452
      %2614 = vst.msk [vmem:[#allocation2 + $0x58] sm:$0xff] %vm899, %v2453
      %2615 = vst.msk [vmem:[#allocation2 + $0x60] sm:$0xff] %vm899, %v2454
      %2616 = vst.msk [vmem:[#allocation2 + $0x68] sm:$0xff] %vm899, %v2455
      %2617 = vst.msk [vmem:[#allocation2 + $0x70] sm:$0xff] %vm899, %v2456
      %2618 = vst.msk [vmem:[#allocation2 + $0x78] sm:$0xff] %vm899, %v2457
      %2619 = vst.msk [vmem:[#allocation2 + $0x80] sm:$0xff] %vm899, %v2458
      %2620 = vst.msk [vmem:[#allocation2 + $0x88] sm:$0xff] %vm899, %v2459
      %2621 = vst.msk [vmem:[#allocation2 + $0x90] sm:$0xff] %vm899, %v2460
      %2622 = vst.msk [vmem:[#allocation2 + $0x98] sm:$0xff] %vm899, %v2461
      %2623 = vst.msk [vmem:[#allocation2 + $0xa0] sm:$0xff] %vm899, %v2462
      %2624 = vst.msk [vmem:[#allocation2 + $0xa8] sm:$0xff] %vm899, %v2463
      %2625 = vst.msk [vmem:[#allocation2 + $0xb0] sm:$0xff] %vm899, %v2464
      %2626 = vst.msk [vmem:[#allocation2 + $0xb8] sm:$0xff] %vm899, %v2465
      %2627 = vst.msk [vmem:[#allocation2 + $0xc0] sm:$0xff] %vm899, %v2466
      %2628 = vst.msk [vmem:[#allocation2 + $0xc8] sm:$0xff] %vm899, %v2467
      %2629 = vst.msk [vmem:[#allocation2 + $0xd0] sm:$0xff] %vm899, %v2468
      %2630 = vst.msk [vmem:[#allocation2 + $0xd8] sm:$0xff] %vm899, %v2469
      %2631 = vst.msk [vmem:[#allocation2 + $0xe0] sm:$0xff] %vm899, %v2470
      %2632 = vst.msk [vmem:[#allocation2 + $0xe8] sm:$0xff] %vm899, %v2471
      %2633 = vst.msk [vmem:[#allocation2 + $0xf0] sm:$0xff] %vm899, %v2472
      %2634 = vst.msk [vmem:[#allocation2 + $0xf8] sm:$0xff] %vm899, %v2473
      %2635 = vrot.lane.b32.xlu0 %v2281, 8
      %v2636 = vpop.permute.xlu0 %2635
      %2637 = vrot.lane.b32.xlu0 %v2282, 8
      %v2638 = vpop.permute.xlu0 %2637
      %2639 = vrot.lane.b32.xlu0 %v2283, 8
      %v2640 = vpop.permute.xlu0 %2639
      %2641 = vrot.lane.b32.xlu0 %v2284, 8
      %v2642 = vpop.permute.xlu0 %2641
      %2643 = vrot.lane.b32.xlu0 %v2285, 8
      %v2644 = vpop.permute.xlu0 %2643
      %2645 = vrot.lane.b32.xlu0 %v2286, 8
      %v2646 = vpop.permute.xlu0 %2645
      %2647 = vrot.lane.b32.xlu0 %v2287, 8
      %v2648 = vpop.permute.xlu0 %2647
      %2649 = vrot.lane.b32.xlu0 %v2288, 8
      %v2650 = vpop.permute.xlu0 %2649
      %2651 = vrot.lane.b32.xlu0 %v2289, 8
      %v2652 = vpop.permute.xlu0 %2651
      %2653 = vrot.lane.b32.xlu0 %v2290, 8
      %v2654 = vpop.permute.xlu0 %2653
      %2655 = vrot.lane.b32.xlu0 %v2291, 8
      %v2656 = vpop.permute.xlu0 %2655
      %2657 = vrot.lane.b32.xlu0 %v2292, 8
      %v2658 = vpop.permute.xlu0 %2657
      %2659 = vrot.lane.b32.xlu0 %v2293, 8
      %v2660 = vpop.permute.xlu0 %2659
      %2661 = vrot.lane.b32.xlu0 %v2294, 8
      %v2662 = vpop.permute.xlu0 %2661
      %2663 = vrot.lane.b32.xlu0 %v2295, 8
      %v2664 = vpop.permute.xlu0 %2663
      %2665 = vrot.lane.b32.xlu0 %v2296, 8
      %v2666 = vpop.permute.xlu0 %2665
      %2667 = vrot.lane.b32.xlu0 %v2297, 8
      %v2668 = vpop.permute.xlu0 %2667
      %2669 = vrot.lane.b32.xlu0 %v2298, 8
      %v2670 = vpop.permute.xlu0 %2669
      %2671 = vrot.lane.b32.xlu0 %v2299, 8
      %v2672 = vpop.permute.xlu0 %2671
      %2673 = vrot.lane.b32.xlu0 %v2300, 8
      %v2674 = vpop.permute.xlu0 %2673
      %2675 = vrot.lane.b32.xlu0 %v2301, 8
      %v2676 = vpop.permute.xlu0 %2675
      %2677 = vrot.lane.b32.xlu0 %v2302, 8
      %v2678 = vpop.permute.xlu0 %2677
      %2679 = vrot.lane.b32.xlu0 %v2303, 8
      %v2680 = vpop.permute.xlu0 %2679
      %2681 = vrot.lane.b32.xlu0 %v2304, 8
      %v2682 = vpop.permute.xlu0 %2681
      %2683 = vrot.lane.b32.xlu0 %v2305, 8
      %v2684 = vpop.permute.xlu0 %2683
      %2685 = vrot.lane.b32.xlu0 %v2306, 8
      %v2686 = vpop.permute.xlu0 %2685
      %2687 = vrot.lane.b32.xlu0 %v2307, 8
      %v2688 = vpop.permute.xlu0 %2687
      %2689 = vrot.lane.b32.xlu0 %v2308, 8
      %v2690 = vpop.permute.xlu0 %2689
      %2691 = vrot.lane.b32.xlu0 %v2309, 8
      %v2692 = vpop.permute.xlu0 %2691
      %2693 = vrot.lane.b32.xlu0 %v2310, 8
      %v2694 = vpop.permute.xlu0 %2693
      %2695 = vrot.lane.b32.xlu0 %v2311, 8
      %v2696 = vpop.permute.xlu0 %2695
      %2697 = vrot.lane.b32.xlu0 %v2312, 8
      %v2698 = vpop.permute.xlu0 %2697
      %2731 = vst.msk [vmem:[#allocation2] sm:$0xff] %vm1028, %v2636
      %2732 = vst.msk [vmem:[#allocation2 + $0x8] sm:$0xff] %vm1028, %v2638
      %2733 = vst.msk [vmem:[#allocation2 + $0x10] sm:$0xff] %vm1028, %v2640
      %2734 = vst.msk [vmem:[#allocation2 + $0x18] sm:$0xff] %vm1028, %v2642
      %2735 = vst.msk [vmem:[#allocation2 + $0x20] sm:$0xff] %vm1028, %v2644
      %2736 = vst.msk [vmem:[#allocation2 + $0x28] sm:$0xff] %vm1028, %v2646
      %2737 = vst.msk [vmem:[#allocation2 + $0x30] sm:$0xff] %vm1028, %v2648
      %2738 = vst.msk [vmem:[#allocation2 + $0x38] sm:$0xff] %vm1028, %v2650
      %2739 = vst.msk [vmem:[#allocation2 + $0x40] sm:$0xff] %vm1028, %v2652
      %2740 = vst.msk [vmem:[#allocation2 + $0x48] sm:$0xff] %vm1028, %v2654
      %2741 = vst.msk [vmem:[#allocation2 + $0x50] sm:$0xff] %vm1028, %v2656
      %2742 = vst.msk [vmem:[#allocation2 + $0x58] sm:$0xff] %vm1028, %v2658
      %2743 = vst.msk [vmem:[#allocation2 + $0x60] sm:$0xff] %vm1028, %v2660
      %2744 = vst.msk [vmem:[#allocation2 + $0x68] sm:$0xff] %vm1028, %v2662
      %2745 = vst.msk [vmem:[#allocation2 + $0x70] sm:$0xff] %vm1028, %v2664
      %2746 = vst.msk [vmem:[#allocation2 + $0x78] sm:$0xff] %vm1028, %v2666
      %2747 = vst.msk [vmem:[#allocation2 + $0x80] sm:$0xff] %vm1028, %v2668
      %2748 = vst.msk [vmem:[#allocation2 + $0x88] sm:$0xff] %vm1028, %v2670
      %2749 = vst.msk [vmem:[#allocation2 + $0x90] sm:$0xff] %vm1028, %v2672
      %2750 = vst.msk [vmem:[#allocation2 + $0x98] sm:$0xff] %vm1028, %v2674
      %2751 = vst.msk [vmem:[#allocation2 + $0xa0] sm:$0xff] %vm1028, %v2676
      %2752 = vst.msk [vmem:[#allocation2 + $0xa8] sm:$0xff] %vm1028, %v2678
      %2753 = vst.msk [vmem:[#allocation2 + $0xb0] sm:$0xff] %vm1028, %v2680
      %2754 = vst.msk [vmem:[#allocation2 + $0xb8] sm:$0xff] %vm1028, %v2682
      %2755 = vst.msk [vmem:[#allocation2 + $0xc0] sm:$0xff] %vm1028, %v2684
      %2756 = vst.msk [vmem:[#allocation2 + $0xc8] sm:$0xff] %vm1028, %v2686
      %2757 = vst.msk [vmem:[#allocation2 + $0xd0] sm:$0xff] %vm1028, %v2688
      %2758 = vst.msk [vmem:[#allocation2 + $0xd8] sm:$0xff] %vm1028, %v2690
      %2759 = vst.msk [vmem:[#allocation2 + $0xe0] sm:$0xff] %vm1028, %v2692
      %2760 = vst.msk [vmem:[#allocation2 + $0xe8] sm:$0xff] %vm1028, %v2694
      %2761 = vst.msk [vmem:[#allocation2 + $0xf0] sm:$0xff] %vm1028, %v2696
      %2762 = vst.msk [vmem:[#allocation2 + $0xf8] sm:$0xff] %vm1028, %v2698
      %2795 = vrot.lane.b32.xlu0 %v2571, 16
      %v2796 = vpop.permute.xlu0 %2795
      %2797 = vrot.lane.b32.xlu0 %v2572, 16
      %v2798 = vpop.permute.xlu0 %2797
      %2799 = vrot.lane.b32.xlu0 %v2573, 16
      %v2800 = vpop.permute.xlu0 %2799
      %2801 = vrot.lane.b32.xlu0 %v2574, 16
      %v2802 = vpop.permute.xlu0 %2801
      %2803 = vrot.lane.b32.xlu0 %v2575, 16
      %v2804 = vpop.permute.xlu0 %2803
      %2805 = vrot.lane.b32.xlu0 %v2576, 16
      %v2806 = vpop.permute.xlu0 %2805
      %2807 = vrot.lane.b32.xlu0 %v2577, 16
      %v2808 = vpop.permute.xlu0 %2807
      %2809 = vrot.lane.b32.xlu0 %v2578, 16
      %v2810 = vpop.permute.xlu0 %2809
      %2811 = vrot.lane.b32.xlu0 %v2579, 16
      %v2812 = vpop.permute.xlu0 %2811
      %2813 = vrot.lane.b32.xlu0 %v2580, 16
      %v2814 = vpop.permute.xlu0 %2813
      %2815 = vrot.lane.b32.xlu0 %v2581, 16
      %v2816 = vpop.permute.xlu0 %2815
      %2817 = vrot.lane.b32.xlu0 %v2582, 16
      %v2818 = vpop.permute.xlu0 %2817
      %2819 = vrot.lane.b32.xlu0 %v2583, 16
      %v2820 = vpop.permute.xlu0 %2819
      %2821 = vrot.lane.b32.xlu0 %v2584, 16
      %v2822 = vpop.permute.xlu0 %2821
      %2823 = vrot.lane.b32.xlu0 %v2585, 16
      %v2824 = vpop.permute.xlu0 %2823
      %2825 = vrot.lane.b32.xlu0 %v2586, 16
      %v2826 = vpop.permute.xlu0 %2825
      %2827 = vrot.lane.b32.xlu0 %v2587, 16
      %v2828 = vpop.permute.xlu0 %2827
      %2829 = vrot.lane.b32.xlu0 %v2588, 16
      %v2830 = vpop.permute.xlu0 %2829
      %2831 = vrot.lane.b32.xlu0 %v2589, 16
      %v2832 = vpop.permute.xlu0 %2831
      %2833 = vrot.lane.b32.xlu0 %v2590, 16
      %v2834 = vpop.permute.xlu0 %2833
      %2835 = vrot.lane.b32.xlu0 %v2591, 16
      %v2836 = vpop.permute.xlu0 %2835
      %2837 = vrot.lane.b32.xlu0 %v2592, 16
      %v2838 = vpop.permute.xlu0 %2837
      %2839 = vrot.lane.b32.xlu0 %v2593, 16
      %v2840 = vpop.permute.xlu0 %2839
      %2841 = vrot.lane.b32.xlu0 %v2594, 16
      %v2842 = vpop.permute.xlu0 %2841
      %2843 = vrot.lane.b32.xlu0 %v2595, 16
      %v2844 = vpop.permute.xlu0 %2843
      %2845 = vrot.lane.b32.xlu0 %v2596, 16
      %v2846 = vpop.permute.xlu0 %2845
      %2847 = vrot.lane.b32.xlu0 %v2597, 16
      %v2848 = vpop.permute.xlu0 %2847
      %2849 = vrot.lane.b32.xlu0 %v2598, 16
      %v2850 = vpop.permute.xlu0 %2849
      %2851 = vrot.lane.b32.xlu0 %v2599, 16
      %v2852 = vpop.permute.xlu0 %2851
      %2853 = vrot.lane.b32.xlu0 %v2600, 16
      %v2854 = vpop.permute.xlu0 %2853
      %2855 = vrot.lane.b32.xlu0 %v2601, 16
      %v2856 = vpop.permute.xlu0 %2855
      %2857 = vrot.lane.b32.xlu0 %v2602, 16
      %v2858 = vpop.permute.xlu0 %2857
      %2891 = vst.msk [vmem:[#allocation2] sm:$0xff] %vm1189, %v2796
      %2892 = vst.msk [vmem:[#allocation2 + $0x8] sm:$0xff] %vm1189, %v2798
      %2893 = vst.msk [vmem:[#allocation2 + $0x10] sm:$0xff] %vm1189, %v2800
      %2894 = vst.msk [vmem:[#allocation2 + $0x18] sm:$0xff] %vm1189, %v2802
      %2895 = vst.msk [vmem:[#allocation2 + $0x20] sm:$0xff] %vm1189, %v2804
      %2896 = vst.msk [vmem:[#allocation2 + $0x28] sm:$0xff] %vm1189, %v2806
      %2897 = vst.msk [vmem:[#allocation2 + $0x30] sm:$0xff] %vm1189, %v2808
      %2898 = vst.msk [vmem:[#allocation2 + $0x38] sm:$0xff] %vm1189, %v2810
      %2899 = vst.msk [vmem:[#allocation2 + $0x40] sm:$0xff] %vm1189, %v2812
      %2900 = vst.msk [vmem:[#allocation2 + $0x48] sm:$0xff] %vm1189, %v2814
      %2901 = vst.msk [vmem:[#allocation2 + $0x50] sm:$0xff] %vm1189, %v2816
      %2902 = vst.msk [vmem:[#allocation2 + $0x58] sm:$0xff] %vm1189, %v2818
      %2903 = vst.msk [vmem:[#allocation2 + $0x60] sm:$0xff] %vm1189, %v2820
      %2904 = vst.msk [vmem:[#allocation2 + $0x68] sm:$0xff] %vm1189, %v2822
      %2905 = vst.msk [vmem:[#allocation2 + $0x70] sm:$0xff] %vm1189, %v2824
      %2906 = vst.msk [vmem:[#allocation2 + $0x78] sm:$0xff] %vm1189, %v2826
      %2907 = vst.msk [vmem:[#allocation2 + $0x80] sm:$0xff] %vm1189, %v2828
      %2908 = vst.msk [vmem:[#allocation2 + $0x88] sm:$0xff] %vm1189, %v2830
      %2909 = vst.msk [vmem:[#allocation2 + $0x90] sm:$0xff] %vm1189, %v2832
      %2910 = vst.msk [vmem:[#allocation2 + $0x98] sm:$0xff] %vm1189, %v2834
      %2911 = vst.msk [vmem:[#allocation2 + $0xa0] sm:$0xff] %vm1189, %v2836
      %2912 = vst.msk [vmem:[#allocation2 + $0xa8] sm:$0xff] %vm1189, %v2838
      %2913 = vst.msk [vmem:[#allocation2 + $0xb0] sm:$0xff] %vm1189, %v2840
      %2914 = vst.msk [vmem:[#allocation2 + $0xb8] sm:$0xff] %vm1189, %v2842
      %2915 = vst.msk [vmem:[#allocation2 + $0xc0] sm:$0xff] %vm1189, %v2844
      %2916 = vst.msk [vmem:[#allocation2 + $0xc8] sm:$0xff] %vm1189, %v2846
      %2917 = vst.msk [vmem:[#allocation2 + $0xd0] sm:$0xff] %vm1189, %v2848
      %2918 = vst.msk [vmem:[#allocation2 + $0xd8] sm:$0xff] %vm1189, %v2850
      %2919 = vst.msk [vmem:[#allocation2 + $0xe0] sm:$0xff] %vm1189, %v2852
      %2920 = vst.msk [vmem:[#allocation2 + $0xe8] sm:$0xff] %vm1189, %v2854
      %2921 = vst.msk [vmem:[#allocation2 + $0xf0] sm:$0xff] %vm1189, %v2856
      %2922 = vst.msk [vmem:[#allocation2 + $0xf8] sm:$0xff] %vm1189, %v2858
      %v2923 = vld [vmem:[#allocation2] sm:$0xff]
      %v2924 = vld [vmem:[#allocation2 + $0x8] sm:$0xff]
      %v2925 = vld [vmem:[#allocation2 + $0x10] sm:$0xff]
      %v2926 = vld [vmem:[#allocation2 + $0x18] sm:$0xff]
      %v2927 = vld [vmem:[#allocation2 + $0x20] sm:$0xff]
      %v2928 = vld [vmem:[#allocation2 + $0x28] sm:$0xff]
      %v2929 = vld [vmem:[#allocation2 + $0x30] sm:$0xff]
      %v2930 = vld [vmem:[#allocation2 + $0x38] sm:$0xff]
      %v2931 = vld [vmem:[#allocation2 + $0x40] sm:$0xff]
      %v2932 = vld [vmem:[#allocation2 + $0x48] sm:$0xff]
      %v2933 = vld [vmem:[#allocation2 + $0x50] sm:$0xff]
      %v2934 = vld [vmem:[#allocation2 + $0x58] sm:$0xff]
      %v2935 = vld [vmem:[#allocation2 + $0x60] sm:$0xff]
      %v2936 = vld [vmem:[#allocation2 + $0x68] sm:$0xff]
      %v2937 = vld [vmem:[#allocation2 + $0x70] sm:$0xff]
      %v2938 = vld [vmem:[#allocation2 + $0x78] sm:$0xff]
      %v2939 = vld [vmem:[#allocation2 + $0x80] sm:$0xff]
      %v2940 = vld [vmem:[#allocation2 + $0x88] sm:$0xff]
      %v2941 = vld [vmem:[#allocation2 + $0x90] sm:$0xff]
      %v2942 = vld [vmem:[#allocation2 + $0x98] sm:$0xff]
      %v2943 = vld [vmem:[#allocation2 + $0xa0] sm:$0xff]
      %v2944 = vld [vmem:[#allocation2 + $0xa8] sm:$0xff]
      %v2945 = vld [vmem:[#allocation2 + $0xb0] sm:$0xff]
      %v2946 = vld [vmem:[#allocation2 + $0xb8] sm:$0xff]
      %v2947 = vld [vmem:[#allocation2 + $0xc0] sm:$0xff]
      %v2948 = vld [vmem:[#allocation2 + $0xc8] sm:$0xff]
      %v2949 = vld [vmem:[#allocation2 + $0xd0] sm:$0xff]
      %v2950 = vld [vmem:[#allocation2 + $0xd8] sm:$0xff]
      %v2951 = vld [vmem:[#allocation2 + $0xe0] sm:$0xff]
      %v2952 = vld [vmem:[#allocation2 + $0xe8] sm:$0xff]
      %v2953 = vld [vmem:[#allocation2 + $0xf0] sm:$0xff]
      %v2954 = vld [vmem:[#allocation2 + $0xf8] sm:$0xff]
      %s2955 = scalar_lea.vmem %s4, 24
      %v2956 = vld [vmem:[%s2955] sm:$0xff]
      %v2957 = vld [vmem:[%s2955 + $0x8] sm:$0xff]
      %v2958 = vld [vmem:[%s2955 + $0x10] sm:$0xff]
      %v2959 = vmul.f32 %v2953, %v1260
      %v2960 = vmul.f32 %v2954, %v1264
      %v2961 = vmul.f32 %v2923, %v1268
      %v2962 = vmul.f32 %v2924, %v1272
      %v2963 = vmul.f32 %v2925, %v1276
      %v2964 = vmul.f32 %v2926, %v1280
      %v2965 = vmul.f32 %v2927, %v1284
      %v2966 = vmul.f32 %v2928, %v1288
      %v2967 = vmul.f32 %v2929, %v1292
      %v2968 = vmul.f32 %v2930, %v1296
      %v2969 = vmul.f32 %v2931, %v1300
      %v2970 = vmul.f32 %v2932, %v1304
      %v2971 = vmul.f32 %v2933, %v1308
      %v2972 = vmul.f32 %v2934, %v1312
      %v2973 = vmul.f32 %v2935, %v1316
      %v2974 = vmul.f32 %v2936, %v1320
      %v2975 = vmul.f32 %v2937, %v1324
      %v2976 = vmul.f32 %v2938, %v1328
      %v2977 = vmul.f32 %v2939, %v1332
      %v2978 = vmul.f32 %v2940, %v1336
      %v2979 = vmul.f32 %v2941, %v1340
      %v2980 = vmul.f32 %v2942, %v1344
      %v2981 = vmul.f32 %v2943, %v1348
      %v2982 = vmul.f32 %v2944, %v1352
      %v2983 = vmul.f32 %v2945, %v1356
      %v2984 = vmul.f32 %v2946, %v1360
      %v2985 = vmul.f32 %v2947, %v1364
      %v2986 = vmul.f32 %v2948, %v1368
      %v2987 = vmul.f32 %v2949, %v1372
      %v2988 = vmul.f32 %v2950, %v1376
      %v2989 = vmul.f32 %v2951, %v1380
      %v2990 = vmul.f32 %v2952, %v1384
      %v2991 = vld [vmem:[%s4] sm:$0xff]
      %v2992 = vld [vmem:[%s4 + $0x8] sm:$0xff]
      %v2993 = vld [vmem:[%s4 + $0x10] sm:$0xff]
      %v2995 = vsel %vm1421, %v2959, 0
      %v2998 = vsel %vm1421, %v2960, 0
      %v3001 = vsel %vm1421, %v2961, 0
      %v3004 = vsel %vm1421, %v2962, 0
      %v3007 = vsel %vm1421, %v2963, 0
      %v3010 = vsel %vm1421, %v2964, 0
      %v3013 = vsel %vm1421, %v2965, 0
      %v3016 = vsel %vm1421, %v2966, 0
      %v3019 = vsel %vm1421, %v2967, 0
      %v3022 = vsel %vm1421, %v2968, 0
      %v3025 = vsel %vm1421, %v2969, 0
      %v3028 = vsel %vm1421, %v2970, 0
      %v3031 = vsel %vm1421, %v2971, 0
      %v3034 = vsel %vm1421, %v2972, 0
      %v3037 = vsel %vm1421, %v2973, 0
      %v3040 = vsel %vm1421, %v2974, 0
      %v3043 = vsel %vm1421, %v2975, 0
      %v3046 = vsel %vm1421, %v2976, 0
      %v3049 = vsel %vm1421, %v2977, 0
      %v3052 = vsel %vm1421, %v2978, 0
      %v3055 = vsel %vm1421, %v2979, 0
      %v3058 = vsel %vm1421, %v2980, 0
      %v3061 = vsel %vm1421, %v2981, 0
      %v3064 = vsel %vm1421, %v2982, 0
      %v3067 = vsel %vm1421, %v2983, 0
      %v3070 = vsel %vm1421, %v2984, 0
      %v3073 = vsel %vm1421, %v2985, 0
      %v3076 = vsel %vm1421, %v2986, 0
      %v3079 = vsel %vm1421, %v2987, 0
      %v3082 = vsel %vm1421, %v2988, 0
      %v3085 = vsel %vm1421, %v2989, 0
      %v3088 = vsel %vm1421, %v2990, 0
      %3090 = vmatpush.msra.mxu0 0.0
      %3091 = vmatpush.msra.mxu0 0.0
      %3092 = vmatpush.msra.mxu0 0.0
      %3093 = vmatpush.msra.mxu0 0.0
      %3094 = vmatpush.msra.mxu0 0.0
      %3095 = vmatpush.msra.mxu0 0.0
      %3096 = vmatpush.msra.mxu0 0.0
      %3097 = vmatpush.msra.mxu0 0.0
      %3098 = vmatpush.msra.mxu0 0.0
      %3099 = vmatpush.msra.mxu0 0.0
      %3100 = vmatpush.msra.mxu0 0.0
      %3101 = vmatpush.msra.mxu0 0.0
      %3102 = vmatpush.msra.mxu0 0.0
      %3103 = vmatpush.msra.mxu0 %v2993
      %3104 = vmatpush.msra.mxu0 %v2992
      %3105 = vmatpush.msra.mxu0 %v2991
      %3106 = vmatmul.f32.gmra.mxu0 %v2995
      %v3107 = vpop.f32.mrf.mxu0
      %v3108 = vadd.f32 0.0, %v3107
      %3109 = vmatmul.f32.gmra.mxu0 %v2998
      %v3110 = vpop.f32.mrf.mxu0
      %v3111 = vadd.f32 0.0, %v3110
      %3112 = vmatmul.f32.gmra.mxu0 %v3001
      %v3113 = vpop.f32.mrf.mxu0
      %v3114 = vadd.f32 0.0, %v3113
      %3115 = vmatmul.f32.gmra.mxu0 %v3004
      %v3116 = vpop.f32.mrf.mxu0
      %v3117 = vadd.f32 0.0, %v3116
      %3118 = vmatmul.f32.gmra.mxu0 %v3007
      %v3119 = vpop.f32.mrf.mxu0
      %v3120 = vadd.f32 0.0, %v3119
      %3121 = vmatmul.f32.gmra.mxu0 %v3010
      %v3122 = vpop.f32.mrf.mxu0
      %v3123 = vadd.f32 0.0, %v3122
      %3124 = vmatmul.f32.gmra.mxu0 %v3013
      %v3125 = vpop.f32.mrf.mxu0
      %v3126 = vadd.f32 0.0, %v3125
      %3127 = vmatmul.f32.gmra.mxu0 %v3016
      %v3128 = vpop.f32.mrf.mxu0
      %v3129 = vadd.f32 0.0, %v3128
      %3130 = vmatmul.f32.gmra.mxu0 %v3019
      %v3131 = vpop.f32.mrf.mxu0
      %v3132 = vadd.f32 0.0, %v3131
      %3133 = vmatmul.f32.gmra.mxu0 %v3022
      %v3134 = vpop.f32.mrf.mxu0
      %v3135 = vadd.f32 0.0, %v3134
      %3136 = vmatmul.f32.gmra.mxu0 %v3025
      %v3137 = vpop.f32.mrf.mxu0
      %v3138 = vadd.f32 0.0, %v3137
      %3139 = vmatmul.f32.gmra.mxu0 %v3028
      %v3140 = vpop.f32.mrf.mxu0
      %v3141 = vadd.f32 0.0, %v3140
      %3142 = vmatmul.f32.gmra.mxu0 %v3031
      %v3143 = vpop.f32.mrf.mxu0
      %v3144 = vadd.f32 0.0, %v3143
      %3145 = vmatmul.f32.gmra.mxu0 %v3034
      %v3146 = vpop.f32.mrf.mxu0
      %v3147 = vadd.f32 0.0, %v3146
      %3148 = vmatmul.f32.gmra.mxu0 %v3037
      %v3149 = vpop.f32.mrf.mxu0
      %v3150 = vadd.f32 0.0, %v3149
      %3151 = vmatmul.f32.gmra.mxu0 %v3040
      %v3152 = vpop.f32.mrf.mxu0
      %v3153 = vadd.f32 0.0, %v3152
      %3154 = vmatmul.f32.gmra.mxu0 %v3043
      %v3155 = vpop.f32.mrf.mxu0
      %v3156 = vadd.f32 0.0, %v3155
      %3157 = vmatmul.f32.gmra.mxu0 %v3046
      %v3158 = vpop.f32.mrf.mxu0
      %v3159 = vadd.f32 0.0, %v3158
      %3160 = vmatmul.f32.gmra.mxu0 %v3049
      %v3161 = vpop.f32.mrf.mxu0
      %v3162 = vadd.f32 0.0, %v3161
      %3163 = vmatmul.f32.gmra.mxu0 %v3052
      %v3164 = vpop.f32.mrf.mxu0
      %v3165 = vadd.f32 0.0, %v3164
      %3166 = vmatmul.f32.gmra.mxu0 %v3055
      %v3167 = vpop.f32.mrf.mxu0
      %v3168 = vadd.f32 0.0, %v3167
      %3169 = vmatmul.f32.gmra.mxu0 %v3058
      %v3170 = vpop.f32.mrf.mxu0
      %v3171 = vadd.f32 0.0, %v3170
      %3172 = vmatmul.f32.gmra.mxu0 %v3061
      %v3173 = vpop.f32.mrf.mxu0
      %v3174 = vadd.f32 0.0, %v3173
      %3175 = vmatmul.f32.gmra.mxu0 %v3064
      %v3176 = vpop.f32.mrf.mxu0
      %v3177 = vadd.f32 0.0, %v3176
      %3178 = vmatmul.f32.gmra.mxu0 %v3067
      %v3179 = vpop.f32.mrf.mxu0
      %v3180 = vadd.f32 0.0, %v3179
      %3181 = vmatmul.f32.gmra.mxu0 %v3070
      %v3182 = vpop.f32.mrf.mxu0
      %v3183 = vadd.f32 0.0, %v3182
      %3184 = vmatmul.f32.gmra.mxu0 %v3073
      %v3185 = vpop.f32.mrf.mxu0
      %v3186 = vadd.f32 0.0, %v3185
      %3187 = vmatmul.f32.gmra.mxu0 %v3076
      %v3188 = vpop.f32.mrf.mxu0
      %v3189 = vadd.f32 0.0, %v3188
      %3190 = vmatmul.f32.gmra.mxu0 %v3079
      %v3191 = vpop.f32.mrf.mxu0
      %v3192 = vadd.f32 0.0, %v3191
      %3193 = vmatmul.f32.gmra.mxu0 %v3082
      %v3194 = vpop.f32.mrf.mxu0
      %v3195 = vadd.f32 0.0, %v3194
      %3196 = vmatmul.f32.gmra.mxu0 %v3085
      %v3197 = vpop.f32.mrf.mxu0
      %v3198 = vadd.f32 0.0, %v3197
      %3199 = vmatmul.f32.gmra.mxu0 %v3088
      %v3200 = vpop.f32.mrf.mxu0
      %v3201 = vadd.f32 0.0, %v3200
      %3202 = vdwg.mxu0
      %v3204 = vsel %vm1421, %v2923, 0
      %v3207 = vsel %vm1421, %v2924, 0
      %v3210 = vsel %vm1421, %v2925, 0
      %v3213 = vsel %vm1421, %v2926, 0
      %v3216 = vsel %vm1421, %v2927, 0
      %v3219 = vsel %vm1421, %v2928, 0
      %v3222 = vsel %vm1421, %v2929, 0
      %v3225 = vsel %vm1421, %v2930, 0
      %v3228 = vsel %vm1421, %v2931, 0
      %v3231 = vsel %vm1421, %v2932, 0
      %v3234 = vsel %vm1421, %v2933, 0
      %v3237 = vsel %vm1421, %v2934, 0
      %v3240 = vsel %vm1421, %v2935, 0
      %v3243 = vsel %vm1421, %v2936, 0
      %v3246 = vsel %vm1421, %v2937, 0
      %v3249 = vsel %vm1421, %v2938, 0
      %v3252 = vsel %vm1421, %v2939, 0
      %v3255 = vsel %vm1421, %v2940, 0
      %v3258 = vsel %vm1421, %v2941, 0
      %v3261 = vsel %vm1421, %v2942, 0
      %v3264 = vsel %vm1421, %v2943, 0
      %v3267 = vsel %vm1421, %v2944, 0
      %v3270 = vsel %vm1421, %v2945, 0
      %v3273 = vsel %vm1421, %v2946, 0
      %v3276 = vsel %vm1421, %v2947, 0
      %v3279 = vsel %vm1421, %v2948, 0
      %v3282 = vsel %vm1421, %v2949, 0
      %v3285 = vsel %vm1421, %v2950, 0
      %v3288 = vsel %vm1421, %v2951, 0
      %v3291 = vsel %vm1421, %v2952, 0
      %v3294 = vsel %vm1421, %v2953, 0
      %v3297 = vsel %vm1421, %v2954, 0
      %3299 = vmatpush.msra.mxu0 0.0
      %3300 = vmatpush.msra.mxu0 0.0
      %3301 = vmatpush.msra.mxu0 0.0
      %3302 = vmatpush.msra.mxu0 0.0
      %3303 = vmatpush.msra.mxu0 0.0
      %3304 = vmatpush.msra.mxu0 0.0
      %3305 = vmatpush.msra.mxu0 0.0
      %3306 = vmatpush.msra.mxu0 0.0
      %3307 = vmatpush.msra.mxu0 0.0
      %3308 = vmatpush.msra.mxu0 0.0
      %3309 = vmatpush.msra.mxu0 0.0
      %3310 = vmatpush.msra.mxu0 0.0
      %3311 = vmatpush.msra.mxu0 0.0
      %3312 = vmatpush.msra.mxu0 %v2958
      %3313 = vmatpush.msra.mxu0 %v2957
      %3314 = vmatpush.msra.mxu0 %v2956
      %3315 = vmatmul.f32.gmra.mxu0 %v3204
      %v3316 = vpop.f32.mrf.mxu0
      %v3317 = vadd.f32 %v3108, %v3316
      %3318 = vmatmul.f32.gmra.mxu0 %v3207
      %v3319 = vpop.f32.mrf.mxu0
      %v3320 = vadd.f32 %v3111, %v3319
      %3321 = vmatmul.f32.gmra.mxu0 %v3210
      %v3322 = vpop.f32.mrf.mxu0
      %v3323 = vadd.f32 %v3114, %v3322
      %3324 = vmatmul.f32.gmra.mxu0 %v3213
      %v3325 = vpop.f32.mrf.mxu0
      %v3326 = vadd.f32 %v3117, %v3325
      %3327 = vmatmul.f32.gmra.mxu0 %v3216
      %v3328 = vpop.f32.mrf.mxu0
      %v3329 = vadd.f32 %v3120, %v3328
      %3330 = vmatmul.f32.gmra.mxu0 %v3219
      %v3331 = vpop.f32.mrf.mxu0
      %v3332 = vadd.f32 %v3123, %v3331
      %3333 = vmatmul.f32.gmra.mxu0 %v3222
      %v3334 = vpop.f32.mrf.mxu0
      %v3335 = vadd.f32 %v3126, %v3334
      %3336 = vmatmul.f32.gmra.mxu0 %v3225
      %v3337 = vpop.f32.mrf.mxu0
      %v3338 = vadd.f32 %v3129, %v3337
      %3339 = vmatmul.f32.gmra.mxu0 %v3228
      %v3340 = vpop.f32.mrf.mxu0
      %v3341 = vadd.f32 %v3132, %v3340
      %3342 = vmatmul.f32.gmra.mxu0 %v3231
      %v3343 = vpop.f32.mrf.mxu0
      %v3344 = vadd.f32 %v3135, %v3343
      %3345 = vmatmul.f32.gmra.mxu0 %v3234
      %v3346 = vpop.f32.mrf.mxu0
      %v3347 = vadd.f32 %v3138, %v3346
      %3348 = vmatmul.f32.gmra.mxu0 %v3237
      %v3349 = vpop.f32.mrf.mxu0
      %v3350 = vadd.f32 %v3141, %v3349
      %3351 = vmatmul.f32.gmra.mxu0 %v3240
      %v3352 = vpop.f32.mrf.mxu0
      %v3353 = vadd.f32 %v3144, %v3352
      %3354 = vmatmul.f32.gmra.mxu0 %v3243
      %v3355 = vpop.f32.mrf.mxu0
      %v3356 = vadd.f32 %v3147, %v3355
      %3357 = vmatmul.f32.gmra.mxu0 %v3246
      %v3358 = vpop.f32.mrf.mxu0
      %v3359 = vadd.f32 %v3150, %v3358
      %3360 = vmatmul.f32.gmra.mxu0 %v3249
      %v3361 = vpop.f32.mrf.mxu0
      %v3362 = vadd.f32 %v3153, %v3361
      %3363 = vmatmul.f32.gmra.mxu0 %v3252
      %v3364 = vpop.f32.mrf.mxu0
      %v3365 = vadd.f32 %v3156, %v3364
      %3366 = vmatmul.f32.gmra.mxu0 %v3255
      %v3367 = vpop.f32.mrf.mxu0
      %v3368 = vadd.f32 %v3159, %v3367
      %3369 = vmatmul.f32.gmra.mxu0 %v3258
      %v3370 = vpop.f32.mrf.mxu0
      %v3371 = vadd.f32 %v3162, %v3370
      %3372 = vmatmul.f32.gmra.mxu0 %v3261
      %v3373 = vpop.f32.mrf.mxu0
      %v3374 = vadd.f32 %v3165, %v3373
      %3375 = vmatmul.f32.gmra.mxu0 %v3264
      %v3376 = vpop.f32.mrf.mxu0
      %v3377 = vadd.f32 %v3168, %v3376
      %3378 = vmatmul.f32.gmra.mxu0 %v3267
      %v3379 = vpop.f32.mrf.mxu0
      %v3380 = vadd.f32 %v3171, %v3379
      %3381 = vmatmul.f32.gmra.mxu0 %v3270
      %v3382 = vpop.f32.mrf.mxu0
      %v3383 = vadd.f32 %v3174, %v3382
      %3384 = vmatmul.f32.gmra.mxu0 %v3273
      %v3385 = vpop.f32.mrf.mxu0
      %v3386 = vadd.f32 %v3177, %v3385
      %3387 = vmatmul.f32.gmra.mxu0 %v3276
      %v3388 = vpop.f32.mrf.mxu0
      %v3389 = vadd.f32 %v3180, %v3388
      %3390 = vmatmul.f32.gmra.mxu0 %v3279
      %v3391 = vpop.f32.mrf.mxu0
      %v3392 = vadd.f32 %v3183, %v3391
      %3393 = vmatmul.f32.gmra.mxu0 %v3282
      %v3394 = vpop.f32.mrf.mxu0
      %v3395 = vadd.f32 %v3186, %v3394
      %3396 = vmatmul.f32.gmra.mxu0 %v3285
      %v3397 = vpop.f32.mrf.mxu0
      %v3398 = vadd.f32 %v3189, %v3397
      %3399 = vmatmul.f32.gmra.mxu0 %v3288
      %v3400 = vpop.f32.mrf.mxu0
      %v3401 = vadd.f32 %v3192, %v3400
      %3402 = vmatmul.f32.gmra.mxu0 %v3291
      %v3403 = vpop.f32.mrf.mxu0
      %v3404 = vadd.f32 %v3195, %v3403
      %3405 = vmatmul.f32.gmra.mxu0 %v3294
      %v3406 = vpop.f32.mrf.mxu0
      %v3407 = vadd.f32 %v3198, %v3406
      %3408 = vmatmul.f32.gmra.mxu0 %v3297
      %v3409 = vpop.f32.mrf.mxu0
      %v3410 = vadd.f32 %v3201, %v3409
      %3411 = vdwg.mxu0
      %v3412 = vmul.f32 %v2925, %v1842
      %v3413 = vmul.f32 %v2926, %v1846
      %v3414 = vmul.f32 %v2927, %v1850
      %v3415 = vmul.f32 %v2928, %v1854
      %v3416 = vmul.f32 %v2929, %v1858
      %v3417 = vmul.f32 %v2930, %v1862
      %v3418 = vmul.f32 %v2931, %v1866
      %v3419 = vmul.f32 %v2932, %v1870
      %v3420 = vmul.f32 %v2933, %v1874
      %v3421 = vmul.f32 %v2934, %v1878
      %v3422 = vmul.f32 %v2935, %v1882
      %v3423 = vmul.f32 %v2936, %v1886
      %v3424 = vmul.f32 %v2937, %v1890
      %v3425 = vmul.f32 %v2938, %v1894
      %v3426 = vmul.f32 %v2939, %v1898
      %v3427 = vmul.f32 %v2940, %v1902
      %v3428 = vmul.f32 %v2941, %v1906
      %v3429 = vmul.f32 %v2942, %v1910
      %v3430 = vmul.f32 %v2943, %v1914
      %v3431 = vmul.f32 %v2944, %v1918
      %v3432 = vmul.f32 %v2945, %v1922
      %v3433 = vmul.f32 %v2946, %v1926
      %v3434 = vmul.f32 %v2947, %v1930
      %v3435 = vmul.f32 %v2948, %v1934
      %v3436 = vmul.f32 %v2949, %v1938
      %v3437 = vmul.f32 %v2950, %v1942
      %v3438 = vmul.f32 %v2951, %v1946
      %v3439 = vmul.f32 %v2952, %v1950
      %v3440 = vmul.f32 %v2953, %v1954
      %v3441 = vmul.f32 %v2954, %v1958
      %v3442 = vmul.f32 %v2923, %v1962
      %v3443 = vmul.f32 %v2924, %v1966
      %s3444 = scalar_lea.vmem %s4, 48
      %v3445 = vld [vmem:[%s3444] sm:$0xff]
      %v3446 = vld [vmem:[%s3444 + $0x8] sm:$0xff]
      %v3447 = vld [vmem:[%s3444 + $0x10] sm:$0xff]
      %v3449 = vsel %vm1421, %v3412, 0
      %v3452 = vsel %vm1421, %v3413, 0
      %v3455 = vsel %vm1421, %v3414, 0
      %v3458 = vsel %vm1421, %v3415, 0
      %v3461 = vsel %vm1421, %v3416, 0
      %v3464 = vsel %vm1421, %v3417, 0
      %v3467 = vsel %vm1421, %v3418, 0
      %v3470 = vsel %vm1421, %v3419, 0
      %v3473 = vsel %vm1421, %v3420, 0
      %v3476 = vsel %vm1421, %v3421, 0
      %v3479 = vsel %vm1421, %v3422, 0
      %v3482 = vsel %vm1421, %v3423, 0
      %v3485 = vsel %vm1421, %v3424, 0
      %v3488 = vsel %vm1421, %v3425, 0
      %v3491 = vsel %vm1421, %v3426, 0
      %v3494 = vsel %vm1421, %v3427, 0
      %v3497 = vsel %vm1421, %v3428, 0
      %v3500 = vsel %vm1421, %v3429, 0
      %v3503 = vsel %vm1421, %v3430, 0
      %v3506 = vsel %vm1421, %v3431, 0
      %v3509 = vsel %vm1421, %v3432, 0
      %v3512 = vsel %vm1421, %v3433, 0
      %v3515 = vsel %vm1421, %v3434, 0
      %v3518 = vsel %vm1421, %v3435, 0
      %v3521 = vsel %vm1421, %v3436, 0
      %v3524 = vsel %vm1421, %v3437, 0
      %v3527 = vsel %vm1421, %v3438, 0
      %v3530 = vsel %vm1421, %v3439, 0
      %v3533 = vsel %vm1421, %v3440, 0
      %v3536 = vsel %vm1421, %v3441, 0
      %v3539 = vsel %vm1421, %v3442, 0
      %v3542 = vsel %vm1421, %v3443, 0
      %3544 = vmatpush.msra.mxu0 0.0
      %3545 = vmatpush.msra.mxu0 0.0
      %3546 = vmatpush.msra.mxu0 0.0
      %3547 = vmatpush.msra.mxu0 0.0
      %3548 = vmatpush.msra.mxu0 0.0
      %3549 = vmatpush.msra.mxu0 0.0
      %3550 = vmatpush.msra.mxu0 0.0
      %3551 = vmatpush.msra.mxu0 0.0
      %3552 = vmatpush.msra.mxu0 0.0
      %3553 = vmatpush.msra.mxu0 0.0
      %3554 = vmatpush.msra.mxu0 0.0
      %3555 = vmatpush.msra.mxu0 0.0
      %3556 = vmatpush.msra.mxu0 0.0
      %3557 = vmatpush.msra.mxu0 %v3447
      %3558 = vmatpush.msra.mxu0 %v3446
      %3559 = vmatpush.msra.mxu0 %v3445
      %3560 = vmatmul.f32.gmra.mxu0 %v3449
      %v3561 = vpop.f32.mrf.mxu0
      %v3562 = vadd.f32 0.0, %v3561
      %3563 = vmatmul.f32.gmra.mxu0 %v3452
      %v3564 = vpop.f32.mrf.mxu0
      %v3565 = vadd.f32 0.0, %v3564
      %3566 = vmatmul.f32.gmra.mxu0 %v3455
      %v3567 = vpop.f32.mrf.mxu0
      %v3568 = vadd.f32 0.0, %v3567
      %3569 = vmatmul.f32.gmra.mxu0 %v3458
      %v3570 = vpop.f32.mrf.mxu0
      %v3571 = vadd.f32 0.0, %v3570
      %3572 = vmatmul.f32.gmra.mxu0 %v3461
      %v3573 = vpop.f32.mrf.mxu0
      %v3574 = vadd.f32 0.0, %v3573
      %3575 = vmatmul.f32.gmra.mxu0 %v3464
      %v3576 = vpop.f32.mrf.mxu0
      %v3577 = vadd.f32 0.0, %v3576
      %3578 = vmatmul.f32.gmra.mxu0 %v3467
      %v3579 = vpop.f32.mrf.mxu0
      %v3580 = vadd.f32 0.0, %v3579
      %3581 = vmatmul.f32.gmra.mxu0 %v3470
      %v3582 = vpop.f32.mrf.mxu0
      %v3583 = vadd.f32 0.0, %v3582
      %3584 = vmatmul.f32.gmra.mxu0 %v3473
      %v3585 = vpop.f32.mrf.mxu0
      %v3586 = vadd.f32 0.0, %v3585
      %3587 = vmatmul.f32.gmra.mxu0 %v3476
      %v3588 = vpop.f32.mrf.mxu0
      %v3589 = vadd.f32 0.0, %v3588
      %3590 = vmatmul.f32.gmra.mxu0 %v3479
      %v3591 = vpop.f32.mrf.mxu0
      %v3592 = vadd.f32 0.0, %v3591
      %3593 = vmatmul.f32.gmra.mxu0 %v3482
      %v3594 = vpop.f32.mrf.mxu0
      %v3595 = vadd.f32 0.0, %v3594
      %3596 = vmatmul.f32.gmra.mxu0 %v3485
      %v3597 = vpop.f32.mrf.mxu0
      %v3598 = vadd.f32 0.0, %v3597
      %3599 = vmatmul.f32.gmra.mxu0 %v3488
      %v3600 = vpop.f32.mrf.mxu0
      %v3601 = vadd.f32 0.0, %v3600
      %3602 = vmatmul.f32.gmra.mxu0 %v3491
      %v3603 = vpop.f32.mrf.mxu0
      %v3604 = vadd.f32 0.0, %v3603
      %3605 = vmatmul.f32.gmra.mxu0 %v3494
      %v3606 = vpop.f32.mrf.mxu0
      %v3607 = vadd.f32 0.0, %v3606
      %3608 = vmatmul.f32.gmra.mxu0 %v3497
      %v3609 = vpop.f32.mrf.mxu0
      %v3610 = vadd.f32 0.0, %v3609
      %3611 = vmatmul.f32.gmra.mxu0 %v3500
      %v3612 = vpop.f32.mrf.mxu0
      %v3613 = vadd.f32 0.0, %v3612
      %3614 = vmatmul.f32.gmra.mxu0 %v3503
      %v3615 = vpop.f32.mrf.mxu0
      %v3616 = vadd.f32 0.0, %v3615
      %3617 = vmatmul.f32.gmra.mxu0 %v3506
      %v3618 = vpop.f32.mrf.mxu0
      %v3619 = vadd.f32 0.0, %v3618
      %3620 = vmatmul.f32.gmra.mxu0 %v3509
      %v3621 = vpop.f32.mrf.mxu0
      %v3622 = vadd.f32 0.0, %v3621
      %3623 = vmatmul.f32.gmra.mxu0 %v3512
      %v3624 = vpop.f32.mrf.mxu0
      %v3625 = vadd.f32 0.0, %v3624
      %3626 = vmatmul.f32.gmra.mxu0 %v3515
      %v3627 = vpop.f32.mrf.mxu0
      %v3628 = vadd.f32 0.0, %v3627
      %3629 = vmatmul.f32.gmra.mxu0 %v3518
      %v3630 = vpop.f32.mrf.mxu0
      %v3631 = vadd.f32 0.0, %v3630
      %3632 = vmatmul.f32.gmra.mxu0 %v3521
      %v3633 = vpop.f32.mrf.mxu0
      %v3634 = vadd.f32 0.0, %v3633
      %3635 = vmatmul.f32.gmra.mxu0 %v3524
      %v3636 = vpop.f32.mrf.mxu0
      %v3637 = vadd.f32 0.0, %v3636
      %3638 = vmatmul.f32.gmra.mxu0 %v3527
      %v3639 = vpop.f32.mrf.mxu0
      %v3640 = vadd.f32 0.0, %v3639
      %3641 = vmatmul.f32.gmra.mxu0 %v3530
      %v3642 = vpop.f32.mrf.mxu0
      %v3643 = vadd.f32 0.0, %v3642
      %3644 = vmatmul.f32.gmra.mxu0 %v3533
      %v3645 = vpop.f32.mrf.mxu0
      %v3646 = vadd.f32 0.0, %v3645
      %3647 = vmatmul.f32.gmra.mxu0 %v3536
      %v3648 = vpop.f32.mrf.mxu0
      %v3649 = vadd.f32 0.0, %v3648
      %3650 = vmatmul.f32.gmra.mxu0 %v3539
      %v3651 = vpop.f32.mrf.mxu0
      %v3652 = vadd.f32 0.0, %v3651
      %3653 = vmatmul.f32.gmra.mxu0 %v3542
      %v3654 = vpop.f32.mrf.mxu0
      %v3655 = vadd.f32 0.0, %v3654
      %3656 = vdwg.mxu0
      %v3657 = vadd.f32 %v3317, %v3562
      %v3658 = vadd.f32 %v3320, %v3565
      %v3659 = vadd.f32 %v3323, %v3568
      %v3660 = vadd.f32 %v3326, %v3571
      %v3661 = vadd.f32 %v3329, %v3574
      %v3662 = vadd.f32 %v3332, %v3577
      %v3663 = vadd.f32 %v3335, %v3580
      %v3664 = vadd.f32 %v3338, %v3583
      %v3665 = vadd.f32 %v3341, %v3586
      %v3666 = vadd.f32 %v3344, %v3589
      %v3667 = vadd.f32 %v3347, %v3592
      %v3668 = vadd.f32 %v3350, %v3595
      %v3669 = vadd.f32 %v3353, %v3598
      %v3670 = vadd.f32 %v3356, %v3601
      %v3671 = vadd.f32 %v3359, %v3604
      %v3672 = vadd.f32 %v3362, %v3607
      %v3673 = vadd.f32 %v3365, %v3610
      %v3674 = vadd.f32 %v3368, %v3613
      %v3675 = vadd.f32 %v3371, %v3616
      %v3676 = vadd.f32 %v3374, %v3619
      %v3677 = vadd.f32 %v3377, %v3622
      %v3678 = vadd.f32 %v3380, %v3625
      %v3679 = vadd.f32 %v3383, %v3628
      %v3680 = vadd.f32 %v3386, %v3631
      %v3681 = vadd.f32 %v3389, %v3634
      %v3682 = vadd.f32 %v3392, %v3637
      %v3683 = vadd.f32 %v3395, %v3640
      %v3684 = vadd.f32 %v3398, %v3643
      %v3685 = vadd.f32 %v3401, %v3646
      %v3686 = vadd.f32 %v3404, %v3649
      %v3687 = vadd.f32 %v3407, %v3652
      %v3688 = vadd.f32 %v3410, %v3655
      %v3689 = vld [vmem:[%s5] sm:$0x1]
      %v3691 = vperm.slane %v3689, 0
      %v3693 = vadd.f32 %v3657, %v3691
      %v3694 = vadd.f32 %v3658, %v3691
      %v3695 = vadd.f32 %v3659, %v3691
      %v3696 = vadd.f32 %v3660, %v3691
      %v3697 = vadd.f32 %v3661, %v3691
      %v3698 = vadd.f32 %v3662, %v3691
      %v3699 = vadd.f32 %v3663, %v3691
      %v3700 = vadd.f32 %v3664, %v3691
      %v3701 = vadd.f32 %v3665, %v3691
      %v3702 = vadd.f32 %v3666, %v3691
      %v3703 = vadd.f32 %v3667, %v3691
      %v3704 = vadd.f32 %v3668, %v3691
      %v3705 = vadd.f32 %v3669, %v3691
      %v3706 = vadd.f32 %v3670, %v3691
      %v3707 = vadd.f32 %v3671, %v3691
      %v3708 = vadd.f32 %v3672, %v3691
      %v3709 = vadd.f32 %v3673, %v3691
      %v3710 = vadd.f32 %v3674, %v3691
      %v3711 = vadd.f32 %v3675, %v3691
      %v3712 = vadd.f32 %v3676, %v3691
      %v3713 = vadd.f32 %v3677, %v3691
      %v3714 = vadd.f32 %v3678, %v3691
      %v3715 = vadd.f32 %v3679, %v3691
      %v3716 = vadd.f32 %v3680, %v3691
      %v3717 = vadd.f32 %v3681, %v3691
      %v3718 = vadd.f32 %v3682, %v3691
      %v3719 = vadd.f32 %v3683, %v3691
      %v3720 = vadd.f32 %v3684, %v3691
      %v3721 = vadd.f32 %v3685, %v3691
      %v3722 = vadd.f32 %v3686, %v3691
      %v3723 = vadd.f32 %v3687, %v3691
      %v3724 = vadd.f32 %v3688, %v3691
      %v3725 = vmax.f32 %v3693, 0.0
      %v3726 = vmax.f32 %v3694, 0.0
      %v3727 = vmax.f32 %v3695, 0.0
      %v3728 = vmax.f32 %v3696, 0.0
      %v3729 = vmax.f32 %v3697, 0.0
      %v3730 = vmax.f32 %v3698, 0.0
      %v3731 = vmax.f32 %v3699, 0.0
      %v3732 = vmax.f32 %v3700, 0.0
      %v3733 = vmax.f32 %v3701, 0.0
      %v3734 = vmax.f32 %v3702, 0.0
      %v3735 = vmax.f32 %v3703, 0.0
      %v3736 = vmax.f32 %v3704, 0.0
      %v3737 = vmax.f32 %v3705, 0.0
      %v3738 = vmax.f32 %v3706, 0.0
      %v3739 = vmax.f32 %v3707, 0.0
      %v3740 = vmax.f32 %v3708, 0.0
      %v3741 = vmax.f32 %v3709, 0.0
      %v3742 = vmax.f32 %v3710, 0.0
      %v3743 = vmax.f32 %v3711, 0.0
      %v3744 = vmax.f32 %v3712, 0.0
      %v3745 = vmax.f32 %v3713, 0.0
      %v3746 = vmax.f32 %v3714, 0.0
      %v3747 = vmax.f32 %v3715, 0.0
      %v3748 = vmax.f32 %v3716, 0.0
      %v3749 = vmax.f32 %v3717, 0.0
      %v3750 = vmax.f32 %v3718, 0.0
      %v3751 = vmax.f32 %v3719, 0.0
      %v3752 = vmax.f32 %v3720, 0.0
      %v3753 = vmax.f32 %v3721, 0.0
      %v3754 = vmax.f32 %v3722, 0.0
      %v3755 = vmax.f32 %v3723, 0.0
      %v3756 = vmax.f32 %v3724, 0.0
      %v3757 = vmul.f32 %v3725, 0.5
      %v3758 = vmul.f32 %v3726, 0.5
      %v3759 = vmul.f32 %v3727, 0.5
      %v3760 = vmul.f32 %v3728, 0.5
      %v3761 = vmul.f32 %v3729, 0.5
      %v3762 = vmul.f32 %v3730, 0.5
      %v3763 = vmul.f32 %v3731, 0.5
      %v3764 = vmul.f32 %v3732, 0.5
      %v3765 = vmul.f32 %v3733, 0.5
      %v3766 = vmul.f32 %v3734, 0.5
      %v3767 = vmul.f32 %v3735, 0.5
      %v3768 = vmul.f32 %v3736, 0.5
      %v3769 = vmul.f32 %v3737, 0.5
      %v3770 = vmul.f32 %v3738, 0.5
      %v3771 = vmul.f32 %v3739, 0.5
      %v3772 = vmul.f32 %v3740, 0.5
      %v3773 = vmul.f32 %v3741, 0.5
      %v3774 = vmul.f32 %v3742, 0.5
      %v3775 = vmul.f32 %v3743, 0.5
      %v3776 = vmul.f32 %v3744, 0.5
      %v3777 = vmul.f32 %v3745, 0.5
      %v3778 = vmul.f32 %v3746, 0.5
      %v3779 = vmul.f32 %v3747, 0.5
      %v3780 = vmul.f32 %v3748, 0.5
      %v3781 = vmul.f32 %v3749, 0.5
      %v3782 = vmul.f32 %v3750, 0.5
      %v3783 = vmul.f32 %v3751, 0.5
      %v3784 = vmul.f32 %v3752, 0.5
      %v3785 = vmul.f32 %v3753, 0.5
      %v3786 = vmul.f32 %v3754, 0.5
      %v3787 = vmul.f32 %v3755, 0.5
      %v3788 = vmul.f32 %v3756, 0.5
      %v3789 = vadd.f32 %v3757, %v255
      %v3790 = vadd.f32 %v3758, %v256
      %v3791 = vadd.f32 %v3759, %v257
      %v3792 = vadd.f32 %v3760, %v258
      %v3793 = vadd.f32 %v3761, %v259
      %v3794 = vadd.f32 %v3762, %v260
      %v3795 = vadd.f32 %v3763, %v261
      %v3796 = vadd.f32 %v3764, %v262
      %v3797 = vadd.f32 %v3765, %v263
      %v3798 = vadd.f32 %v3766, %v264
      %v3799 = vadd.f32 %v3767, %v265
      %v3800 = vadd.f32 %v3768, %v266
      %v3801 = vadd.f32 %v3769, %v267
      %v3802 = vadd.f32 %v3770, %v268
      %v3803 = vadd.f32 %v3771, %v269
      %v3804 = vadd.f32 %v3772, %v270
      %v3805 = vadd.f32 %v3773, %v271
      %v3806 = vadd.f32 %v3774, %v272
      %v3807 = vadd.f32 %v3775, %v273
      %v3808 = vadd.f32 %v3776, %v274
      %v3809 = vadd.f32 %v3777, %v275
      %v3810 = vadd.f32 %v3778, %v276
      %v3811 = vadd.f32 %v3779, %v277
      %v3812 = vadd.f32 %v3780, %v278
      %v3813 = vadd.f32 %v3781, %v279
      %v3814 = vadd.f32 %v3782, %v280
      %v3815 = vadd.f32 %v3783, %v281
      %v3816 = vadd.f32 %v3784, %v282
      %v3817 = vadd.f32 %v3785, %v283
      %v3818 = vadd.f32 %v3786, %v284
      %v3819 = vadd.f32 %v3787, %v285
      %v3820 = vadd.f32 %v3788, %v286
      %3821 = vst.msk [vmem:[%s253] sm:$0xff] %vm899, %v3789
      %3822 = vst.msk [vmem:[%s253 + $0x8] sm:$0xff] %vm899, %v3790
      %3823 = vst.msk [vmem:[%s253 + $0x10] sm:$0xff] %vm899, %v3791
      %3824 = vst.msk [vmem:[%s253 + $0x18] sm:$0xff] %vm899, %v3792
      %3825 = vst.msk [vmem:[%s253 + $0x20] sm:$0xff] %vm899, %v3793
      %3826 = vst.msk [vmem:[%s253 + $0x28] sm:$0xff] %vm899, %v3794
      %3827 = vst.msk [vmem:[%s253 + $0x30] sm:$0xff] %vm899, %v3795
      %3828 = vst.msk [vmem:[%s253 + $0x38] sm:$0xff] %vm899, %v3796
      %3829 = vst.msk [vmem:[%s253 + $0x40] sm:$0xff] %vm899, %v3797
      %3830 = vst.msk [vmem:[%s253 + $0x48] sm:$0xff] %vm899, %v3798
      %3831 = vst.msk [vmem:[%s253 + $0x50] sm:$0xff] %vm899, %v3799
      %3832 = vst.msk [vmem:[%s253 + $0x58] sm:$0xff] %vm899, %v3800
      %3833 = vst.msk [vmem:[%s253 + $0x60] sm:$0xff] %vm899, %v3801
      %3834 = vst.msk [vmem:[%s253 + $0x68] sm:$0xff] %vm899, %v3802
      %3835 = vst.msk [vmem:[%s253 + $0x70] sm:$0xff] %vm899, %v3803
      %3836 = vst.msk [vmem:[%s253 + $0x78] sm:$0xff] %vm899, %v3804
      %3837 = vst.msk [vmem:[%s253 + $0x80] sm:$0xff] %vm899, %v3805
      %3838 = vst.msk [vmem:[%s253 + $0x88] sm:$0xff] %vm899, %v3806
      %3839 = vst.msk [vmem:[%s253 + $0x90] sm:$0xff] %vm899, %v3807
      %3840 = vst.msk [vmem:[%s253 + $0x98] sm:$0xff] %vm899, %v3808
      %3841 = vst.msk [vmem:[%s253 + $0xa0] sm:$0xff] %vm899, %v3809
      %3842 = vst.msk [vmem:[%s253 + $0xa8] sm:$0xff] %vm899, %v3810
      %3843 = vst.msk [vmem:[%s253 + $0xb0] sm:$0xff] %vm899, %v3811
      %3844 = vst.msk [vmem:[%s253 + $0xb8] sm:$0xff] %vm899, %v3812
      %3845 = vst.msk [vmem:[%s253 + $0xc0] sm:$0xff] %vm899, %v3813
      %3846 = vst.msk [vmem:[%s253 + $0xc8] sm:$0xff] %vm899, %v3814
      %3847 = vst.msk [vmem:[%s253 + $0xd0] sm:$0xff] %vm899, %v3815
      %3848 = vst.msk [vmem:[%s253 + $0xd8] sm:$0xff] %vm899, %v3816
      %3849 = vst.msk [vmem:[%s253 + $0xe0] sm:$0xff] %vm899, %v3817
      %3850 = vst.msk [vmem:[%s253 + $0xe8] sm:$0xff] %vm899, %v3818
      %3851 = vst.msk [vmem:[%s253 + $0xf0] sm:$0xff] %vm899, %v3819
      %3852 = vst.msk [vmem:[%s253 + $0xf8] sm:$0xff] %vm899, %v3820
      %s3853 = smul.u32 32, %s17
      %p3854 = scmp.lt.s32.totalorder %s3853, 63
      %s3855 = scalar_select %p3854, %s3853, 63
      %s3856 = smul.addr %s3855, 8
      %s3857 = scalar_lea.vmem %s6, %s3856
      // Predicated region
      $region45: #{tpu_custom_call.1} parent=43 // pred_check
        %p3858 = pneg %p166
      $region46: #{tpu_custom_call.1} parent=43 // pred_check_branch
        %3860 = sbr.rel (%p3858) target = $region48
      $region47: #{tpu_custom_call.1} parent=43 // pred_region
        %s3861 = smul.u32 32, %s17
      $region48: #{tpu_custom_call.1} parent=43 // pred_fallthru
        _
    $region44: #{tpu_custom_call.1} parent=5 // pred_fallthru
      _
    %p3862 = scmp.le.s32.totalorder 2, %s12
    // Predicated region
    $region49: #{tpu_custom_call.1} parent=5 // pred_check
      %p3863 = pneg %p3862
    $region50: #{tpu_custom_call.1} parent=5 // pred_check_branch
      %3865 = sbr.rel (%p3863) target = $region52
    $region51: #{tpu_custom_call.1} parent=5 // pred_region
      %s3866 = ssub.s32 %s12, 2
      // Predicated region
      $region53: #{tpu_custom_call.1} parent=51 // pred_check
        %p3867 = pneg %p172
      $region54: #{tpu_custom_call.1} parent=51 // pred_check_branch
        %3869 = sbr.rel (%p3867) target = $region56
      $region55: #{tpu_custom_call.1} parent=51 // pred_region
        %s3870 = smul.u32 32, %s18
        %p3871 = scmp.lt.s32.totalorder %s3870, 63
        %s3872 = scalar_select %p3871, %s3870, 63
        %s3873 = smul.addr %s3872, 8
        %s3874 = scalar_lea.vmem %s6, %s3873
      $region56: #{tpu_custom_call.1} parent=51 // pred_fallthru
        _
    $region52: #{tpu_custom_call.1} parent=5 // pred_fallthru
      _
  $region6: #{tpu_custom_call.1} parent=0 // loop_footer
    %s16 = sadd.s32 1, %s12
  $region7: #{tpu_custom_call.1} parent=0 // loop_footer_branch
    %11 = sbr.rel target = $region3
  $region8: #{tpu_custom_call.1} parent=0 // loop_exit
    _

</llo_original>
